<compile_context>
chip_gen: v5e
topology: v5e:2x2
jax: 0.10.0
libtpu: 0.0.40
codegen_flags: <defaults>
</compile_context>

<pallas_src>
import functools

import jax
import jax.numpy as jnp
import numpy as np
from jax.experimental import pallas as pl
from jax.experimental.pallas import tpu as pltpu

F_PAD = 128        # lane-dense feature width (all feature dims zero-padded to 128)
NEIGH_CHUNK = 8    # src-node chunk (1 sublane group) for the blocked max aggregation


# ----------------------------- Pallas kernel -------------------------------

def _sage_layer(x, adj, wp, bp, ws, wn, b, *, apply_relu):
    """One SAGEConv('pool') layer on lane-padded [N, F_PAD] activations.

    NOTE: the aggregation uses max_j(adj[i, j] * pooled[j]); this is only valid
    because pooled is post-ReLU (>= 0) and adj is a binary {0,1} mask.  Nodes
    with zero in-degree end up with h_neigh = 0, matching DGL's fill value.
    """
    n = adj.shape[0]

    # fc_pool + ReLU: bf16 MXU operands, f32 accumulation, f32 elementwise.
    pooled = jnp.dot(x.astype(jnp.bfloat16), wp,
                     preferred_element_type=jnp.float32) + bp
    pooled = jnp.maximum(pooled, 0.0)                         # [N, F_PAD], >= 0

    # Blocked masked-max over the neighbor (src) axis: only a
    # [N, NEIGH_CHUNK, F_PAD] temp is ever live (keeps the vreg file happy),
    # never the full [N, N, F_PAD] product.
    h_neigh = jnp.zeros_like(pooled)
    for jb in range(0, n, NEIGH_CHUNK):
        a = adj[:, jb:jb + NEIGH_CHUNK]                       # [N, C]
        p = pooled[jb:jb + NEIGH_CHUNK, :]                    # [C, F_PAD]
        h_neigh = jnp.maximum(
            h_neigh, jnp.max(a[:, :, None] * p[None, :, :], axis=1))

    out = (jnp.dot(x.astype(jnp.bfloat16), ws,
                   preferred_element_type=jnp.float32)
           + jnp.dot(h_neigh.astype(jnp.bfloat16), wn,
                     preferred_element_type=jnp.float32)
           + b)
    if apply_relu:
        out = jnp.maximum(out, 0.0)
    return out


def _sage_fused_kernel(x_ref, adj_ref,
                       wp1_ref, bp1_ref, ws1_ref, wn1_ref, b1_ref,
                       wp2_ref, bp2_ref, ws2_ref, wn2_ref, b2_ref,
                       wp3_ref, bp3_ref, ws3_ref, wn3_ref, b3_ref,
                       o_ref, *, out_feats):
    x = x_ref[...]                                            # [N, F_PAD]
    adj = adj_ref[...]                                        # [N, N], adj[dst, src]

    h1 = _sage_layer(x, adj, wp1_ref[...], bp1_ref[...], ws1_ref[...],
                     wn1_ref[...], b1_ref[...], apply_relu=True)
    h2 = _sage_layer(h1, adj, wp2_ref[...], bp2_ref[...], ws2_ref[...],
                     wn2_ref[...], b2_ref[...], apply_relu=True)
    h3 = _sage_layer(h2, adj, wp3_ref[...], bp3_ref[...], ws3_ref[...],
                     wn3_ref[...], b3_ref[...], apply_relu=False)

    # log_softmax over the valid classes only (padded lanes are exact zeros and
    # must not contribute).  exp/log run on the EUP slot.
    logits = h3[:, :out_feats]                                # [N, out_feats]
    m = jnp.max(logits, axis=1, keepdims=True)
    s = logits - m
    lse = jnp.log(jnp.sum(jnp.exp(s), axis=1, keepdims=True))
    o_ref[...] = s - lse


# ----------------------------- wrapper --------------------------------------

_VMEM = pl.BlockSpec(memory_space=pltpu.MemorySpace.VMEM)


def _pad2(a, rows, cols, dtype=None):
    r, c = a.shape
    a = jnp.pad(a, ((0, rows - r), (0, cols - c)))
    return a.astype(dtype) if dtype is not None else a


def _pad_params(p):
    """Zero-pad parameters to lane-dense widths; weight matrices become bf16 MXU operands."""
    return (
        _pad2(p["w_pool"], F_PAD, F_PAD, jnp.bfloat16),
        _pad2(p["b_pool"], 1, F_PAD),
        _pad2(p["w_self"], F_PAD, F_PAD, jnp.bfloat16),
        _pad2(p["w_neigh"], F_PAD, F_PAD, jnp.bfloat16),
        _pad2(p["bias"], 1, F_PAD),
    )


def sage_forward(adj, x, p1, p2, p3):
    """Fused 3x SAGEConv('pool') + ReLU + log_softmax in a single pallas_call."""
    n = x.shape[0]
    out_feats = p3["w_self"].shape[1]

    x_pad = _pad2(x, n, F_PAD)   # activations stay f32; cast to bf16 per-matmul in-kernel
    args = (x_pad, adj) + _pad_params(p1) + _pad_params(p2) + _pad_params(p3)

    kernel = functools.partial(_sage_fused_kernel, out_feats=out_feats)
    return pl.pallas_call(
        kernel,
        out_shape=jax.ShapeDtypeStruct((n, out_feats), jnp.float32),
        in_specs=[_VMEM] * len(args),
        out_specs=_VMEM,
    )(*args)
    # NOTE: at N=32 everything (adj 4 KiB, weights <300 KiB padded) fits VMEM on
    # every TPU generation, so no grid is needed.  When scaling N, tile the dst
    # rows with a grid ("parallel") and size the adj tile for v7x's 64 MiB VMEM.


# ----------------------------- pure-JAX reference ---------------------------

def _ref_dot(a, b):
    return jnp.dot(a.astype(jnp.bfloat16), b.astype(jnp.bfloat16),
                   preferred_element_type=jnp.float32)


def _ref_layer(x, adj, p, relu):
    pooled = jnp.maximum(_ref_dot(x, p["w_pool"]) + p["b_pool"], 0.0)
    deg = adj.sum(axis=1, keepdims=True)
    masked = jnp.where(adj[:, :, None] > 0, pooled[None, :, :], -jnp.inf)
    h_neigh = jnp.where(deg > 0, jnp.max(masked, axis=1), 0.0)
    out = _ref_dot(x, p["w_self"]) + _ref_dot(h_neigh, p["w_neigh"]) + p["bias"]
    return jnp.maximum(out, 0.0) if relu else out


def sage_forward_ref(adj, x, p1, p2, p3):
    h = _ref_layer(x, adj, p1, True)
    h = _ref_layer(h, adj, p2, True)
    h = _ref_layer(h, adj, p3, False)
    return jax.nn.log_softmax(h, axis=1)


# ----------------------------- param init -----------------------------------

def _linear_init(key, fan_in, fan_out, with_bias=True):
    kw, kb = jax.random.split(key)
    bound = 1.0 / np.sqrt(fan_in)
    w = jax.random.uniform(kw, (fan_in, fan_out), jnp.float32, -bound, bound)
    b = (jax.random.uniform(kb, (1, fan_out), jnp.float32, -bound, bound)
         if with_bias else None)
    return w, b


def sage_conv_params(key, f_in, f_out):
    k1, k2, k3 = jax.random.split(key, 3)
    w_pool, b_pool = _linear_init(k1, f_in, f_in, with_bias=True)   # fc_pool
    w_self, _ = _linear_init(k2, f_in, f_out, with_bias=False)      # fc_self
    w_neigh, _ = _linear_init(k3, f_in, f_out, with_bias=False)     # fc_neigh
    bias = jnp.zeros((1, f_out), jnp.float32)                       # SAGEConv bias
    return dict(w_pool=w_pool, b_pool=b_pool, w_self=w_self,
                w_neigh=w_neigh, bias=bias)


# ----------------------------- graph construction ---------------------------

def build_dense_graph(n):
    """Small deterministic undirected graph (ring + hub), dense adjacency mask."""
    # TODO(synk): original DGL karate-club edge lists are empty in the source;
    # graph construction kept in plain numpy as a dense binary adjacency.
    adj = np.zeros((n, n), dtype=np.float32)
    for i in range(n):
        j = (i + 1) % n
        adj[i, j] = 1.0
        adj[j, i] = 1.0
    for j in (5, 10, 15, 20, 25):
        adj[0, j] = 1.0
        adj[j, 0] = 1.0
    return jnp.asarray(adj)


# ----------------------------- main ------------------------------------------

if __name__ == "__main__":
    N = 32          # nodes
    IN_FEATS = 8
    HID_FEATS = 32
    OUT_FEATS = 4   # number of output classes

    key = jax.random.PRNGKey(0)
    kx, k1, k2, k3 = jax.random.split(key, 4)

    x = jax.random.normal(kx, (N, IN_FEATS), jnp.float32)
    adj = build_dense_graph(N)

    p1 = sage_conv_params(k1, IN_FEATS, HID_FEATS)
    p2 = sage_conv_params(k2, HID_FEATS, HID_FEATS)
    p3 = sage_conv_params(k3, HID_FEATS, OUT_FEATS)

    out = jax.jit(sage_forward)(adj, x, p1, p2, p3)
    jax.block_until_ready(out)

    assert out.shape == (N, OUT_FEATS)
    # rows of log_softmax must exp-sum to 1
    assert np.allclose(np.exp(np.asarray(out)).sum(axis=1), 1.0, atol=1e-4)
    # compare against a pure-JAX reference (same bf16-matmul precision)
    ref = jax.jit(sage_forward_ref)(adj, x, p1, p2, p3)
    assert np.allclose(np.asarray(out), np.asarray(ref), atol=5e-2), \
        np.abs(np.asarray(out) - np.asarray(ref)).max()

    print("KERNEL_OK")
</pallas_src>

<mosaic_0001>
module attributes {stable_mosaic.version = 11 : i64} {
  func.func @_sage_fused_kernel(%arg0: memref<32x128xf32, #tpu.memory_space<vmem>>, %arg1: memref<32x32xf32, #tpu.memory_space<vmem>>, %arg2: memref<128x128xbf16, #tpu.memory_space<vmem>>, %arg3: memref<1x128xf32, #tpu.memory_space<vmem>>, %arg4: memref<128x128xbf16, #tpu.memory_space<vmem>>, %arg5: memref<128x128xbf16, #tpu.memory_space<vmem>>, %arg6: memref<1x128xf32, #tpu.memory_space<vmem>>, %arg7: memref<128x128xbf16, #tpu.memory_space<vmem>>, %arg8: memref<1x128xf32, #tpu.memory_space<vmem>>, %arg9: memref<128x128xbf16, #tpu.memory_space<vmem>>, %arg10: memref<128x128xbf16, #tpu.memory_space<vmem>>, %arg11: memref<1x128xf32, #tpu.memory_space<vmem>>, %arg12: memref<128x128xbf16, #tpu.memory_space<vmem>>, %arg13: memref<1x128xf32, #tpu.memory_space<vmem>>, %arg14: memref<128x128xbf16, #tpu.memory_space<vmem>>, %arg15: memref<128x128xbf16, #tpu.memory_space<vmem>>, %arg16: memref<1x128xf32, #tpu.memory_space<vmem>>, %arg17: memref<32x4xf32, #tpu.memory_space<vmem>>) attributes {dimension_semantics = [], scalar_prefetch = 0 : i64, scratch_operands = 0 : i64, tpu.core_type = #tpu.core_type<tc>} {
    %c0 = arith.constant 0 : index
    %c0_0 = arith.constant 0 : index
    %0 = vector.load %arg0[%c0, %c0_0] : memref<32x128xf32, #tpu.memory_space<vmem>>, vector<32x128xf32>
    %c0_1 = arith.constant 0 : index
    %c0_2 = arith.constant 0 : index
    %1 = vector.load %arg1[%c0_1, %c0_2] : memref<32x32xf32, #tpu.memory_space<vmem>>, vector<32x32xf32>
    %c0_3 = arith.constant 0 : index
    %c0_4 = arith.constant 0 : index
    %2 = vector.load %arg2[%c0_3, %c0_4] : memref<128x128xbf16, #tpu.memory_space<vmem>>, vector<128x128xbf16>
    %c0_5 = arith.constant 0 : index
    %c0_6 = arith.constant 0 : index
    %3 = vector.load %arg3[%c0_5, %c0_6] : memref<1x128xf32, #tpu.memory_space<vmem>>, vector<1x128xf32>
    %c0_7 = arith.constant 0 : index
    %c0_8 = arith.constant 0 : index
    %4 = vector.load %arg4[%c0_7, %c0_8] : memref<128x128xbf16, #tpu.memory_space<vmem>>, vector<128x128xbf16>
    %c0_9 = arith.constant 0 : index
    %c0_10 = arith.constant 0 : index
    %5 = vector.load %arg5[%c0_9, %c0_10] : memref<128x128xbf16, #tpu.memory_space<vmem>>, vector<128x128xbf16>
    %c0_11 = arith.constant 0 : index
    %c0_12 = arith.constant 0 : index
    %6 = vector.load %arg6[%c0_11, %c0_12] : memref<1x128xf32, #tpu.memory_space<vmem>>, vector<1x128xf32>
    %7 = arith.truncf %0 : vector<32x128xf32> to vector<32x128xbf16>
    %cst = arith.constant dense<0.000000e+00> : vector<32x128xf32>
    %8 = tpu.matmul %7, %2, %cst {dimension_numbers = #tpu.dot_dimension_numbers<[1], [0], [0], [1], [0, 0, 1, 1], [], []>} : vector<32x128xbf16>, vector<128x128xbf16>, vector<32x128xf32> -> vector<32x128xf32>
    %9 = vector.broadcast %3 : vector<1x128xf32> to vector<32x128xf32>
    %10 = arith.addf %8, %9 : vector<32x128xf32>
    %cst_13 = arith.constant 0.000000e+00 : f32
    %11 = vector.broadcast %cst_13 : f32 to vector<32x128xf32>
    %12 = arith.maximumf %10, %11 : vector<32x128xf32>
    %cst_14 = arith.constant 0.000000e+00 : f32
    %13 = vector.broadcast %cst_14 : f32 to vector<32x128xf32>
    %14 = vector.extract_strided_slice %1 {offsets = [0, 0], sizes = [32, 8], strides = [1, 1]} : vector<32x32xf32> to vector<32x8xf32>
    %15 = vector.extract_strided_slice %12 {offsets = [0, 0], sizes = [8, 128], strides = [1, 1]} : vector<32x128xf32> to vector<8x128xf32>
    %16 = vector.shape_cast %14 : vector<32x8xf32> to vector<32x8x1xf32>
    %17 = vector.shape_cast %15 : vector<8x128xf32> to vector<1x8x128xf32>
    %18 = vector.broadcast %16 : vector<32x8x1xf32> to vector<32x8x128xf32>
    %19 = vector.broadcast %17 : vector<1x8x128xf32> to vector<32x8x128xf32>
    %20 = arith.mulf %18, %19 : vector<32x8x128xf32>
    %cst_15 = arith.constant dense<0xFF800000> : vector<32x128xf32>
    %21 = vector.multi_reduction <maximumf>, %20, %cst_15 [1] : vector<32x8x128xf32> to vector<32x128xf32>
    %22 = arith.maximumf %13, %21 : vector<32x128xf32>
    %23 = vector.extract_strided_slice %1 {offsets = [0, 8], sizes = [32, 8], strides = [1, 1]} : vector<32x32xf32> to vector<32x8xf32>
    %24 = vector.extract_strided_slice %12 {offsets = [8, 0], sizes = [8, 128], strides = [1, 1]} : vector<32x128xf32> to vector<8x128xf32>
    %25 = vector.shape_cast %23 : vector<32x8xf32> to vector<32x8x1xf32>
    %26 = vector.shape_cast %24 : vector<8x128xf32> to vector<1x8x128xf32>
    %27 = vector.broadcast %25 : vector<32x8x1xf32> to vector<32x8x128xf32>
    %28 = vector.broadcast %26 : vector<1x8x128xf32> to vector<32x8x128xf32>
    %29 = arith.mulf %27, %28 : vector<32x8x128xf32>
    %cst_16 = arith.constant dense<0xFF800000> : vector<32x128xf32>
    %30 = vector.multi_reduction <maximumf>, %29, %cst_16 [1] : vector<32x8x128xf32> to vector<32x128xf32>
    %31 = arith.maximumf %22, %30 : vector<32x128xf32>
    %32 = vector.extract_strided_slice %1 {offsets = [0, 16], sizes = [32, 8], strides = [1, 1]} : vector<32x32xf32> to vector<32x8xf32>
    %33 = vector.extract_strided_slice %12 {offsets = [16, 0], sizes = [8, 128], strides = [1, 1]} : vector<32x128xf32> to vector<8x128xf32>
    %34 = vector.shape_cast %32 : vector<32x8xf32> to vector<32x8x1xf32>
    %35 = vector.shape_cast %33 : vector<8x128xf32> to vector<1x8x128xf32>
    %36 = vector.broadcast %34 : vector<32x8x1xf32> to vector<32x8x128xf32>
    %37 = vector.broadcast %35 : vector<1x8x128xf32> to vector<32x8x128xf32>
    %38 = arith.mulf %36, %37 : vector<32x8x128xf32>
    %cst_17 = arith.constant dense<0xFF800000> : vector<32x128xf32>
    %39 = vector.multi_reduction <maximumf>, %38, %cst_17 [1] : vector<32x8x128xf32> to vector<32x128xf32>
    %40 = arith.maximumf %31, %39 : vector<32x128xf32>
    %41 = vector.extract_strided_slice %1 {offsets = [0, 24], sizes = [32, 8], strides = [1, 1]} : vector<32x32xf32> to vector<32x8xf32>
    %42 = vector.extract_strided_slice %12 {offsets = [24, 0], sizes = [8, 128], strides = [1, 1]} : vector<32x128xf32> to vector<8x128xf32>
    %43 = vector.shape_cast %41 : vector<32x8xf32> to vector<32x8x1xf32>
    %44 = vector.shape_cast %42 : vector<8x128xf32> to vector<1x8x128xf32>
    %45 = vector.broadcast %43 : vector<32x8x1xf32> to vector<32x8x128xf32>
    %46 = vector.broadcast %44 : vector<1x8x128xf32> to vector<32x8x128xf32>
    %47 = arith.mulf %45, %46 : vector<32x8x128xf32>
    %cst_18 = arith.constant dense<0xFF800000> : vector<32x128xf32>
    %48 = vector.multi_reduction <maximumf>, %47, %cst_18 [1] : vector<32x8x128xf32> to vector<32x128xf32>
    %49 = arith.maximumf %40, %48 : vector<32x128xf32>
    %50 = arith.truncf %0 : vector<32x128xf32> to vector<32x128xbf16>
    %cst_19 = arith.constant dense<0.000000e+00> : vector<32x128xf32>
    %51 = tpu.matmul %50, %4, %cst_19 {dimension_numbers = #tpu.dot_dimension_numbers<[1], [0], [0], [1], [0, 0, 1, 1], [], []>} : vector<32x128xbf16>, vector<128x128xbf16>, vector<32x128xf32> -> vector<32x128xf32>
    %52 = arith.truncf %49 : vector<32x128xf32> to vector<32x128xbf16>
    %cst_20 = arith.constant dense<0.000000e+00> : vector<32x128xf32>
    %53 = tpu.matmul %52, %5, %cst_20 {dimension_numbers = #tpu.dot_dimension_numbers<[1], [0], [0], [1], [0, 0, 1, 1], [], []>} : vector<32x128xbf16>, vector<128x128xbf16>, vector<32x128xf32> -> vector<32x128xf32>
    %54 = arith.addf %51, %53 : vector<32x128xf32>
    %55 = vector.broadcast %6 : vector<1x128xf32> to vector<32x128xf32>
    %56 = arith.addf %54, %55 : vector<32x128xf32>
    %cst_21 = arith.constant 0.000000e+00 : f32
    %57 = vector.broadcast %cst_21 : f32 to vector<32x128xf32>
    %58 = arith.maximumf %56, %57 : vector<32x128xf32>
    %c0_22 = arith.constant 0 : index
    %c0_23 = arith.constant 0 : index
    %59 = vector.load %arg7[%c0_22, %c0_23] : memref<128x128xbf16, #tpu.memory_space<vmem>>, vector<128x128xbf16>
    %c0_24 = arith.constant 0 : index
    %c0_25 = arith.constant 0 : index
    %60 = vector.load %arg8[%c0_24, %c0_25] : memref<1x128xf32, #tpu.memory_space<vmem>>, vector<1x128xf32>
    %c0_26 = arith.constant 0 : index
    %c0_27 = arith.constant 0 : index
    %61 = vector.load %arg9[%c0_26, %c0_27] : memref<128x128xbf16, #tpu.memory_space<vmem>>, vector<128x128xbf16>
    %c0_28 = arith.constant 0 : index
    %c0_29 = arith.constant 0 : index
    %62 = vector.load %arg10[%c0_28, %c0_29] : memref<128x128xbf16, #tpu.memory_space<vmem>>, vector<128x128xbf16>
    %c0_30 = arith.constant 0 : index
    %c0_31 = arith.constant 0 : index
    %63 = vector.load %arg11[%c0_30, %c0_31] : memref<1x128xf32, #tpu.memory_space<vmem>>, vector<1x128xf32>
    %64 = arith.truncf %58 : vector<32x128xf32> to vector<32x128xbf16>
    %cst_32 = arith.constant dense<0.000000e+00> : vector<32x128xf32>
    %65 = tpu.matmul %64, %59, %cst_32 {dimension_numbers = #tpu.dot_dimension_numbers<[1], [0], [0], [1], [0, 0, 1, 1], [], []>} : vector<32x128xbf16>, vector<128x128xbf16>, vector<32x128xf32> -> vector<32x128xf32>
    %66 = vector.broadcast %60 : vector<1x128xf32> to vector<32x128xf32>
    %67 = arith.addf %65, %66 : vector<32x128xf32>
    %cst_33 = arith.constant 0.000000e+00 : f32
    %68 = vector.broadcast %cst_33 : f32 to vector<32x128xf32>
    %69 = arith.maximumf %67, %68 : vector<32x128xf32>
    %cst_34 = arith.constant 0.000000e+00 : f32
    %70 = vector.broadcast %cst_34 : f32 to vector<32x128xf32>
    %71 = vector.extract_strided_slice %1 {offsets = [0, 0], sizes = [32, 8], strides = [1, 1]} : vector<32x32xf32> to vector<32x8xf32>
    %72 = vector.extract_strided_slice %69 {offsets = [0, 0], sizes = [8, 128], strides = [1, 1]} : vector<32x128xf32> to vector<8x128xf32>
    %73 = vector.shape_cast %71 : vector<32x8xf32> to vector<32x8x1xf32>
    %74 = vector.shape_cast %72 : vector<8x128xf32> to vector<1x8x128xf32>
    %75 = vector.broadcast %73 : vector<32x8x1xf32> to vector<32x8x128xf32>
    %76 = vector.broadcast %74 : vector<1x8x128xf32> to vector<32x8x128xf32>
    %77 = arith.mulf %75, %76 : vector<32x8x128xf32>
    %cst_35 = arith.constant dense<0xFF800000> : vector<32x128xf32>
    %78 = vector.multi_reduction <maximumf>, %77, %cst_35 [1] : vector<32x8x128xf32> to vector<32x128xf32>
    %79 = arith.maximumf %70, %78 : vector<32x128xf32>
    %80 = vector.extract_strided_slice %1 {offsets = [0, 8], sizes = [32, 8], strides = [1, 1]} : vector<32x32xf32> to vector<32x8xf32>
    %81 = vector.extract_strided_slice %69 {offsets = [8, 0], sizes = [8, 128], strides = [1, 1]} : vector<32x128xf32> to vector<8x128xf32>
    %82 = vector.shape_cast %80 : vector<32x8xf32> to vector<32x8x1xf32>
    %83 = vector.shape_cast %81 : vector<8x128xf32> to vector<1x8x128xf32>
    %84 = vector.broadcast %82 : vector<32x8x1xf32> to vector<32x8x128xf32>
    %85 = vector.broadcast %83 : vector<1x8x128xf32> to vector<32x8x128xf32>
    %86 = arith.mulf %84, %85 : vector<32x8x128xf32>
    %cst_36 = arith.constant dense<0xFF800000> : vector<32x128xf32>
    %87 = vector.multi_reduction <maximumf>, %86, %cst_36 [1] : vector<32x8x128xf32> to vector<32x128xf32>
    %88 = arith.maximumf %79, %87 : vector<32x128xf32>
    %89 = vector.extract_strided_slice %1 {offsets = [0, 16], sizes = [32, 8], strides = [1, 1]} : vector<32x32xf32> to vector<32x8xf32>
    %90 = vector.extract_strided_slice %69 {offsets = [16, 0], sizes = [8, 128], strides = [1, 1]} : vector<32x128xf32> to vector<8x128xf32>
    %91 = vector.shape_cast %89 : vector<32x8xf32> to vector<32x8x1xf32>
    %92 = vector.shape_cast %90 : vector<8x128xf32> to vector<1x8x128xf32>
    %93 = vector.broadcast %91 : vector<32x8x1xf32> to vector<32x8x128xf32>
    %94 = vector.broadcast %92 : vector<1x8x128xf32> to vector<32x8x128xf32>
    %95 = arith.mulf %93, %94 : vector<32x8x128xf32>
    %cst_37 = arith.constant dense<0xFF800000> : vector<32x128xf32>
    %96 = vector.multi_reduction <maximumf>, %95, %cst_37 [1] : vector<32x8x128xf32> to vector<32x128xf32>
    %97 = arith.maximumf %88, %96 : vector<32x128xf32>
    %98 = vector.extract_strided_slice %1 {offsets = [0, 24], sizes = [32, 8], strides = [1, 1]} : vector<32x32xf32> to vector<32x8xf32>
    %99 = vector.extract_strided_slice %69 {offsets = [24, 0], sizes = [8, 128], strides = [1, 1]} : vector<32x128xf32> to vector<8x128xf32>
    %100 = vector.shape_cast %98 : vector<32x8xf32> to vector<32x8x1xf32>
    %101 = vector.shape_cast %99 : vector<8x128xf32> to vector<1x8x128xf32>
    %102 = vector.broadcast %100 : vector<32x8x1xf32> to vector<32x8x128xf32>
    %103 = vector.broadcast %101 : vector<1x8x128xf32> to vector<32x8x128xf32>
    %104 = arith.mulf %102, %103 : vector<32x8x128xf32>
    %cst_38 = arith.constant dense<0xFF800000> : vector<32x128xf32>
    %105 = vector.multi_reduction <maximumf>, %104, %cst_38 [1] : vector<32x8x128xf32> to vector<32x128xf32>
    %106 = arith.maximumf %97, %105 : vector<32x128xf32>
    %107 = arith.truncf %58 : vector<32x128xf32> to vector<32x128xbf16>
    %cst_39 = arith.constant dense<0.000000e+00> : vector<32x128xf32>
    %108 = tpu.matmul %107, %61, %cst_39 {dimension_numbers = #tpu.dot_dimension_numbers<[1], [0], [0], [1], [0, 0, 1, 1], [], []>} : vector<32x128xbf16>, vector<128x128xbf16>, vector<32x128xf32> -> vector<32x128xf32>
    %109 = arith.truncf %106 : vector<32x128xf32> to vector<32x128xbf16>
    %cst_40 = arith.constant dense<0.000000e+00> : vector<32x128xf32>
    %110 = tpu.matmul %109, %62, %cst_40 {dimension_numbers = #tpu.dot_dimension_numbers<[1], [0], [0], [1], [0, 0, 1, 1], [], []>} : vector<32x128xbf16>, vector<128x128xbf16>, vector<32x128xf32> -> vector<32x128xf32>
    %111 = arith.addf %108, %110 : vector<32x128xf32>
    %112 = vector.broadcast %63 : vector<1x128xf32> to vector<32x128xf32>
    %113 = arith.addf %111, %112 : vector<32x128xf32>
    %cst_41 = arith.constant 0.000000e+00 : f32
    %114 = vector.broadcast %cst_41 : f32 to vector<32x128xf32>
    %115 = arith.maximumf %113, %114 : vector<32x128xf32>
    %c0_42 = arith.constant 0 : index
    %c0_43 = arith.constant 0 : index
    %116 = vector.load %arg12[%c0_42, %c0_43] : memref<128x128xbf16, #tpu.memory_space<vmem>>, vector<128x128xbf16>
    %c0_44 = arith.constant 0 : index
    %c0_45 = arith.constant 0 : index
    %117 = vector.load %arg13[%c0_44, %c0_45] : memref<1x128xf32, #tpu.memory_space<vmem>>, vector<1x128xf32>
    %c0_46 = arith.constant 0 : index
    %c0_47 = arith.constant 0 : index
    %118 = vector.load %arg14[%c0_46, %c0_47] : memref<128x128xbf16, #tpu.memory_space<vmem>>, vector<128x128xbf16>
    %c0_48 = arith.constant 0 : index
    %c0_49 = arith.constant 0 : index
    %119 = vector.load %arg15[%c0_48, %c0_49] : memref<128x128xbf16, #tpu.memory_space<vmem>>, vector<128x128xbf16>
    %c0_50 = arith.constant 0 : index
    %c0_51 = arith.constant 0 : index
    %120 = vector.load %arg16[%c0_50, %c0_51] : memref<1x128xf32, #tpu.memory_space<vmem>>, vector<1x128xf32>
    %121 = arith.truncf %115 : vector<32x128xf32> to vector<32x128xbf16>
    %cst_52 = arith.constant dense<0.000000e+00> : vector<32x128xf32>
    %122 = tpu.matmul %121, %116, %cst_52 {dimension_numbers = #tpu.dot_dimension_numbers<[1], [0], [0], [1], [0, 0, 1, 1], [], []>} : vector<32x128xbf16>, vector<128x128xbf16>, vector<32x128xf32> -> vector<32x128xf32>
    %123 = vector.broadcast %117 : vector<1x128xf32> to vector<32x128xf32>
    %124 = arith.addf %122, %123 : vector<32x128xf32>
    %cst_53 = arith.constant 0.000000e+00 : f32
    %125 = vector.broadcast %cst_53 : f32 to vector<32x128xf32>
    %126 = arith.maximumf %124, %125 : vector<32x128xf32>
    %cst_54 = arith.constant 0.000000e+00 : f32
    %127 = vector.broadcast %cst_54 : f32 to vector<32x128xf32>
    %128 = vector.extract_strided_slice %1 {offsets = [0, 0], sizes = [32, 8], strides = [1, 1]} : vector<32x32xf32> to vector<32x8xf32>
    %129 = vector.extract_strided_slice %126 {offsets = [0, 0], sizes = [8, 128], strides = [1, 1]} : vector<32x128xf32> to vector<8x128xf32>
    %130 = vector.shape_cast %128 : vector<32x8xf32> to vector<32x8x1xf32>
    %131 = vector.shape_cast %129 : vector<8x128xf32> to vector<1x8x128xf32>
    %132 = vector.broadcast %130 : vector<32x8x1xf32> to vector<32x8x128xf32>
    %133 = vector.broadcast %131 : vector<1x8x128xf32> to vector<32x8x128xf32>
    %134 = arith.mulf %132, %133 : vector<32x8x128xf32>
    %cst_55 = arith.constant dense<0xFF800000> : vector<32x128xf32>
    %135 = vector.multi_reduction <maximumf>, %134, %cst_55 [1] : vector<32x8x128xf32> to vector<32x128xf32>
    %136 = arith.maximumf %127, %135 : vector<32x128xf32>
    %137 = vector.extract_strided_slice %1 {offsets = [0, 8], sizes = [32, 8], strides = [1, 1]} : vector<32x32xf32> to vector<32x8xf32>
    %138 = vector.extract_strided_slice %126 {offsets = [8, 0], sizes = [8, 128], strides = [1, 1]} : vector<32x128xf32> to vector<8x128xf32>
    %139 = vector.shape_cast %137 : vector<32x8xf32> to vector<32x8x1xf32>
    %140 = vector.shape_cast %138 : vector<8x128xf32> to vector<1x8x128xf32>
    %141 = vector.broadcast %139 : vector<32x8x1xf32> to vector<32x8x128xf32>
    %142 = vector.broadcast %140 : vector<1x8x128xf32> to vector<32x8x128xf32>
    %143 = arith.mulf %141, %142 : vector<32x8x128xf32>
    %cst_56 = arith.constant dense<0xFF800000> : vector<32x128xf32>
    %144 = vector.multi_reduction <maximumf>, %143, %cst_56 [1] : vector<32x8x128xf32> to vector<32x128xf32>
    %145 = arith.maximumf %136, %144 : vector<32x128xf32>
    %146 = vector.extract_strided_slice %1 {offsets = [0, 16], sizes = [32, 8], strides = [1, 1]} : vector<32x32xf32> to vector<32x8xf32>
    %147 = vector.extract_strided_slice %126 {offsets = [16, 0], sizes = [8, 128], strides = [1, 1]} : vector<32x128xf32> to vector<8x128xf32>
    %148 = vector.shape_cast %146 : vector<32x8xf32> to vector<32x8x1xf32>
    %149 = vector.shape_cast %147 : vector<8x128xf32> to vector<1x8x128xf32>
    %150 = vector.broadcast %148 : vector<32x8x1xf32> to vector<32x8x128xf32>
    %151 = vector.broadcast %149 : vector<1x8x128xf32> to vector<32x8x128xf32>
    %152 = arith.mulf %150, %151 : vector<32x8x128xf32>
    %cst_57 = arith.constant dense<0xFF800000> : vector<32x128xf32>
    %153 = vector.multi_reduction <maximumf>, %152, %cst_57 [1] : vector<32x8x128xf32> to vector<32x128xf32>
    %154 = arith.maximumf %145, %153 : vector<32x128xf32>
    %155 = vector.extract_strided_slice %1 {offsets = [0, 24], sizes = [32, 8], strides = [1, 1]} : vector<32x32xf32> to vector<32x8xf32>
    %156 = vector.extract_strided_slice %126 {offsets = [24, 0], sizes = [8, 128], strides = [1, 1]} : vector<32x128xf32> to vector<8x128xf32>
    %157 = vector.shape_cast %155 : vector<32x8xf32> to vector<32x8x1xf32>
    %158 = vector.shape_cast %156 : vector<8x128xf32> to vector<1x8x128xf32>
    %159 = vector.broadcast %157 : vector<32x8x1xf32> to vector<32x8x128xf32>
    %160 = vector.broadcast %158 : vector<1x8x128xf32> to vector<32x8x128xf32>
    %161 = arith.mulf %159, %160 : vector<32x8x128xf32>
    %cst_58 = arith.constant dense<0xFF800000> : vector<32x128xf32>
    %162 = vector.multi_reduction <maximumf>, %161, %cst_58 [1] : vector<32x8x128xf32> to vector<32x128xf32>
    %163 = arith.maximumf %154, %162 : vector<32x128xf32>
    %164 = arith.truncf %115 : vector<32x128xf32> to vector<32x128xbf16>
    %cst_59 = arith.constant dense<0.000000e+00> : vector<32x128xf32>
    %165 = tpu.matmul %164, %118, %cst_59 {dimension_numbers = #tpu.dot_dimension_numbers<[1], [0], [0], [1], [0, 0, 1, 1], [], []>} : vector<32x128xbf16>, vector<128x128xbf16>, vector<32x128xf32> -> vector<32x128xf32>
    %166 = arith.truncf %163 : vector<32x128xf32> to vector<32x128xbf16>
    %cst_60 = arith.constant dense<0.000000e+00> : vector<32x128xf32>
    %167 = tpu.matmul %166, %119, %cst_60 {dimension_numbers = #tpu.dot_dimension_numbers<[1], [0], [0], [1], [0, 0, 1, 1], [], []>} : vector<32x128xbf16>, vector<128x128xbf16>, vector<32x128xf32> -> vector<32x128xf32>
    %168 = arith.addf %165, %167 : vector<32x128xf32>
    %169 = vector.broadcast %120 : vector<1x128xf32> to vector<32x128xf32>
    %170 = arith.addf %168, %169 : vector<32x128xf32>
    %171 = vector.extract_strided_slice %170 {offsets = [0, 0], sizes = [32, 4], strides = [1, 1]} : vector<32x128xf32> to vector<32x4xf32>
    %cst_61 = arith.constant dense<0xFF800000> : vector<32xf32>
    %172 = vector.multi_reduction <maximumf>, %171, %cst_61 [1] : vector<32x4xf32> to vector<32xf32>
    %173 = vector.shape_cast %172 : vector<32xf32> to vector<32x1xf32>
    %174 = vector.broadcast %173 : vector<32x1xf32> to vector<32x4xf32>
    %175 = arith.subf %171, %174 : vector<32x4xf32>
    %176 = math.exp %175 : vector<32x4xf32>
    %cst_62 = arith.constant dense<0.000000e+00> : vector<32xf32>
    %177 = vector.multi_reduction <add>, %176, %cst_62 [1] : vector<32x4xf32> to vector<32xf32>
    %178 = vector.shape_cast %177 : vector<32xf32> to vector<32x1xf32>
    %179 = math.log %178 : vector<32x1xf32>
    %180 = vector.broadcast %179 : vector<32x1xf32> to vector<32x4xf32>
    %181 = arith.subf %175, %180 : vector<32x4xf32>
    %c0_63 = arith.constant 0 : index
    %c0_64 = arith.constant 0 : index
    %182 = vector.load %arg17[%c0_63, %c0_64] : memref<32x4xf32, #tpu.memory_space<vmem>>, vector<32x4xf32>
    tpu.vector_store %arg17[%c0_63, %c0_64], %181 {strides = array<i32>} : memref<32x4xf32, #tpu.memory_space<vmem>>, vector<32x4xf32>,
    return
  }
}

</mosaic_0001>

<llo_original>
// kernel: sage_forward.1
$region0: #{sage_forward.1}
  #allocation0 [shape = 'u32[]', space=smem, size = 0x4, offset = 0x4, fixed_abs, tag = 'smem constant byte address 0x4 - core index']
  #allocation1 [shape = 'u32[72,128]{1,0:T(1,128)}', space=vmem, size = 0x9000, scoped, tag = 'internal scratch']
  %s0 = inlined_call_operand.vmem [shape: f32[32,128], index: 0, kind: input, shape index: {}]
  %s1 = inlined_call_operand.vmem [shape: f32[32,32], index: 1, kind: input, shape index: {}]
  %s2 = inlined_call_operand.vmem [shape: bf16[128,128], index: 2, kind: input, shape index: {}]
  %s3 = inlined_call_operand.vmem [shape: f32[1,128], index: 3, kind: input, shape index: {}]
  %s4 = inlined_call_operand.vmem [shape: bf16[128,128], index: 4, kind: input, shape index: {}]
  %s5 = inlined_call_operand.vmem [shape: bf16[128,128], index: 5, kind: input, shape index: {}]
  %s6 = inlined_call_operand.vmem [shape: f32[1,128], index: 6, kind: input, shape index: {}]
  %s7 = inlined_call_operand.vmem [shape: bf16[128,128], index: 7, kind: input, shape index: {}]
  %s8 = inlined_call_operand.vmem [shape: f32[1,128], index: 8, kind: input, shape index: {}]
  %s9 = inlined_call_operand.vmem [shape: bf16[128,128], index: 9, kind: input, shape index: {}]
  %s10 = inlined_call_operand.vmem [shape: bf16[128,128], index: 10, kind: input, shape index: {}]
  %s11 = inlined_call_operand.vmem [shape: f32[1,128], index: 11, kind: input, shape index: {}]
  %s12 = inlined_call_operand.vmem [shape: bf16[128,128], index: 12, kind: input, shape index: {}]
  %s13 = inlined_call_operand.vmem [shape: f32[1,128], index: 13, kind: input, shape index: {}]
  %s14 = inlined_call_operand.vmem [shape: bf16[128,128], index: 14, kind: input, shape index: {}]
  %s15 = inlined_call_operand.vmem [shape: bf16[128,128], index: 15, kind: input, shape index: {}]
  %s16 = inlined_call_operand.vmem [shape: f32[1,128], index: 16, kind: input, shape index: {}]
  %s17 = inlined_call_operand.vmem [shape: f32[32,4], index: 17, kind: output, shape index: {}]
  %s18 = sld [smem:[#allocation0]]
  $region78: #{sage_forward.1} parent=0
    _
  %s20 = ssub.s32 1, %s18
  %s21 = scalar_select 0, %s20, %s18
  // Predicated region
  $region2: #{sage_forward.1} parent=0 // pred_check
    _
  $region3: #{sage_forward.1} parent=0 // pred_check_branch
    %23 = sbr.rel (0) target = $region5
  $region4: #{sage_forward.1} parent=0 // pred_region
    _
  $region5: #{sage_forward.1} parent=0 // pred_fallthru
    _
  // Predicated region
  $region6: #{sage_forward.1} parent=0 // pred_check
    _
  $region7: #{sage_forward.1} parent=0 // pred_check_branch
    %25 = sbr.rel (0) target = $region9
  $region8: #{sage_forward.1} parent=0 // pred_region
    _
  $region9: #{sage_forward.1} parent=0 // pred_fallthru
    _
  // Predicated region
  $region10: #{sage_forward.1} parent=0 // pred_check
    _
  $region11: #{sage_forward.1} parent=0 // pred_check_branch
    %27 = sbr.rel (0) target = $region13
  $region12: #{sage_forward.1} parent=0 // pred_region
    _
  $region13: #{sage_forward.1} parent=0 // pred_fallthru
    _
  // Predicated region
  $region14: #{sage_forward.1} parent=0 // pred_check
    _
  $region15: #{sage_forward.1} parent=0 // pred_check_branch
    %29 = sbr.rel (0) target = $region17
  $region16: #{sage_forward.1} parent=0 // pred_region
    _
  $region17: #{sage_forward.1} parent=0 // pred_fallthru
    _
  // Predicated region
  $region18: #{sage_forward.1} parent=0 // pred_check
    _
  $region19: #{sage_forward.1} parent=0 // pred_check_branch
    %31 = sbr.rel (0) target = $region21
  $region20: #{sage_forward.1} parent=0 // pred_region
    _
  $region21: #{sage_forward.1} parent=0 // pred_fallthru
    _
  // Predicated region
  $region22: #{sage_forward.1} parent=0 // pred_check
    _
  $region23: #{sage_forward.1} parent=0 // pred_check_branch
    %33 = sbr.rel (0) target = $region25
  $region24: #{sage_forward.1} parent=0 // pred_region
    _
  $region25: #{sage_forward.1} parent=0 // pred_fallthru
    _
  // Predicated region
  $region26: #{sage_forward.1} parent=0 // pred_check
    _
  $region27: #{sage_forward.1} parent=0 // pred_check_branch
    %35 = sbr.rel (0) target = $region29
  $region28: #{sage_forward.1} parent=0 // pred_region
    _
  $region29: #{sage_forward.1} parent=0 // pred_fallthru
    _
  // Predicated region
  $region30: #{sage_forward.1} parent=0 // pred_check
    _
  $region31: #{sage_forward.1} parent=0 // pred_check_branch
    %37 = sbr.rel (0) target = $region33
  $region32: #{sage_forward.1} parent=0 // pred_region
    _
  $region33: #{sage_forward.1} parent=0 // pred_fallthru
    _
  // Predicated region
  $region34: #{sage_forward.1} parent=0 // pred_check
    _
  $region35: #{sage_forward.1} parent=0 // pred_check_branch
    %39 = sbr.rel (0) target = $region37
  $region36: #{sage_forward.1} parent=0 // pred_region
    _
  $region37: #{sage_forward.1} parent=0 // pred_fallthru
    _
  // Predicated region
  $region38: #{sage_forward.1} parent=0 // pred_check
    _
  $region39: #{sage_forward.1} parent=0 // pred_check_branch
    %41 = sbr.rel (0) target = $region41
  $region40: #{sage_forward.1} parent=0 // pred_region
    _
  $region41: #{sage_forward.1} parent=0 // pred_fallthru
    _
  // Predicated region
  $region42: #{sage_forward.1} parent=0 // pred_check
    _
  $region43: #{sage_forward.1} parent=0 // pred_check_branch
    %43 = sbr.rel (0) target = $region45
  $region44: #{sage_forward.1} parent=0 // pred_region
    _
  $region45: #{sage_forward.1} parent=0 // pred_fallthru
    _
  // Predicated region
  $region46: #{sage_forward.1} parent=0 // pred_check
    _
  $region47: #{sage_forward.1} parent=0 // pred_check_branch
    %45 = sbr.rel (0) target = $region49
  $region48: #{sage_forward.1} parent=0 // pred_region
    _
  $region49: #{sage_forward.1} parent=0 // pred_fallthru
    _
  // Predicated region
  $region50: #{sage_forward.1} parent=0 // pred_check
    _
  $region51: #{sage_forward.1} parent=0 // pred_check_branch
    %47 = sbr.rel (0) target = $region53
  $region52: #{sage_forward.1} parent=0 // pred_region
    _
  $region53: #{sage_forward.1} parent=0 // pred_fallthru
    _
  // Predicated region
  $region54: #{sage_forward.1} parent=0 // pred_check
    _
  $region55: #{sage_forward.1} parent=0 // pred_check_branch
    %49 = sbr.rel (0) target = $region57
  $region56: #{sage_forward.1} parent=0 // pred_region
    _
  $region57: #{sage_forward.1} parent=0 // pred_fallthru
    _
  // Predicated region
  $region58: #{sage_forward.1} parent=0 // pred_check
    _
  $region59: #{sage_forward.1} parent=0 // pred_check_branch
    %51 = sbr.rel (0) target = $region61
  $region60: #{sage_forward.1} parent=0 // pred_region
    _
  $region61: #{sage_forward.1} parent=0 // pred_fallthru
    _
  // Predicated region
  $region62: #{sage_forward.1} parent=0 // pred_check
    _
  $region63: #{sage_forward.1} parent=0 // pred_check_branch
    %53 = sbr.rel (0) target = $region65
  $region64: #{sage_forward.1} parent=0 // pred_region
    _
  $region65: #{sage_forward.1} parent=0 // pred_fallthru
    _
  // Predicated region
  $region66: #{sage_forward.1} parent=0 // pred_check
    _
  $region67: #{sage_forward.1} parent=0 // pred_check_branch
    %55 = sbr.rel (0) target = $region69
  $region68: #{sage_forward.1} parent=0 // pred_region
    _
  $region69: #{sage_forward.1} parent=0 // pred_fallthru
    _
  %v56 = vld [vmem:[%s0] sm:$0xff]
  %v57 = vld [vmem:[%s0 + $0x8] sm:$0xff]
  %v58 = vld [vmem:[%s0 + $0x10] sm:$0xff]
  %v59 = vld [vmem:[%s0 + $0x18] sm:$0xff]
  %v60 = vld [vmem:[%s1] sm:$0xff]
  %v61 = vld [vmem:[%s1 + $0x8] sm:$0xff]
  %v62 = vld [vmem:[%s1 + $0x10] sm:$0xff]
  %v63 = vld [vmem:[%s1 + $0x18] sm:$0xff]
  %v64 = vld [vmem:[%s2] sm:$0xf]
  %v65 = vld [vmem:[%s2 + $0x4] sm:$0xf]
  %v66 = vld [vmem:[%s2 + $0x8] sm:$0xf]
  %v67 = vld [vmem:[%s2 + $0xc] sm:$0xf]
  %v68 = vld [vmem:[%s2 + $0x10] sm:$0xf]
  %v69 = vld [vmem:[%s2 + $0x14] sm:$0xf]
  %v70 = vld [vmem:[%s2 + $0x18] sm:$0xf]
  %v71 = vld [vmem:[%s2 + $0x1c] sm:$0xf]
  %v72 = vld [vmem:[%s2 + $0x20] sm:$0xf]
  %v73 = vld [vmem:[%s2 + $0x24] sm:$0xf]
  %v74 = vld [vmem:[%s2 + $0x28] sm:$0xf]
  %v75 = vld [vmem:[%s2 + $0x2c] sm:$0xf]
  %v76 = vld [vmem:[%s2 + $0x30] sm:$0xf]
  %v77 = vld [vmem:[%s2 + $0x34] sm:$0xf]
  %v78 = vld [vmem:[%s2 + $0x38] sm:$0xf]
  %v79 = vld [vmem:[%s2 + $0x3c] sm:$0xf]
  %v80 = vld [vmem:[%s3] sm:$0x1]
  %v81 = vld [vmem:[%s4] sm:$0xf]
  %v82 = vld [vmem:[%s4 + $0x4] sm:$0xf]
  %v83 = vld [vmem:[%s4 + $0x8] sm:$0xf]
  %v84 = vld [vmem:[%s4 + $0xc] sm:$0xf]
  %v85 = vld [vmem:[%s4 + $0x10] sm:$0xf]
  %v86 = vld [vmem:[%s4 + $0x14] sm:$0xf]
  %v87 = vld [vmem:[%s4 + $0x18] sm:$0xf]
  %v88 = vld [vmem:[%s4 + $0x1c] sm:$0xf]
  %v89 = vld [vmem:[%s4 + $0x20] sm:$0xf]
  %v90 = vld [vmem:[%s4 + $0x24] sm:$0xf]
  %v91 = vld [vmem:[%s4 + $0x28] sm:$0xf]
  %v92 = vld [vmem:[%s4 + $0x2c] sm:$0xf]
  %v93 = vld [vmem:[%s4 + $0x30] sm:$0xf]
  %v94 = vld [vmem:[%s4 + $0x34] sm:$0xf]
  %v95 = vld [vmem:[%s4 + $0x38] sm:$0xf]
  %v96 = vld [vmem:[%s4 + $0x3c] sm:$0xf]
  %v97 = vld [vmem:[%s5] sm:$0xf]
  %v98 = vld [vmem:[%s5 + $0x4] sm:$0xf]
  %v99 = vld [vmem:[%s5 + $0x8] sm:$0xf]
  %v100 = vld [vmem:[%s5 + $0xc] sm:$0xf]
  %v101 = vld [vmem:[%s5 + $0x10] sm:$0xf]
  %v102 = vld [vmem:[%s5 + $0x14] sm:$0xf]
  %v103 = vld [vmem:[%s5 + $0x18] sm:$0xf]
  %v104 = vld [vmem:[%s5 + $0x1c] sm:$0xf]
  %v105 = vld [vmem:[%s5 + $0x20] sm:$0xf]
  %v106 = vld [vmem:[%s5 + $0x24] sm:$0xf]
  %v107 = vld [vmem:[%s5 + $0x28] sm:$0xf]
  %v108 = vld [vmem:[%s5 + $0x2c] sm:$0xf]
  %v109 = vld [vmem:[%s5 + $0x30] sm:$0xf]
  %v110 = vld [vmem:[%s5 + $0x34] sm:$0xf]
  %v111 = vld [vmem:[%s5 + $0x38] sm:$0xf]
  %v112 = vld [vmem:[%s5 + $0x3c] sm:$0xf]
  %v113 = vld [vmem:[%s6] sm:$0x1]
  %v114 = vpack.c.bf16 %v57, %v56
  %v115 = vpack.c.bf16 %v59, %v58
  %v117 = vperm.slane %v80, 0
  %v135 = vunpack.c.l.b16 %v64
  %v136 = vunpack.c.l.b16 %v65
  %v137 = vunpack.c.l.b16 %v66
  %v138 = vunpack.c.l.b16 %v67
  %v139 = vunpack.c.l.b16 %v68
  %v140 = vunpack.c.l.b16 %v69
  %v141 = vunpack.c.l.b16 %v70
  %v142 = vunpack.c.l.b16 %v71
  %v143 = vunpack.c.l.b16 %v72
  %v144 = vunpack.c.l.b16 %v73
  %v145 = vunpack.c.l.b16 %v74
  %v146 = vunpack.c.l.b16 %v75
  %v147 = vunpack.c.l.b16 %v76
  %v148 = vunpack.c.l.b16 %v77
  %v149 = vunpack.c.l.b16 %v78
  %v150 = vunpack.c.l.b16 %v79
  %v151 = vpack.c.b16 %v136, %v135
  %v152 = vpack.c.b16 %v138, %v137
  %v153 = vpack.c.b16 %v140, %v139
  %v154 = vpack.c.b16 %v142, %v141
  %v155 = vpack.c.b16 %v144, %v143
  %v156 = vpack.c.b16 %v146, %v145
  %v157 = vpack.c.b16 %v148, %v147
  %v158 = vpack.c.b16 %v150, %v149
  %167 = vmatpush.bf16.msra.mxu0 %v158
  %168 = vmatpush.bf16.msra.mxu0 %v157
  %169 = vmatpush.bf16.msra.mxu0 %v156
  %170 = vmatpush.bf16.msra.mxu0 %v155
  %171 = vmatpush.bf16.msra.mxu0 %v154
  %172 = vmatpush.bf16.msra.mxu0 %v153
  %173 = vmatpush.bf16.msra.mxu0 %v152
  %174 = vmatpush.bf16.msra.mxu0 %v151
  %175 = vmatmul.bf16.gmra.mxu0 %v114
  %v176 = vpop.f32.mrf.mxu0
  %v177 = vadd.f32 %v117, %v176
  %v178 = vpop.f32.mrf.mxu0
  %v179 = vadd.f32 %v117, %v178
  %180 = vmatmul.bf16.gmra.mxu0 %v115
  %v181 = vpop.f32.mrf.mxu0
  %v182 = vadd.f32 %v117, %v181
  %v183 = vpop.f32.mrf.mxu0
  %v184 = vadd.f32 %v117, %v183
  %185 = vdwg.mxu0
  %v186 = vmax.f32 %v177, 0.0
  %v187 = vmax.f32 %v179, 0.0
  %v188 = vmax.f32 %v182, 0.0
  %v189 = vmax.f32 %v184, 0.0
  %v190 = vperm.slane %v60, 0
  %v191 = vlaneseq
  %v192 = vshrl.u32 %v191, 7
  %194 = vset.pattern.permute.xlu0 %v192
  %195 = vperm.xlu0 %194, %v190
  %v196 = vpop.permute.xlu0 %195
  %v197 = vperm.slane %v60, 1
  %v198 = vlaneseq
  %v199 = vshrl.u32 %v198, 7
  %201 = vset.pattern.permute.xlu0 %v199
  %202 = vperm.xlu0 %201, %v197
  %v203 = vpop.permute.xlu0 %202
  %v204 = vperm.slane %v60, 2
  %v205 = vlaneseq
  %v206 = vshrl.u32 %v205, 7
  %208 = vset.pattern.permute.xlu0 %v206
  %209 = vperm.xlu0 %208, %v204
  %v210 = vpop.permute.xlu0 %209
  %v211 = vperm.slane %v60, 3
  %v212 = vlaneseq
  %v213 = vshrl.u32 %v212, 7
  %215 = vset.pattern.permute.xlu0 %v213
  %216 = vperm.xlu0 %215, %v211
  %v217 = vpop.permute.xlu0 %216
  %v218 = vperm.slane %v60, 4
  %v219 = vlaneseq
  %v220 = vshrl.u32 %v219, 7
  %222 = vset.pattern.permute.xlu0 %v220
  %223 = vperm.xlu0 %222, %v218
  %v224 = vpop.permute.xlu0 %223
  %v225 = vperm.slane %v60, 5
  %v226 = vlaneseq
  %v227 = vshrl.u32 %v226, 7
  %229 = vset.pattern.permute.xlu0 %v227
  %230 = vperm.xlu0 %229, %v225
  %v231 = vpop.permute.xlu0 %230
  %v232 = vperm.slane %v60, 6
  %v233 = vlaneseq
  %v234 = vshrl.u32 %v233, 7
  %236 = vset.pattern.permute.xlu0 %v234
  %237 = vperm.xlu0 %236, %v232
  %v238 = vpop.permute.xlu0 %237
  %v239 = vperm.slane %v60, 7
  %v240 = vlaneseq
  %v241 = vshrl.u32 %v240, 7
  %243 = vset.pattern.permute.xlu0 %v241
  %244 = vperm.xlu0 %243, %v239
  %v245 = vpop.permute.xlu0 %244
  %v246 = vperm.slane %v61, 0
  %v247 = vlaneseq
  %v248 = vshrl.u32 %v247, 7
  %250 = vset.pattern.permute.xlu0 %v248
  %251 = vperm.xlu0 %250, %v246
  %v252 = vpop.permute.xlu0 %251
  %v253 = vperm.slane %v61, 1
  %v254 = vlaneseq
  %v255 = vshrl.u32 %v254, 7
  %257 = vset.pattern.permute.xlu0 %v255
  %258 = vperm.xlu0 %257, %v253
  %v259 = vpop.permute.xlu0 %258
  %v260 = vperm.slane %v61, 2
  %v261 = vlaneseq
  %v262 = vshrl.u32 %v261, 7
  %264 = vset.pattern.permute.xlu0 %v262
  %265 = vperm.xlu0 %264, %v260
  %v266 = vpop.permute.xlu0 %265
  %v267 = vperm.slane %v61, 3
  %v268 = vlaneseq
  %v269 = vshrl.u32 %v268, 7
  %271 = vset.pattern.permute.xlu0 %v269
  %272 = vperm.xlu0 %271, %v267
  %v273 = vpop.permute.xlu0 %272
  %v274 = vperm.slane %v61, 4
  %v275 = vlaneseq
  %v276 = vshrl.u32 %v275, 7
  %278 = vset.pattern.permute.xlu0 %v276
  %279 = vperm.xlu0 %278, %v274
  %v280 = vpop.permute.xlu0 %279
  %v281 = vperm.slane %v61, 5
  %v282 = vlaneseq
  %v283 = vshrl.u32 %v282, 7
  %285 = vset.pattern.permute.xlu0 %v283
  %286 = vperm.xlu0 %285, %v281
  %v287 = vpop.permute.xlu0 %286
  %v288 = vperm.slane %v61, 6
  %v289 = vlaneseq
  %v290 = vshrl.u32 %v289, 7
  %292 = vset.pattern.permute.xlu0 %v290
  %293 = vperm.xlu0 %292, %v288
  %v294 = vpop.permute.xlu0 %293
  %v295 = vperm.slane %v61, 7
  %v296 = vlaneseq
  %v297 = vshrl.u32 %v296, 7
  %299 = vset.pattern.permute.xlu0 %v297
  %300 = vperm.xlu0 %299, %v295
  %v301 = vpop.permute.xlu0 %300
  %v302 = vperm.slane %v62, 0
  %v303 = vlaneseq
  %v304 = vshrl.u32 %v303, 7
  %306 = vset.pattern.permute.xlu0 %v304
  %307 = vperm.xlu0 %306, %v302
  %v308 = vpop.permute.xlu0 %307
  %v309 = vperm.slane %v62, 1
  %v310 = vlaneseq
  %v311 = vshrl.u32 %v310, 7
  %313 = vset.pattern.permute.xlu0 %v311
  %314 = vperm.xlu0 %313, %v309
  %v315 = vpop.permute.xlu0 %314
  %v316 = vperm.slane %v62, 2
  %v317 = vlaneseq
  %v318 = vshrl.u32 %v317, 7
  %320 = vset.pattern.permute.xlu0 %v318
  %321 = vperm.xlu0 %320, %v316
  %v322 = vpop.permute.xlu0 %321
  %v323 = vperm.slane %v62, 3
  %v324 = vlaneseq
  %v325 = vshrl.u32 %v324, 7
  %327 = vset.pattern.permute.xlu0 %v325
  %328 = vperm.xlu0 %327, %v323
  %v329 = vpop.permute.xlu0 %328
  %v330 = vperm.slane %v62, 4
  %v331 = vlaneseq
  %v332 = vshrl.u32 %v331, 7
  %334 = vset.pattern.permute.xlu0 %v332
  %335 = vperm.xlu0 %334, %v330
  %v336 = vpop.permute.xlu0 %335
  %v337 = vperm.slane %v62, 5
  %v338 = vlaneseq
  %v339 = vshrl.u32 %v338, 7
  %341 = vset.pattern.permute.xlu0 %v339
  %342 = vperm.xlu0 %341, %v337
  %v343 = vpop.permute.xlu0 %342
  %v344 = vperm.slane %v62, 6
  %v345 = vlaneseq
  %v346 = vshrl.u32 %v345, 7
  %348 = vset.pattern.permute.xlu0 %v346
  %349 = vperm.xlu0 %348, %v344
  %v350 = vpop.permute.xlu0 %349
  %v351 = vperm.slane %v62, 7
  %v352 = vlaneseq
  %v353 = vshrl.u32 %v352, 7
  %355 = vset.pattern.permute.xlu0 %v353
  %356 = vperm.xlu0 %355, %v351
  %v357 = vpop.permute.xlu0 %356
  %v358 = vperm.slane %v63, 0
  %v359 = vlaneseq
  %v360 = vshrl.u32 %v359, 7
  %362 = vset.pattern.permute.xlu0 %v360
  %363 = vperm.xlu0 %362, %v358
  %v364 = vpop.permute.xlu0 %363
  %v365 = vperm.slane %v63, 1
  %v366 = vlaneseq
  %v367 = vshrl.u32 %v366, 7
  %369 = vset.pattern.permute.xlu0 %v367
  %370 = vperm.xlu0 %369, %v365
  %v371 = vpop.permute.xlu0 %370
  %v372 = vperm.slane %v63, 2
  %v373 = vlaneseq
  %v374 = vshrl.u32 %v373, 7
  %376 = vset.pattern.permute.xlu0 %v374
  %377 = vperm.xlu0 %376, %v372
  %v378 = vpop.permute.xlu0 %377
  %v379 = vperm.slane %v63, 3
  %v380 = vlaneseq
  %v381 = vshrl.u32 %v380, 7
  %383 = vset.pattern.permute.xlu0 %v381
  %384 = vperm.xlu0 %383, %v379
  %v385 = vpop.permute.xlu0 %384
  %v386 = vperm.slane %v63, 4
  %v387 = vlaneseq
  %v388 = vshrl.u32 %v387, 7
  %390 = vset.pattern.permute.xlu0 %v388
  %391 = vperm.xlu0 %390, %v386
  %v392 = vpop.permute.xlu0 %391
  %v393 = vperm.slane %v63, 5
  %v394 = vlaneseq
  %v395 = vshrl.u32 %v394, 7
  %397 = vset.pattern.permute.xlu0 %v395
  %398 = vperm.xlu0 %397, %v393
  %v399 = vpop.permute.xlu0 %398
  %v400 = vperm.slane %v63, 6
  %v401 = vlaneseq
  %v402 = vshrl.u32 %v401, 7
  %404 = vset.pattern.permute.xlu0 %v402
  %405 = vperm.xlu0 %404, %v400
  %v406 = vpop.permute.xlu0 %405
  %v407 = vperm.slane %v63, 7
  %v408 = vlaneseq
  %v409 = vshrl.u32 %v408, 7
  %411 = vset.pattern.permute.xlu0 %v409
  %412 = vperm.xlu0 %411, %v407
  %v413 = vpop.permute.xlu0 %412
  %v414 = vmul.f32 %v196, %v186
  %v415 = vmul.f32 %v203, %v186
  %v416 = vmul.f32 %v210, %v186
  %v417 = vmul.f32 %v217, %v186
  %v418 = vmul.f32 %v224, %v186
  %v419 = vmul.f32 %v231, %v186
  %v420 = vmul.f32 %v238, %v186
  %v421 = vmul.f32 %v245, %v186
  %v422 = vmul.f32 %v252, %v186
  %v423 = vmul.f32 %v259, %v186
  %v424 = vmul.f32 %v266, %v186
  %v425 = vmul.f32 %v273, %v186
  %v426 = vmul.f32 %v280, %v186
  %v427 = vmul.f32 %v287, %v186
  %v428 = vmul.f32 %v294, %v186
  %v429 = vmul.f32 %v301, %v186
  %v430 = vmul.f32 %v308, %v186
  %v431 = vmul.f32 %v315, %v186
  %v432 = vmul.f32 %v322, %v186
  %v433 = vmul.f32 %v329, %v186
  %v434 = vmul.f32 %v336, %v186
  %v435 = vmul.f32 %v343, %v186
  %v436 = vmul.f32 %v350, %v186
  %v437 = vmul.f32 %v357, %v186
  %v438 = vmul.f32 %v364, %v186
  %v439 = vmul.f32 %v371, %v186
  %v440 = vmul.f32 %v378, %v186
  %v441 = vmul.f32 %v385, %v186
  %v442 = vmul.f32 %v392, %v186
  %v443 = vmul.f32 %v399, %v186
  %v444 = vmul.f32 %v406, %v186
  %v445 = vmul.f32 %v413, %v186
  %v446 = vrot.slane %v414, 4
  %v447 = vmax.f32 %v414, %v446
  %v448 = vrot.slane %v447, 2
  %v449 = vmax.f32 %v447, %v448
  %v450 = vrot.slane %v449, 1
  %v451 = vmax.f32 %v449, %v450
  %v452 = vrot.slane %v415, 4
  %v453 = vmax.f32 %v415, %v452
  %v454 = vrot.slane %v453, 2
  %v455 = vmax.f32 %v453, %v454
  %v456 = vrot.slane %v455, 1
  %v457 = vmax.f32 %v455, %v456
  %v458 = vrot.slane %v416, 4
  %v459 = vmax.f32 %v416, %v458
  %v460 = vrot.slane %v459, 2
  %v461 = vmax.f32 %v459, %v460
  %v462 = vrot.slane %v461, 1
  %v463 = vmax.f32 %v461, %v462
  %v464 = vrot.slane %v417, 4
  %v465 = vmax.f32 %v417, %v464
  %v466 = vrot.slane %v465, 2
  %v467 = vmax.f32 %v465, %v466
  %v468 = vrot.slane %v467, 1
  %v469 = vmax.f32 %v467, %v468
  %v470 = vrot.slane %v418, 4
  %v471 = vmax.f32 %v418, %v470
  %v472 = vrot.slane %v471, 2
  %v473 = vmax.f32 %v471, %v472
  %v474 = vrot.slane %v473, 1
  %v475 = vmax.f32 %v473, %v474
  %v476 = vrot.slane %v419, 4
  %v477 = vmax.f32 %v419, %v476
  %v478 = vrot.slane %v477, 2
  %v479 = vmax.f32 %v477, %v478
  %v480 = vrot.slane %v479, 1
  %v481 = vmax.f32 %v479, %v480
  %v482 = vrot.slane %v420, 4
  %v483 = vmax.f32 %v420, %v482
  %v484 = vrot.slane %v483, 2
  %v485 = vmax.f32 %v483, %v484
  %v486 = vrot.slane %v485, 1
  %v487 = vmax.f32 %v485, %v486
  %v488 = vrot.slane %v421, 4
  %v489 = vmax.f32 %v421, %v488
  %v490 = vrot.slane %v489, 2
  %v491 = vmax.f32 %v489, %v490
  %v492 = vrot.slane %v491, 1
  %v493 = vmax.f32 %v491, %v492
  %v494 = vrot.slane %v422, 4
  %v495 = vmax.f32 %v422, %v494
  %v496 = vrot.slane %v495, 2
  %v497 = vmax.f32 %v495, %v496
  %v498 = vrot.slane %v497, 1
  %v499 = vmax.f32 %v497, %v498
  %v500 = vrot.slane %v423, 4
  %v501 = vmax.f32 %v423, %v500
  %v502 = vrot.slane %v501, 2
  %v503 = vmax.f32 %v501, %v502
  %v504 = vrot.slane %v503, 1
  %v505 = vmax.f32 %v503, %v504
  %v506 = vrot.slane %v424, 4
  %v507 = vmax.f32 %v424, %v506
  %v508 = vrot.slane %v507, 2
  %v509 = vmax.f32 %v507, %v508
  %v510 = vrot.slane %v509, 1
  %v511 = vmax.f32 %v509, %v510
  %v512 = vrot.slane %v425, 4
  %v513 = vmax.f32 %v425, %v512
  %v514 = vrot.slane %v513, 2
  %v515 = vmax.f32 %v513, %v514
  %v516 = vrot.slane %v515, 1
  %v517 = vmax.f32 %v515, %v516
  %v518 = vrot.slane %v426, 4
  %v519 = vmax.f32 %v426, %v518
  %v520 = vrot.slane %v519, 2
  %v521 = vmax.f32 %v519, %v520
  %v522 = vrot.slane %v521, 1
  %v523 = vmax.f32 %v521, %v522
  %v524 = vrot.slane %v427, 4
  %v525 = vmax.f32 %v427, %v524
  %v526 = vrot.slane %v525, 2
  %v527 = vmax.f32 %v525, %v526
  %v528 = vrot.slane %v527, 1
  %v529 = vmax.f32 %v527, %v528
  %v530 = vrot.slane %v428, 4
  %v531 = vmax.f32 %v428, %v530
  %v532 = vrot.slane %v531, 2
  %v533 = vmax.f32 %v531, %v532
  %v534 = vrot.slane %v533, 1
  %v535 = vmax.f32 %v533, %v534
  %v536 = vrot.slane %v429, 4
  %v537 = vmax.f32 %v429, %v536
  %v538 = vrot.slane %v537, 2
  %v539 = vmax.f32 %v537, %v538
  %v540 = vrot.slane %v539, 1
  %v541 = vmax.f32 %v539, %v540
  %v542 = vrot.slane %v430, 4
  %v543 = vmax.f32 %v430, %v542
  %v544 = vrot.slane %v543, 2
  %v545 = vmax.f32 %v543, %v544
  %v546 = vrot.slane %v545, 1
  %v547 = vmax.f32 %v545, %v546
  %v548 = vrot.slane %v431, 4
  %v549 = vmax.f32 %v431, %v548
  %v550 = vrot.slane %v549, 2
  %v551 = vmax.f32 %v549, %v550
  %v552 = vrot.slane %v551, 1
  %v553 = vmax.f32 %v551, %v552
  %v554 = vrot.slane %v432, 4
  %v555 = vmax.f32 %v432, %v554
  %v556 = vrot.slane %v555, 2
  %v557 = vmax.f32 %v555, %v556
  %v558 = vrot.slane %v557, 1
  %v559 = vmax.f32 %v557, %v558
  %v560 = vrot.slane %v433, 4
  %v561 = vmax.f32 %v433, %v560
  %v562 = vrot.slane %v561, 2
  %v563 = vmax.f32 %v561, %v562
  %v564 = vrot.slane %v563, 1
  %v565 = vmax.f32 %v563, %v564
  %v566 = vrot.slane %v434, 4
  %v567 = vmax.f32 %v434, %v566
  %v568 = vrot.slane %v567, 2
  %v569 = vmax.f32 %v567, %v568
  %v570 = vrot.slane %v569, 1
  %v571 = vmax.f32 %v569, %v570
  %v572 = vrot.slane %v435, 4
  %v573 = vmax.f32 %v435, %v572
  %v574 = vrot.slane %v573, 2
  %v575 = vmax.f32 %v573, %v574
  %v576 = vrot.slane %v575, 1
  %v577 = vmax.f32 %v575, %v576
  %v578 = vrot.slane %v436, 4
  %v579 = vmax.f32 %v436, %v578
  %v580 = vrot.slane %v579, 2
  %v581 = vmax.f32 %v579, %v580
  %v582 = vrot.slane %v581, 1
  %v583 = vmax.f32 %v581, %v582
  %v584 = vrot.slane %v437, 4
  %v585 = vmax.f32 %v437, %v584
  %v586 = vrot.slane %v585, 2
  %v587 = vmax.f32 %v585, %v586
  %v588 = vrot.slane %v587, 1
  %v589 = vmax.f32 %v587, %v588
  %v590 = vrot.slane %v438, 4
  %v591 = vmax.f32 %v438, %v590
  %v592 = vrot.slane %v591, 2
  %v593 = vmax.f32 %v591, %v592
  %v594 = vrot.slane %v593, 1
  %v595 = vmax.f32 %v593, %v594
  %v596 = vrot.slane %v439, 4
  %v597 = vmax.f32 %v439, %v596
  %v598 = vrot.slane %v597, 2
  %v599 = vmax.f32 %v597, %v598
  %v600 = vrot.slane %v599, 1
  %v601 = vmax.f32 %v599, %v600
  %v602 = vrot.slane %v440, 4
  %v603 = vmax.f32 %v440, %v602
  %v604 = vrot.slane %v603, 2
  %v605 = vmax.f32 %v603, %v604
  %v606 = vrot.slane %v605, 1
  %v607 = vmax.f32 %v605, %v606
  %v608 = vrot.slane %v441, 4
  %v609 = vmax.f32 %v441, %v608
  %v610 = vrot.slane %v609, 2
  %v611 = vmax.f32 %v609, %v610
  %v612 = vrot.slane %v611, 1
  %v613 = vmax.f32 %v611, %v612
  %v614 = vrot.slane %v442, 4
  %v615 = vmax.f32 %v442, %v614
  %v616 = vrot.slane %v615, 2
  %v617 = vmax.f32 %v615, %v616
  %v618 = vrot.slane %v617, 1
  %v619 = vmax.f32 %v617, %v618
  %v620 = vrot.slane %v443, 4
  %v621 = vmax.f32 %v443, %v620
  %v622 = vrot.slane %v621, 2
  %v623 = vmax.f32 %v621, %v622
  %v624 = vrot.slane %v623, 1
  %v625 = vmax.f32 %v623, %v624
  %v626 = vrot.slane %v444, 4
  %v627 = vmax.f32 %v444, %v626
  %v628 = vrot.slane %v627, 2
  %v629 = vmax.f32 %v627, %v628
  %v630 = vrot.slane %v629, 1
  %v631 = vmax.f32 %v629, %v630
  %v632 = vrot.slane %v445, 4
  %v633 = vmax.f32 %v445, %v632
  %v634 = vrot.slane %v633, 2
  %v635 = vmax.f32 %v633, %v634
  %v636 = vrot.slane %v635, 1
  %v637 = vmax.f32 %v635, %v636
  %v638 = vmax.f32 %v451, 0.0
  %v639 = vmax.f32 %v457, 0.0
  %v640 = vmax.f32 %v463, 0.0
  %v641 = vmax.f32 %v469, 0.0
  %v642 = vmax.f32 %v475, 0.0
  %v643 = vmax.f32 %v481, 0.0
  %v644 = vmax.f32 %v487, 0.0
  %v645 = vmax.f32 %v493, 0.0
  %v646 = vmax.f32 %v499, 0.0
  %v647 = vmax.f32 %v505, 0.0
  %v648 = vmax.f32 %v511, 0.0
  %v649 = vmax.f32 %v517, 0.0
  %v650 = vmax.f32 %v523, 0.0
  %v651 = vmax.f32 %v529, 0.0
  %v652 = vmax.f32 %v535, 0.0
  %v653 = vmax.f32 %v541, 0.0
  %v654 = vmax.f32 %v547, 0.0
  %v655 = vmax.f32 %v553, 0.0
  %v656 = vmax.f32 %v559, 0.0
  %v657 = vmax.f32 %v565, 0.0
  %v658 = vmax.f32 %v571, 0.0
  %v659 = vmax.f32 %v577, 0.0
  %v660 = vmax.f32 %v583, 0.0
  %v661 = vmax.f32 %v589, 0.0
  %v662 = vmax.f32 %v595, 0.0
  %v663 = vmax.f32 %v601, 0.0
  %v664 = vmax.f32 %v607, 0.0
  %v665 = vmax.f32 %v613, 0.0
  %v666 = vmax.f32 %v619, 0.0
  %v667 = vmax.f32 %v625, 0.0
  %v668 = vmax.f32 %v631, 0.0
  %v669 = vmax.f32 %v637, 0.0
  %v670 = vlaneseq
  %v671 = vshrl.u32 %v670, 7
  %v672 = vadd.s32 %v671, 8
  %673 = vset.pattern.permute.xlu0 %v672
  %674 = vperm.xlu0 %673, %v190
  %v675 = vpop.permute.xlu0 %674
  %v676 = vlaneseq
  %v677 = vshrl.u32 %v676, 7
  %v678 = vadd.s32 %v677, 8
  %679 = vset.pattern.permute.xlu0 %v678
  %680 = vperm.xlu0 %679, %v197
  %v681 = vpop.permute.xlu0 %680
  %v682 = vlaneseq
  %v683 = vshrl.u32 %v682, 7
  %v684 = vadd.s32 %v683, 8
  %685 = vset.pattern.permute.xlu0 %v684
  %686 = vperm.xlu0 %685, %v204
  %v687 = vpop.permute.xlu0 %686
  %v688 = vlaneseq
  %v689 = vshrl.u32 %v688, 7
  %v690 = vadd.s32 %v689, 8
  %691 = vset.pattern.permute.xlu0 %v690
  %692 = vperm.xlu0 %691, %v211
  %v693 = vpop.permute.xlu0 %692
  %v694 = vlaneseq
  %v695 = vshrl.u32 %v694, 7
  %v696 = vadd.s32 %v695, 8
  %697 = vset.pattern.permute.xlu0 %v696
  %698 = vperm.xlu0 %697, %v218
  %v699 = vpop.permute.xlu0 %698
  %v700 = vlaneseq
  %v701 = vshrl.u32 %v700, 7
  %v702 = vadd.s32 %v701, 8
  %703 = vset.pattern.permute.xlu0 %v702
  %704 = vperm.xlu0 %703, %v225
  %v705 = vpop.permute.xlu0 %704
  %v706 = vlaneseq
  %v707 = vshrl.u32 %v706, 7
  %v708 = vadd.s32 %v707, 8
  %709 = vset.pattern.permute.xlu0 %v708
  %710 = vperm.xlu0 %709, %v232
  %v711 = vpop.permute.xlu0 %710
  %v712 = vlaneseq
  %v713 = vshrl.u32 %v712, 7
  %v714 = vadd.s32 %v713, 8
  %715 = vset.pattern.permute.xlu0 %v714
  %716 = vperm.xlu0 %715, %v239
  %v717 = vpop.permute.xlu0 %716
  %v718 = vlaneseq
  %v719 = vshrl.u32 %v718, 7
  %v720 = vadd.s32 %v719, 8
  %721 = vset.pattern.permute.xlu0 %v720
  %722 = vperm.xlu0 %721, %v246
  %v723 = vpop.permute.xlu0 %722
  %v724 = vlaneseq
  %v725 = vshrl.u32 %v724, 7
  %v726 = vadd.s32 %v725, 8
  %727 = vset.pattern.permute.xlu0 %v726
  %728 = vperm.xlu0 %727, %v253
  %v729 = vpop.permute.xlu0 %728
  %v730 = vlaneseq
  %v731 = vshrl.u32 %v730, 7
  %v732 = vadd.s32 %v731, 8
  %733 = vset.pattern.permute.xlu0 %v732
  %734 = vperm.xlu0 %733, %v260
  %v735 = vpop.permute.xlu0 %734
  %v736 = vlaneseq
  %v737 = vshrl.u32 %v736, 7
  %v738 = vadd.s32 %v737, 8
  %739 = vset.pattern.permute.xlu0 %v738
  %740 = vperm.xlu0 %739, %v267
  %v741 = vpop.permute.xlu0 %740
  %v742 = vlaneseq
  %v743 = vshrl.u32 %v742, 7
  %v744 = vadd.s32 %v743, 8
  %745 = vset.pattern.permute.xlu0 %v744
  %746 = vperm.xlu0 %745, %v274
  %v747 = vpop.permute.xlu0 %746
  %v748 = vlaneseq
  %v749 = vshrl.u32 %v748, 7
  %v750 = vadd.s32 %v749, 8
  %751 = vset.pattern.permute.xlu0 %v750
  %752 = vperm.xlu0 %751, %v281
  %v753 = vpop.permute.xlu0 %752
  %v754 = vlaneseq
  %v755 = vshrl.u32 %v754, 7
  %v756 = vadd.s32 %v755, 8
  %757 = vset.pattern.permute.xlu0 %v756
  %758 = vperm.xlu0 %757, %v288
  %v759 = vpop.permute.xlu0 %758
  %v760 = vlaneseq
  %v761 = vshrl.u32 %v760, 7
  %v762 = vadd.s32 %v761, 8
  %763 = vset.pattern.permute.xlu0 %v762
  %764 = vperm.xlu0 %763, %v295
  %v765 = vpop.permute.xlu0 %764
  %v766 = vlaneseq
  %v767 = vshrl.u32 %v766, 7
  %v768 = vadd.s32 %v767, 8
  %769 = vset.pattern.permute.xlu0 %v768
  %770 = vperm.xlu0 %769, %v302
  %v771 = vpop.permute.xlu0 %770
  %v772 = vlaneseq
  %v773 = vshrl.u32 %v772, 7
  %v774 = vadd.s32 %v773, 8
  %775 = vset.pattern.permute.xlu0 %v774
  %776 = vperm.xlu0 %775, %v309
  %v777 = vpop.permute.xlu0 %776
  %v778 = vlaneseq
  %v779 = vshrl.u32 %v778, 7
  %v780 = vadd.s32 %v779, 8
  %781 = vset.pattern.permute.xlu0 %v780
  %782 = vperm.xlu0 %781, %v316
  %v783 = vpop.permute.xlu0 %782
  %v784 = vlaneseq
  %v785 = vshrl.u32 %v784, 7
  %v786 = vadd.s32 %v785, 8
  %787 = vset.pattern.permute.xlu0 %v786
  %788 = vperm.xlu0 %787, %v323
  %v789 = vpop.permute.xlu0 %788
  %v790 = vlaneseq
  %v791 = vshrl.u32 %v790, 7
  %v792 = vadd.s32 %v791, 8
  %793 = vset.pattern.permute.xlu0 %v792
  %794 = vperm.xlu0 %793, %v330
  %v795 = vpop.permute.xlu0 %794
  %v796 = vlaneseq
  %v797 = vshrl.u32 %v796, 7
  %v798 = vadd.s32 %v797, 8
  %799 = vset.pattern.permute.xlu0 %v798
  %800 = vperm.xlu0 %799, %v337
  %v801 = vpop.permute.xlu0 %800
  %v802 = vlaneseq
  %v803 = vshrl.u32 %v802, 7
  %v804 = vadd.s32 %v803, 8
  %805 = vset.pattern.permute.xlu0 %v804
  %806 = vperm.xlu0 %805, %v344
  %v807 = vpop.permute.xlu0 %806
  %v808 = vlaneseq
  %v809 = vshrl.u32 %v808, 7
  %v810 = vadd.s32 %v809, 8
  %811 = vset.pattern.permute.xlu0 %v810
  %812 = vperm.xlu0 %811, %v351
  %v813 = vpop.permute.xlu0 %812
  %v814 = vlaneseq
  %v815 = vshrl.u32 %v814, 7
  %v816 = vadd.s32 %v815, 8
  %817 = vset.pattern.permute.xlu0 %v816
  %818 = vperm.xlu0 %817, %v358
  %v819 = vpop.permute.xlu0 %818
  %v820 = vlaneseq
  %v821 = vshrl.u32 %v820, 7
  %v822 = vadd.s32 %v821, 8
  %823 = vset.pattern.permute.xlu0 %v822
  %824 = vperm.xlu0 %823, %v365
  %v825 = vpop.permute.xlu0 %824
  %v826 = vlaneseq
  %v827 = vshrl.u32 %v826, 7
  %v828 = vadd.s32 %v827, 8
  %829 = vset.pattern.permute.xlu0 %v828
  %830 = vperm.xlu0 %829, %v372
  %v831 = vpop.permute.xlu0 %830
  %v832 = vlaneseq
  %v833 = vshrl.u32 %v832, 7
  %v834 = vadd.s32 %v833, 8
  %835 = vset.pattern.permute.xlu0 %v834
  %836 = vperm.xlu0 %835, %v379
  %v837 = vpop.permute.xlu0 %836
  %v838 = vlaneseq
  %v839 = vshrl.u32 %v838, 7
  %v840 = vadd.s32 %v839, 8
  %841 = vset.pattern.permute.xlu0 %v840
  %842 = vperm.xlu0 %841, %v386
  %v843 = vpop.permute.xlu0 %842
  %v844 = vlaneseq
  %v845 = vshrl.u32 %v844, 7
  %v846 = vadd.s32 %v845, 8
  %847 = vset.pattern.permute.xlu0 %v846
  %848 = vperm.xlu0 %847, %v393
  %v849 = vpop.permute.xlu0 %848
  %v850 = vlaneseq
  %v851 = vshrl.u32 %v850, 7
  %v852 = vadd.s32 %v851, 8
  %853 = vset.pattern.permute.xlu0 %v852
  %854 = vperm.xlu0 %853, %v400
  %v855 = vpop.permute.xlu0 %854
  %v856 = vlaneseq
  %v857 = vshrl.u32 %v856, 7
  %v858 = vadd.s32 %v857, 8
  %859 = vset.pattern.permute.xlu0 %v858
  %860 = vperm.xlu0 %859, %v407
  %v861 = vpop.permute.xlu0 %860
  %v862 = vmul.f32 %v675, %v187
  %v863 = vmul.f32 %v681, %v187
  %v864 = vmul.f32 %v687, %v187
  %v865 = vmul.f32 %v693, %v187
  %v866 = vmul.f32 %v699, %v187
  %v867 = vmul.f32 %v705, %v187
  %v868 = vmul.f32 %v711, %v187
  %v869 = vmul.f32 %v717, %v187
  %v870 = vmul.f32 %v723, %v187
  %v871 = vmul.f32 %v729, %v187
  %v872 = vmul.f32 %v735, %v187
  %v873 = vmul.f32 %v741, %v187
  %v874 = vmul.f32 %v747, %v187
  %v875 = vmul.f32 %v753, %v187
  %v876 = vmul.f32 %v759, %v187
  %v877 = vmul.f32 %v765, %v187
  %v878 = vmul.f32 %v771, %v187
  %v879 = vmul.f32 %v777, %v187
  %v880 = vmul.f32 %v783, %v187
  %v881 = vmul.f32 %v789, %v187
  %v882 = vmul.f32 %v795, %v187
  %v883 = vmul.f32 %v801, %v187
  %v884 = vmul.f32 %v807, %v187
  %v885 = vmul.f32 %v813, %v187
  %v886 = vmul.f32 %v819, %v187
  %v887 = vmul.f32 %v825, %v187
  %v888 = vmul.f32 %v831, %v187
  %v889 = vmul.f32 %v837, %v187
  %v890 = vmul.f32 %v843, %v187
  %v891 = vmul.f32 %v849, %v187
  %v892 = vmul.f32 %v855, %v187
  %v893 = vmul.f32 %v861, %v187
  %v894 = vrot.slane %v862, 4
  %v895 = vmax.f32 %v862, %v894
  %v896 = vrot.slane %v895, 2
  %v897 = vmax.f32 %v895, %v896
  %v898 = vrot.slane %v897, 1
  %v899 = vmax.f32 %v897, %v898
  %v900 = vrot.slane %v863, 4
  %v901 = vmax.f32 %v863, %v900
  %v902 = vrot.slane %v901, 2
  %v903 = vmax.f32 %v901, %v902
  %v904 = vrot.slane %v903, 1
  %v905 = vmax.f32 %v903, %v904
  %v906 = vrot.slane %v864, 4
  %v907 = vmax.f32 %v864, %v906
  %v908 = vrot.slane %v907, 2
  %v909 = vmax.f32 %v907, %v908
  %v910 = vrot.slane %v909, 1
  %v911 = vmax.f32 %v909, %v910
  %v912 = vrot.slane %v865, 4
  %v913 = vmax.f32 %v865, %v912
  %v914 = vrot.slane %v913, 2
  %v915 = vmax.f32 %v913, %v914
  %v916 = vrot.slane %v915, 1
  %v917 = vmax.f32 %v915, %v916
  %v918 = vrot.slane %v866, 4
  %v919 = vmax.f32 %v866, %v918
  %v920 = vrot.slane %v919, 2
  %v921 = vmax.f32 %v919, %v920
  %v922 = vrot.slane %v921, 1
  %v923 = vmax.f32 %v921, %v922
  %v924 = vrot.slane %v867, 4
  %v925 = vmax.f32 %v867, %v924
  %v926 = vrot.slane %v925, 2
  %v927 = vmax.f32 %v925, %v926
  %v928 = vrot.slane %v927, 1
  %v929 = vmax.f32 %v927, %v928
  %v930 = vrot.slane %v868, 4
  %v931 = vmax.f32 %v868, %v930
  %v932 = vrot.slane %v931, 2
  %v933 = vmax.f32 %v931, %v932
  %v934 = vrot.slane %v933, 1
  %v935 = vmax.f32 %v933, %v934
  %v936 = vrot.slane %v869, 4
  %v937 = vmax.f32 %v869, %v936
  %v938 = vrot.slane %v937, 2
  %v939 = vmax.f32 %v937, %v938
  %v940 = vrot.slane %v939, 1
  %v941 = vmax.f32 %v939, %v940
  %v942 = vrot.slane %v870, 4
  %v943 = vmax.f32 %v870, %v942
  %v944 = vrot.slane %v943, 2
  %v945 = vmax.f32 %v943, %v944
  %v946 = vrot.slane %v945, 1
  %v947 = vmax.f32 %v945, %v946
  %v948 = vrot.slane %v871, 4
  %v949 = vmax.f32 %v871, %v948
  %v950 = vrot.slane %v949, 2
  %v951 = vmax.f32 %v949, %v950
  %v952 = vrot.slane %v951, 1
  %v953 = vmax.f32 %v951, %v952
  %v954 = vrot.slane %v872, 4
  %v955 = vmax.f32 %v872, %v954
  %v956 = vrot.slane %v955, 2
  %v957 = vmax.f32 %v955, %v956
  %v958 = vrot.slane %v957, 1
  %v959 = vmax.f32 %v957, %v958
  %v960 = vrot.slane %v873, 4
  %v961 = vmax.f32 %v873, %v960
  %v962 = vrot.slane %v961, 2
  %v963 = vmax.f32 %v961, %v962
  %v964 = vrot.slane %v963, 1
  %v965 = vmax.f32 %v963, %v964
  %v966 = vrot.slane %v874, 4
  %v967 = vmax.f32 %v874, %v966
  %v968 = vrot.slane %v967, 2
  %v969 = vmax.f32 %v967, %v968
  %v970 = vrot.slane %v969, 1
  %v971 = vmax.f32 %v969, %v970
  %v972 = vrot.slane %v875, 4
  %v973 = vmax.f32 %v875, %v972
  %v974 = vrot.slane %v973, 2
  %v975 = vmax.f32 %v973, %v974
  %v976 = vrot.slane %v975, 1
  %v977 = vmax.f32 %v975, %v976
  %v978 = vrot.slane %v876, 4
  %v979 = vmax.f32 %v876, %v978
  %v980 = vrot.slane %v979, 2
  %v981 = vmax.f32 %v979, %v980
  %v982 = vrot.slane %v981, 1
  %v983 = vmax.f32 %v981, %v982
  %v984 = vrot.slane %v877, 4
  %v985 = vmax.f32 %v877, %v984
  %v986 = vrot.slane %v985, 2
  %v987 = vmax.f32 %v985, %v986
  %v988 = vrot.slane %v987, 1
  %v989 = vmax.f32 %v987, %v988
  %v990 = vrot.slane %v878, 4
  %v991 = vmax.f32 %v878, %v990
  %v992 = vrot.slane %v991, 2
  %v993 = vmax.f32 %v991, %v992
  %v994 = vrot.slane %v993, 1
  %v995 = vmax.f32 %v993, %v994
  %v996 = vrot.slane %v879, 4
  %v997 = vmax.f32 %v879, %v996
  %v998 = vrot.slane %v997, 2
  %v999 = vmax.f32 %v997, %v998
  %v1000 = vrot.slane %v999, 1
  %v1001 = vmax.f32 %v999, %v1000
  %v1002 = vrot.slane %v880, 4
  %v1003 = vmax.f32 %v880, %v1002
  %v1004 = vrot.slane %v1003, 2
  %v1005 = vmax.f32 %v1003, %v1004
  %v1006 = vrot.slane %v1005, 1
  %v1007 = vmax.f32 %v1005, %v1006
  %v1008 = vrot.slane %v881, 4
  %v1009 = vmax.f32 %v881, %v1008
  %v1010 = vrot.slane %v1009, 2
  %v1011 = vmax.f32 %v1009, %v1010
  %v1012 = vrot.slane %v1011, 1
  %v1013 = vmax.f32 %v1011, %v1012
  %v1014 = vrot.slane %v882, 4
  %v1015 = vmax.f32 %v882, %v1014
  %v1016 = vrot.slane %v1015, 2
  %v1017 = vmax.f32 %v1015, %v1016
  %v1018 = vrot.slane %v1017, 1
  %v1019 = vmax.f32 %v1017, %v1018
  %v1020 = vrot.slane %v883, 4
  %v1021 = vmax.f32 %v883, %v1020
  %v1022 = vrot.slane %v1021, 2
  %v1023 = vmax.f32 %v1021, %v1022
  %v1024 = vrot.slane %v1023, 1
  %v1025 = vmax.f32 %v1023, %v1024
  %v1026 = vrot.slane %v884, 4
  %v1027 = vmax.f32 %v884, %v1026
  %v1028 = vrot.slane %v1027, 2
  %v1029 = vmax.f32 %v1027, %v1028
  %v1030 = vrot.slane %v1029, 1
  %v1031 = vmax.f32 %v1029, %v1030
  %v1032 = vrot.slane %v885, 4
  %v1033 = vmax.f32 %v885, %v1032
  %v1034 = vrot.slane %v1033, 2
  %v1035 = vmax.f32 %v1033, %v1034
  %v1036 = vrot.slane %v1035, 1
  %v1037 = vmax.f32 %v1035, %v1036
  %v1038 = vrot.slane %v886, 4
  %v1039 = vmax.f32 %v886, %v1038
  %v1040 = vrot.slane %v1039, 2
  %v1041 = vmax.f32 %v1039, %v1040
  %v1042 = vrot.slane %v1041, 1
  %v1043 = vmax.f32 %v1041, %v1042
  %v1044 = vrot.slane %v887, 4
  %v1045 = vmax.f32 %v887, %v1044
  %v1046 = vrot.slane %v1045, 2
  %v1047 = vmax.f32 %v1045, %v1046
  %v1048 = vrot.slane %v1047, 1
  %v1049 = vmax.f32 %v1047, %v1048
  %v1050 = vrot.slane %v888, 4
  %v1051 = vmax.f32 %v888, %v1050
  %v1052 = vrot.slane %v1051, 2
  %v1053 = vmax.f32 %v1051, %v1052
  %v1054 = vrot.slane %v1053, 1
  %v1055 = vmax.f32 %v1053, %v1054
  %v1056 = vrot.slane %v889, 4
  %v1057 = vmax.f32 %v889, %v1056
  %v1058 = vrot.slane %v1057, 2
  %v1059 = vmax.f32 %v1057, %v1058
  %v1060 = vrot.slane %v1059, 1
  %v1061 = vmax.f32 %v1059, %v1060
  %v1062 = vrot.slane %v890, 4
  %v1063 = vmax.f32 %v890, %v1062
  %v1064 = vrot.slane %v1063, 2
  %v1065 = vmax.f32 %v1063, %v1064
  %v1066 = vrot.slane %v1065, 1
  %v1067 = vmax.f32 %v1065, %v1066
  %v1068 = vrot.slane %v891, 4
  %v1069 = vmax.f32 %v891, %v1068
  %v1070 = vrot.slane %v1069, 2
  %v1071 = vmax.f32 %v1069, %v1070
  %v1072 = vrot.slane %v1071, 1
  %v1073 = vmax.f32 %v1071, %v1072
  %v1074 = vrot.slane %v892, 4
  %v1075 = vmax.f32 %v892, %v1074
  %v1076 = vrot.slane %v1075, 2
  %v1077 = vmax.f32 %v1075, %v1076
  %v1078 = vrot.slane %v1077, 1
  %v1079 = vmax.f32 %v1077, %v1078
  %v1080 = vrot.slane %v893, 4
  %v1081 = vmax.f32 %v893, %v1080
  %v1082 = vrot.slane %v1081, 2
  %v1083 = vmax.f32 %v1081, %v1082
  %v1084 = vrot.slane %v1083, 1
  %v1085 = vmax.f32 %v1083, %v1084
  %v1086 = vmax.f32 %v638, %v899
  %v1087 = vmax.f32 %v639, %v905
  %v1088 = vmax.f32 %v640, %v911
  %v1089 = vmax.f32 %v641, %v917
  %v1090 = vmax.f32 %v642, %v923
  %v1091 = vmax.f32 %v643, %v929
  %v1092 = vmax.f32 %v644, %v935
  %v1093 = vmax.f32 %v645, %v941
  %v1094 = vmax.f32 %v646, %v947
  %v1095 = vmax.f32 %v647, %v953
  %v1096 = vmax.f32 %v648, %v959
  %v1097 = vmax.f32 %v649, %v965
  %v1098 = vmax.f32 %v650, %v971
  %v1099 = vmax.f32 %v651, %v977
  %v1100 = vmax.f32 %v652, %v983
  %v1101 = vmax.f32 %v653, %v989
  %v1102 = vmax.f32 %v654, %v995
  %v1103 = vmax.f32 %v655, %v1001
  %v1104 = vmax.f32 %v656, %v1007
  %v1105 = vmax.f32 %v657, %v1013
  %v1106 = vmax.f32 %v658, %v1019
  %v1107 = vmax.f32 %v659, %v1025
  %v1108 = vmax.f32 %v660, %v1031
  %v1109 = vmax.f32 %v661, %v1037
  %v1110 = vmax.f32 %v662, %v1043
  %v1111 = vmax.f32 %v663, %v1049
  %v1112 = vmax.f32 %v664, %v1055
  %v1113 = vmax.f32 %v665, %v1061
  %v1114 = vmax.f32 %v666, %v1067
  %v1115 = vmax.f32 %v667, %v1073
  %v1116 = vmax.f32 %v668, %v1079
  %v1117 = vmax.f32 %v669, %v1085
  %v1118 = vlaneseq
  %v1119 = vshrl.u32 %v1118, 7
  %v1120 = vadd.s32 %v1119, 16
  %1121 = vset.pattern.permute.xlu0 %v1120
  %1122 = vperm.xlu0 %1121, %v190
  %v1123 = vpop.permute.xlu0 %1122
  %v1124 = vlaneseq
  %v1125 = vshrl.u32 %v1124, 7
  %v1126 = vadd.s32 %v1125, 16
  %1127 = vset.pattern.permute.xlu0 %v1126
  %1128 = vperm.xlu0 %1127, %v197
  %v1129 = vpop.permute.xlu0 %1128
  %v1130 = vlaneseq
  %v1131 = vshrl.u32 %v1130, 7
  %v1132 = vadd.s32 %v1131, 16
  %1133 = vset.pattern.permute.xlu0 %v1132
  %1134 = vperm.xlu0 %1133, %v204
  %v1135 = vpop.permute.xlu0 %1134
  %v1136 = vlaneseq
  %v1137 = vshrl.u32 %v1136, 7
  %v1138 = vadd.s32 %v1137, 16
  %1139 = vset.pattern.permute.xlu0 %v1138
  %1140 = vperm.xlu0 %1139, %v211
  %v1141 = vpop.permute.xlu0 %1140
  %v1142 = vlaneseq
  %v1143 = vshrl.u32 %v1142, 7
  %v1144 = vadd.s32 %v1143, 16
  %1145 = vset.pattern.permute.xlu0 %v1144
  %1146 = vperm.xlu0 %1145, %v218
  %v1147 = vpop.permute.xlu0 %1146
  %v1148 = vlaneseq
  %v1149 = vshrl.u32 %v1148, 7
  %v1150 = vadd.s32 %v1149, 16
  %1151 = vset.pattern.permute.xlu0 %v1150
  %1152 = vperm.xlu0 %1151, %v225
  %v1153 = vpop.permute.xlu0 %1152
  %v1154 = vlaneseq
  %v1155 = vshrl.u32 %v1154, 7
  %v1156 = vadd.s32 %v1155, 16
  %1157 = vset.pattern.permute.xlu0 %v1156
  %1158 = vperm.xlu0 %1157, %v232
  %v1159 = vpop.permute.xlu0 %1158
  %v1160 = vlaneseq
  %v1161 = vshrl.u32 %v1160, 7
  %v1162 = vadd.s32 %v1161, 16
  %1163 = vset.pattern.permute.xlu0 %v1162
  %1164 = vperm.xlu0 %1163, %v239
  %v1165 = vpop.permute.xlu0 %1164
  %v1166 = vlaneseq
  %v1167 = vshrl.u32 %v1166, 7
  %v1168 = vadd.s32 %v1167, 16
  %1169 = vset.pattern.permute.xlu0 %v1168
  %1170 = vperm.xlu0 %1169, %v246
  %v1171 = vpop.permute.xlu0 %1170
  %v1172 = vlaneseq
  %v1173 = vshrl.u32 %v1172, 7
  %v1174 = vadd.s32 %v1173, 16
  %1175 = vset.pattern.permute.xlu0 %v1174
  %1176 = vperm.xlu0 %1175, %v253
  %v1177 = vpop.permute.xlu0 %1176
  %v1178 = vlaneseq
  %v1179 = vshrl.u32 %v1178, 7
  %v1180 = vadd.s32 %v1179, 16
  %1181 = vset.pattern.permute.xlu0 %v1180
  %1182 = vperm.xlu0 %1181, %v260
  %v1183 = vpop.permute.xlu0 %1182
  %v1184 = vlaneseq
  %v1185 = vshrl.u32 %v1184, 7
  %v1186 = vadd.s32 %v1185, 16
  %1187 = vset.pattern.permute.xlu0 %v1186
  %1188 = vperm.xlu0 %1187, %v267
  %v1189 = vpop.permute.xlu0 %1188
  %v1190 = vlaneseq
  %v1191 = vshrl.u32 %v1190, 7
  %v1192 = vadd.s32 %v1191, 16
  %1193 = vset.pattern.permute.xlu0 %v1192
  %1194 = vperm.xlu0 %1193, %v274
  %v1195 = vpop.permute.xlu0 %1194
  %v1196 = vlaneseq
  %v1197 = vshrl.u32 %v1196, 7
  %v1198 = vadd.s32 %v1197, 16
  %1199 = vset.pattern.permute.xlu0 %v1198
  %1200 = vperm.xlu0 %1199, %v281
  %v1201 = vpop.permute.xlu0 %1200
  %v1202 = vlaneseq
  %v1203 = vshrl.u32 %v1202, 7
  %v1204 = vadd.s32 %v1203, 16
  %1205 = vset.pattern.permute.xlu0 %v1204
  %1206 = vperm.xlu0 %1205, %v288
  %v1207 = vpop.permute.xlu0 %1206
  %v1208 = vlaneseq
  %v1209 = vshrl.u32 %v1208, 7
  %v1210 = vadd.s32 %v1209, 16
  %1211 = vset.pattern.permute.xlu0 %v1210
  %1212 = vperm.xlu0 %1211, %v295
  %v1213 = vpop.permute.xlu0 %1212
  %v1214 = vlaneseq
  %v1215 = vshrl.u32 %v1214, 7
  %v1216 = vadd.s32 %v1215, 16
  %1217 = vset.pattern.permute.xlu0 %v1216
  %1218 = vperm.xlu0 %1217, %v302
  %v1219 = vpop.permute.xlu0 %1218
  %v1220 = vlaneseq
  %v1221 = vshrl.u32 %v1220, 7
  %v1222 = vadd.s32 %v1221, 16
  %1223 = vset.pattern.permute.xlu0 %v1222
  %1224 = vperm.xlu0 %1223, %v309
  %v1225 = vpop.permute.xlu0 %1224
  %v1226 = vlaneseq
  %v1227 = vshrl.u32 %v1226, 7
  %v1228 = vadd.s32 %v1227, 16
  %1229 = vset.pattern.permute.xlu0 %v1228
  %1230 = vperm.xlu0 %1229, %v316
  %v1231 = vpop.permute.xlu0 %1230
  %v1232 = vlaneseq
  %v1233 = vshrl.u32 %v1232, 7
  %v1234 = vadd.s32 %v1233, 16
  %1235 = vset.pattern.permute.xlu0 %v1234
  %1236 = vperm.xlu0 %1235, %v323
  %v1237 = vpop.permute.xlu0 %1236
  %v1238 = vlaneseq
  %v1239 = vshrl.u32 %v1238, 7
  %v1240 = vadd.s32 %v1239, 16
  %1241 = vset.pattern.permute.xlu0 %v1240
  %1242 = vperm.xlu0 %1241, %v330
  %v1243 = vpop.permute.xlu0 %1242
  %v1244 = vlaneseq
  %v1245 = vshrl.u32 %v1244, 7
  %v1246 = vadd.s32 %v1245, 16
  %1247 = vset.pattern.permute.xlu0 %v1246
  %1248 = vperm.xlu0 %1247, %v337
  %v1249 = vpop.permute.xlu0 %1248
  %v1250 = vlaneseq
  %v1251 = vshrl.u32 %v1250, 7
  %v1252 = vadd.s32 %v1251, 16
  %1253 = vset.pattern.permute.xlu0 %v1252
  %1254 = vperm.xlu0 %1253, %v344
  %v1255 = vpop.permute.xlu0 %1254
  %v1256 = vlaneseq
  %v1257 = vshrl.u32 %v1256, 7
  %v1258 = vadd.s32 %v1257, 16
  %1259 = vset.pattern.permute.xlu0 %v1258
  %1260 = vperm.xlu0 %1259, %v351
  %v1261 = vpop.permute.xlu0 %1260
  %v1262 = vlaneseq
  %v1263 = vshrl.u32 %v1262, 7
  %v1264 = vadd.s32 %v1263, 16
  %1265 = vset.pattern.permute.xlu0 %v1264
  %1266 = vperm.xlu0 %1265, %v358
  %v1267 = vpop.permute.xlu0 %1266
  %v1268 = vlaneseq
  %v1269 = vshrl.u32 %v1268, 7
  %v1270 = vadd.s32 %v1269, 16
  %1271 = vset.pattern.permute.xlu0 %v1270
  %1272 = vperm.xlu0 %1271, %v365
  %v1273 = vpop.permute.xlu0 %1272
  %v1274 = vlaneseq
  %v1275 = vshrl.u32 %v1274, 7
  %v1276 = vadd.s32 %v1275, 16
  %1277 = vset.pattern.permute.xlu0 %v1276
  %1278 = vperm.xlu0 %1277, %v372
  %v1279 = vpop.permute.xlu0 %1278
  %v1280 = vlaneseq
  %v1281 = vshrl.u32 %v1280, 7
  %v1282 = vadd.s32 %v1281, 16
  %1283 = vset.pattern.permute.xlu0 %v1282
  %1284 = vperm.xlu0 %1283, %v379
  %v1285 = vpop.permute.xlu0 %1284
  %v1286 = vlaneseq
  %v1287 = vshrl.u32 %v1286, 7
  %v1288 = vadd.s32 %v1287, 16
  %1289 = vset.pattern.permute.xlu0 %v1288
  %1290 = vperm.xlu0 %1289, %v386
  %v1291 = vpop.permute.xlu0 %1290
  %v1292 = vlaneseq
  %v1293 = vshrl.u32 %v1292, 7
  %v1294 = vadd.s32 %v1293, 16
  %1295 = vset.pattern.permute.xlu0 %v1294
  %1296 = vperm.xlu0 %1295, %v393
  %v1297 = vpop.permute.xlu0 %1296
  %v1298 = vlaneseq
  %v1299 = vshrl.u32 %v1298, 7
  %v1300 = vadd.s32 %v1299, 16
  %1301 = vset.pattern.permute.xlu0 %v1300
  %1302 = vperm.xlu0 %1301, %v400
  %v1303 = vpop.permute.xlu0 %1302
  %v1304 = vlaneseq
  %v1305 = vshrl.u32 %v1304, 7
  %v1306 = vadd.s32 %v1305, 16
  %1307 = vset.pattern.permute.xlu0 %v1306
  %1308 = vperm.xlu0 %1307, %v407
  %v1309 = vpop.permute.xlu0 %1308
  %v1310 = vmul.f32 %v1123, %v188
  %v1311 = vmul.f32 %v1129, %v188
  %v1312 = vmul.f32 %v1135, %v188
  %v1313 = vmul.f32 %v1141, %v188
  %v1314 = vmul.f32 %v1147, %v188
  %v1315 = vmul.f32 %v1153, %v188
  %v1316 = vmul.f32 %v1159, %v188
  %v1317 = vmul.f32 %v1165, %v188
  %v1318 = vmul.f32 %v1171, %v188
  %v1319 = vmul.f32 %v1177, %v188
  %v1320 = vmul.f32 %v1183, %v188
  %v1321 = vmul.f32 %v1189, %v188
  %v1322 = vmul.f32 %v1195, %v188
  %v1323 = vmul.f32 %v1201, %v188
  %v1324 = vmul.f32 %v1207, %v188
  %v1325 = vmul.f32 %v1213, %v188
  %v1326 = vmul.f32 %v1219, %v188
  %v1327 = vmul.f32 %v1225, %v188
  %v1328 = vmul.f32 %v1231, %v188
  %v1329 = vmul.f32 %v1237, %v188
  %v1330 = vmul.f32 %v1243, %v188
  %v1331 = vmul.f32 %v1249, %v188
  %v1332 = vmul.f32 %v1255, %v188
  %v1333 = vmul.f32 %v1261, %v188
  %v1334 = vmul.f32 %v1267, %v188
  %v1335 = vmul.f32 %v1273, %v188
  %v1336 = vmul.f32 %v1279, %v188
  %v1337 = vmul.f32 %v1285, %v188
  %v1338 = vmul.f32 %v1291, %v188
  %v1339 = vmul.f32 %v1297, %v188
  %v1340 = vmul.f32 %v1303, %v188
  %v1341 = vmul.f32 %v1309, %v188
  %v1342 = vrot.slane %v1310, 4
  %v1343 = vmax.f32 %v1310, %v1342
  %v1344 = vrot.slane %v1343, 2
  %v1345 = vmax.f32 %v1343, %v1344
  %v1346 = vrot.slane %v1345, 1
  %v1347 = vmax.f32 %v1345, %v1346
  %v1348 = vrot.slane %v1311, 4
  %v1349 = vmax.f32 %v1311, %v1348
  %v1350 = vrot.slane %v1349, 2
  %v1351 = vmax.f32 %v1349, %v1350
  %v1352 = vrot.slane %v1351, 1
  %v1353 = vmax.f32 %v1351, %v1352
  %v1354 = vrot.slane %v1312, 4
  %v1355 = vmax.f32 %v1312, %v1354
  %v1356 = vrot.slane %v1355, 2
  %v1357 = vmax.f32 %v1355, %v1356
  %v1358 = vrot.slane %v1357, 1
  %v1359 = vmax.f32 %v1357, %v1358
  %v1360 = vrot.slane %v1313, 4
  %v1361 = vmax.f32 %v1313, %v1360
  %v1362 = vrot.slane %v1361, 2
  %v1363 = vmax.f32 %v1361, %v1362
  %v1364 = vrot.slane %v1363, 1
  %v1365 = vmax.f32 %v1363, %v1364
  %v1366 = vrot.slane %v1314, 4
  %v1367 = vmax.f32 %v1314, %v1366
  %v1368 = vrot.slane %v1367, 2
  %v1369 = vmax.f32 %v1367, %v1368
  %v1370 = vrot.slane %v1369, 1
  %v1371 = vmax.f32 %v1369, %v1370
  %v1372 = vrot.slane %v1315, 4
  %v1373 = vmax.f32 %v1315, %v1372
  %v1374 = vrot.slane %v1373, 2
  %v1375 = vmax.f32 %v1373, %v1374
  %v1376 = vrot.slane %v1375, 1
  %v1377 = vmax.f32 %v1375, %v1376
  %v1378 = vrot.slane %v1316, 4
  %v1379 = vmax.f32 %v1316, %v1378
  %v1380 = vrot.slane %v1379, 2
  %v1381 = vmax.f32 %v1379, %v1380
  %v1382 = vrot.slane %v1381, 1
  %v1383 = vmax.f32 %v1381, %v1382
  %v1384 = vrot.slane %v1317, 4
  %v1385 = vmax.f32 %v1317, %v1384
  %v1386 = vrot.slane %v1385, 2
  %v1387 = vmax.f32 %v1385, %v1386
  %v1388 = vrot.slane %v1387, 1
  %v1389 = vmax.f32 %v1387, %v1388
  %v1390 = vrot.slane %v1318, 4
  %v1391 = vmax.f32 %v1318, %v1390
  %v1392 = vrot.slane %v1391, 2
  %v1393 = vmax.f32 %v1391, %v1392
  %v1394 = vrot.slane %v1393, 1
  %v1395 = vmax.f32 %v1393, %v1394
  %v1396 = vrot.slane %v1319, 4
  %v1397 = vmax.f32 %v1319, %v1396
  %v1398 = vrot.slane %v1397, 2
  %v1399 = vmax.f32 %v1397, %v1398
  %v1400 = vrot.slane %v1399, 1
  %v1401 = vmax.f32 %v1399, %v1400
  %v1402 = vrot.slane %v1320, 4
  %v1403 = vmax.f32 %v1320, %v1402
  %v1404 = vrot.slane %v1403, 2
  %v1405 = vmax.f32 %v1403, %v1404
  %v1406 = vrot.slane %v1405, 1
  %v1407 = vmax.f32 %v1405, %v1406
  %v1408 = vrot.slane %v1321, 4
  %v1409 = vmax.f32 %v1321, %v1408
  %v1410 = vrot.slane %v1409, 2
  %v1411 = vmax.f32 %v1409, %v1410
  %v1412 = vrot.slane %v1411, 1
  %v1413 = vmax.f32 %v1411, %v1412
  %v1414 = vrot.slane %v1322, 4
  %v1415 = vmax.f32 %v1322, %v1414
  %v1416 = vrot.slane %v1415, 2
  %v1417 = vmax.f32 %v1415, %v1416
  %v1418 = vrot.slane %v1417, 1
  %v1419 = vmax.f32 %v1417, %v1418
  %v1420 = vrot.slane %v1323, 4
  %v1421 = vmax.f32 %v1323, %v1420
  %v1422 = vrot.slane %v1421, 2
  %v1423 = vmax.f32 %v1421, %v1422
  %v1424 = vrot.slane %v1423, 1
  %v1425 = vmax.f32 %v1423, %v1424
  %v1426 = vrot.slane %v1324, 4
  %v1427 = vmax.f32 %v1324, %v1426
  %v1428 = vrot.slane %v1427, 2
  %v1429 = vmax.f32 %v1427, %v1428
  %v1430 = vrot.slane %v1429, 1
  %v1431 = vmax.f32 %v1429, %v1430
  %v1432 = vrot.slane %v1325, 4
  %v1433 = vmax.f32 %v1325, %v1432
  %v1434 = vrot.slane %v1433, 2
  %v1435 = vmax.f32 %v1433, %v1434
  %v1436 = vrot.slane %v1435, 1
  %v1437 = vmax.f32 %v1435, %v1436
  %v1438 = vrot.slane %v1326, 4
  %v1439 = vmax.f32 %v1326, %v1438
  %v1440 = vrot.slane %v1439, 2
  %v1441 = vmax.f32 %v1439, %v1440
  %v1442 = vrot.slane %v1441, 1
  %v1443 = vmax.f32 %v1441, %v1442
  %v1444 = vrot.slane %v1327, 4
  %v1445 = vmax.f32 %v1327, %v1444
  %v1446 = vrot.slane %v1445, 2
  %v1447 = vmax.f32 %v1445, %v1446
  %v1448 = vrot.slane %v1447, 1
  %v1449 = vmax.f32 %v1447, %v1448
  %v1450 = vrot.slane %v1328, 4
  %v1451 = vmax.f32 %v1328, %v1450
  %v1452 = vrot.slane %v1451, 2
  %v1453 = vmax.f32 %v1451, %v1452
  %v1454 = vrot.slane %v1453, 1
  %v1455 = vmax.f32 %v1453, %v1454
  %v1456 = vrot.slane %v1329, 4
  %v1457 = vmax.f32 %v1329, %v1456
  %v1458 = vrot.slane %v1457, 2
  %v1459 = vmax.f32 %v1457, %v1458
  %v1460 = vrot.slane %v1459, 1
  %v1461 = vmax.f32 %v1459, %v1460
  %v1462 = vrot.slane %v1330, 4
  %v1463 = vmax.f32 %v1330, %v1462
  %v1464 = vrot.slane %v1463, 2
  %v1465 = vmax.f32 %v1463, %v1464
  %v1466 = vrot.slane %v1465, 1
  %v1467 = vmax.f32 %v1465, %v1466
  %v1468 = vrot.slane %v1331, 4
  %v1469 = vmax.f32 %v1331, %v1468
  %v1470 = vrot.slane %v1469, 2
  %v1471 = vmax.f32 %v1469, %v1470
  %v1472 = vrot.slane %v1471, 1
  %v1473 = vmax.f32 %v1471, %v1472
  %v1474 = vrot.slane %v1332, 4
  %v1475 = vmax.f32 %v1332, %v1474
  %v1476 = vrot.slane %v1475, 2
  %v1477 = vmax.f32 %v1475, %v1476
  %v1478 = vrot.slane %v1477, 1
  %v1479 = vmax.f32 %v1477, %v1478
  %v1480 = vrot.slane %v1333, 4
  %v1481 = vmax.f32 %v1333, %v1480
  %v1482 = vrot.slane %v1481, 2
  %v1483 = vmax.f32 %v1481, %v1482
  %v1484 = vrot.slane %v1483, 1
  %v1485 = vmax.f32 %v1483, %v1484
  %v1486 = vrot.slane %v1334, 4
  %v1487 = vmax.f32 %v1334, %v1486
  %v1488 = vrot.slane %v1487, 2
  %v1489 = vmax.f32 %v1487, %v1488
  %v1490 = vrot.slane %v1489, 1
  %v1491 = vmax.f32 %v1489, %v1490
  %v1492 = vrot.slane %v1335, 4
  %v1493 = vmax.f32 %v1335, %v1492
  %v1494 = vrot.slane %v1493, 2
  %v1495 = vmax.f32 %v1493, %v1494
  %v1496 = vrot.slane %v1495, 1
  %v1497 = vmax.f32 %v1495, %v1496
  %v1498 = vrot.slane %v1336, 4
  %v1499 = vmax.f32 %v1336, %v1498
  %v1500 = vrot.slane %v1499, 2
  %v1501 = vmax.f32 %v1499, %v1500
  %v1502 = vrot.slane %v1501, 1
  %v1503 = vmax.f32 %v1501, %v1502
  %v1504 = vrot.slane %v1337, 4
  %v1505 = vmax.f32 %v1337, %v1504
  %v1506 = vrot.slane %v1505, 2
  %v1507 = vmax.f32 %v1505, %v1506
  %v1508 = vrot.slane %v1507, 1
  %v1509 = vmax.f32 %v1507, %v1508
  %v1510 = vrot.slane %v1338, 4
  %v1511 = vmax.f32 %v1338, %v1510
  %v1512 = vrot.slane %v1511, 2
  %v1513 = vmax.f32 %v1511, %v1512
  %v1514 = vrot.slane %v1513, 1
  %v1515 = vmax.f32 %v1513, %v1514
  %v1516 = vrot.slane %v1339, 4
  %v1517 = vmax.f32 %v1339, %v1516
  %v1518 = vrot.slane %v1517, 2
  %v1519 = vmax.f32 %v1517, %v1518
  %v1520 = vrot.slane %v1519, 1
  %v1521 = vmax.f32 %v1519, %v1520
  %v1522 = vrot.slane %v1340, 4
  %v1523 = vmax.f32 %v1340, %v1522
  %v1524 = vrot.slane %v1523, 2
  %v1525 = vmax.f32 %v1523, %v1524
  %v1526 = vrot.slane %v1525, 1
  %v1527 = vmax.f32 %v1525, %v1526
  %v1528 = vrot.slane %v1341, 4
  %v1529 = vmax.f32 %v1341, %v1528
  %v1530 = vrot.slane %v1529, 2
  %v1531 = vmax.f32 %v1529, %v1530
  %v1532 = vrot.slane %v1531, 1
  %v1533 = vmax.f32 %v1531, %v1532
  %v1534 = vmax.f32 %v1086, %v1347
  %v1535 = vmax.f32 %v1087, %v1353
  %v1536 = vmax.f32 %v1088, %v1359
  %v1537 = vmax.f32 %v1089, %v1365
  %v1538 = vmax.f32 %v1090, %v1371
  %v1539 = vmax.f32 %v1091, %v1377
  %v1540 = vmax.f32 %v1092, %v1383
  %v1541 = vmax.f32 %v1093, %v1389
  %v1542 = vmax.f32 %v1094, %v1395
  %v1543 = vmax.f32 %v1095, %v1401
  %v1544 = vmax.f32 %v1096, %v1407
  %v1545 = vmax.f32 %v1097, %v1413
  %v1546 = vmax.f32 %v1098, %v1419
  %v1547 = vmax.f32 %v1099, %v1425
  %v1548 = vmax.f32 %v1100, %v1431
  %v1549 = vmax.f32 %v1101, %v1437
  %v1550 = vmax.f32 %v1102, %v1443
  %v1551 = vmax.f32 %v1103, %v1449
  %v1552 = vmax.f32 %v1104, %v1455
  %v1553 = vmax.f32 %v1105, %v1461
  %v1554 = vmax.f32 %v1106, %v1467
  %v1555 = vmax.f32 %v1107, %v1473
  %v1556 = vmax.f32 %v1108, %v1479
  %v1557 = vmax.f32 %v1109, %v1485
  %v1558 = vmax.f32 %v1110, %v1491
  %v1559 = vmax.f32 %v1111, %v1497
  %v1560 = vmax.f32 %v1112, %v1503
  %v1561 = vmax.f32 %v1113, %v1509
  %v1562 = vmax.f32 %v1114, %v1515
  %v1563 = vmax.f32 %v1115, %v1521
  %v1564 = vmax.f32 %v1116, %v1527
  %v1565 = vmax.f32 %v1117, %v1533
  %v1566 = vlaneseq
  %v1567 = vshrl.u32 %v1566, 7
  %v1568 = vadd.s32 %v1567, 24
  %1569 = vset.pattern.permute.xlu0 %v1568
  %1570 = vperm.xlu0 %1569, %v190
  %v1571 = vpop.permute.xlu0 %1570
  %v1572 = vlaneseq
  %v1573 = vshrl.u32 %v1572, 7
  %v1574 = vadd.s32 %v1573, 24
  %1575 = vset.pattern.permute.xlu0 %v1574
  %1576 = vperm.xlu0 %1575, %v197
  %v1577 = vpop.permute.xlu0 %1576
  %v1578 = vlaneseq
  %v1579 = vshrl.u32 %v1578, 7
  %v1580 = vadd.s32 %v1579, 24
  %1581 = vset.pattern.permute.xlu0 %v1580
  %1582 = vperm.xlu0 %1581, %v204
  %v1583 = vpop.permute.xlu0 %1582
  %v1584 = vlaneseq
  %v1585 = vshrl.u32 %v1584, 7
  %v1586 = vadd.s32 %v1585, 24
  %1587 = vset.pattern.permute.xlu0 %v1586
  %1588 = vperm.xlu0 %1587, %v211
  %v1589 = vpop.permute.xlu0 %1588
  %v1590 = vlaneseq
  %v1591 = vshrl.u32 %v1590, 7
  %v1592 = vadd.s32 %v1591, 24
  %1593 = vset.pattern.permute.xlu0 %v1592
  %1594 = vperm.xlu0 %1593, %v218
  %v1595 = vpop.permute.xlu0 %1594
  %v1596 = vlaneseq
  %v1597 = vshrl.u32 %v1596, 7
  %v1598 = vadd.s32 %v1597, 24
  %1599 = vset.pattern.permute.xlu0 %v1598
  %1600 = vperm.xlu0 %1599, %v225
  %v1601 = vpop.permute.xlu0 %1600
  %v1602 = vlaneseq
  %v1603 = vshrl.u32 %v1602, 7
  %v1604 = vadd.s32 %v1603, 24
  %1605 = vset.pattern.permute.xlu0 %v1604
  %1606 = vperm.xlu0 %1605, %v232
  %v1607 = vpop.permute.xlu0 %1606
  %v1608 = vlaneseq
  %v1609 = vshrl.u32 %v1608, 7
  %v1610 = vadd.s32 %v1609, 24
  %1611 = vset.pattern.permute.xlu0 %v1610
  %1612 = vperm.xlu0 %1611, %v239
  %v1613 = vpop.permute.xlu0 %1612
  %v1614 = vlaneseq
  %v1615 = vshrl.u32 %v1614, 7
  %v1616 = vadd.s32 %v1615, 24
  %1617 = vset.pattern.permute.xlu0 %v1616
  %1618 = vperm.xlu0 %1617, %v246
  %v1619 = vpop.permute.xlu0 %1618
  %v1620 = vlaneseq
  %v1621 = vshrl.u32 %v1620, 7
  %v1622 = vadd.s32 %v1621, 24
  %1623 = vset.pattern.permute.xlu0 %v1622
  %1624 = vperm.xlu0 %1623, %v253
  %v1625 = vpop.permute.xlu0 %1624
  %v1626 = vlaneseq
  %v1627 = vshrl.u32 %v1626, 7
  %v1628 = vadd.s32 %v1627, 24
  %1629 = vset.pattern.permute.xlu0 %v1628
  %1630 = vperm.xlu0 %1629, %v260
  %v1631 = vpop.permute.xlu0 %1630
  %v1632 = vlaneseq
  %v1633 = vshrl.u32 %v1632, 7
  %v1634 = vadd.s32 %v1633, 24
  %1635 = vset.pattern.permute.xlu0 %v1634
  %1636 = vperm.xlu0 %1635, %v267
  %v1637 = vpop.permute.xlu0 %1636
  %v1638 = vlaneseq
  %v1639 = vshrl.u32 %v1638, 7
  %v1640 = vadd.s32 %v1639, 24
  %1641 = vset.pattern.permute.xlu0 %v1640
  %1642 = vperm.xlu0 %1641, %v274
  %v1643 = vpop.permute.xlu0 %1642
  %v1644 = vlaneseq
  %v1645 = vshrl.u32 %v1644, 7
  %v1646 = vadd.s32 %v1645, 24
  %1647 = vset.pattern.permute.xlu0 %v1646
  %1648 = vperm.xlu0 %1647, %v281
  %v1649 = vpop.permute.xlu0 %1648
  %v1650 = vlaneseq
  %v1651 = vshrl.u32 %v1650, 7
  %v1652 = vadd.s32 %v1651, 24
  %1653 = vset.pattern.permute.xlu0 %v1652
  %1654 = vperm.xlu0 %1653, %v288
  %v1655 = vpop.permute.xlu0 %1654
  %v1656 = vlaneseq
  %v1657 = vshrl.u32 %v1656, 7
  %v1658 = vadd.s32 %v1657, 24
  %1659 = vset.pattern.permute.xlu0 %v1658
  %1660 = vperm.xlu0 %1659, %v295
  %v1661 = vpop.permute.xlu0 %1660
  %v1662 = vlaneseq
  %v1663 = vshrl.u32 %v1662, 7
  %v1664 = vadd.s32 %v1663, 24
  %1665 = vset.pattern.permute.xlu0 %v1664
  %1666 = vperm.xlu0 %1665, %v302
  %v1667 = vpop.permute.xlu0 %1666
  %v1668 = vlaneseq
  %v1669 = vshrl.u32 %v1668, 7
  %v1670 = vadd.s32 %v1669, 24
  %1671 = vset.pattern.permute.xlu0 %v1670
  %1672 = vperm.xlu0 %1671, %v309
  %v1673 = vpop.permute.xlu0 %1672
  %v1674 = vlaneseq
  %v1675 = vshrl.u32 %v1674, 7
  %v1676 = vadd.s32 %v1675, 24
  %1677 = vset.pattern.permute.xlu0 %v1676
  %1678 = vperm.xlu0 %1677, %v316
  %v1679 = vpop.permute.xlu0 %1678
  %v1680 = vlaneseq
  %v1681 = vshrl.u32 %v1680, 7
  %v1682 = vadd.s32 %v1681, 24
  %1683 = vset.pattern.permute.xlu0 %v1682
  %1684 = vperm.xlu0 %1683, %v323
  %v1685 = vpop.permute.xlu0 %1684
  %v1686 = vlaneseq
  %v1687 = vshrl.u32 %v1686, 7
  %v1688 = vadd.s32 %v1687, 24
  %1689 = vset.pattern.permute.xlu0 %v1688
  %1690 = vperm.xlu0 %1689, %v330
  %v1691 = vpop.permute.xlu0 %1690
  %v1692 = vlaneseq
  %v1693 = vshrl.u32 %v1692, 7
  %v1694 = vadd.s32 %v1693, 24
  %1695 = vset.pattern.permute.xlu0 %v1694
  %1696 = vperm.xlu0 %1695, %v337
  %v1697 = vpop.permute.xlu0 %1696
  %v1698 = vlaneseq
  %v1699 = vshrl.u32 %v1698, 7
  %v1700 = vadd.s32 %v1699, 24
  %1701 = vset.pattern.permute.xlu0 %v1700
  %1702 = vperm.xlu0 %1701, %v344
  %v1703 = vpop.permute.xlu0 %1702
  %v1704 = vlaneseq
  %v1705 = vshrl.u32 %v1704, 7
  %v1706 = vadd.s32 %v1705, 24
  %1707 = vset.pattern.permute.xlu0 %v1706
  %1708 = vperm.xlu0 %1707, %v351
  %v1709 = vpop.permute.xlu0 %1708
  %v1710 = vlaneseq
  %v1711 = vshrl.u32 %v1710, 7
  %v1712 = vadd.s32 %v1711, 24
  %1713 = vset.pattern.permute.xlu0 %v1712
  %1714 = vperm.xlu0 %1713, %v358
  %v1715 = vpop.permute.xlu0 %1714
  %v1716 = vlaneseq
  %v1717 = vshrl.u32 %v1716, 7
  %v1718 = vadd.s32 %v1717, 24
  %1719 = vset.pattern.permute.xlu0 %v1718
  %1720 = vperm.xlu0 %1719, %v365
  %v1721 = vpop.permute.xlu0 %1720
  %v1722 = vlaneseq
  %v1723 = vshrl.u32 %v1722, 7
  %v1724 = vadd.s32 %v1723, 24
  %1725 = vset.pattern.permute.xlu0 %v1724
  %1726 = vperm.xlu0 %1725, %v372
  %v1727 = vpop.permute.xlu0 %1726
  %v1728 = vlaneseq
  %v1729 = vshrl.u32 %v1728, 7
  %v1730 = vadd.s32 %v1729, 24
  %1731 = vset.pattern.permute.xlu0 %v1730
  %1732 = vperm.xlu0 %1731, %v379
  %v1733 = vpop.permute.xlu0 %1732
  %v1734 = vlaneseq
  %v1735 = vshrl.u32 %v1734, 7
  %v1736 = vadd.s32 %v1735, 24
  %1737 = vset.pattern.permute.xlu0 %v1736
  %1738 = vperm.xlu0 %1737, %v386
  %v1739 = vpop.permute.xlu0 %1738
  %v1740 = vlaneseq
  %v1741 = vshrl.u32 %v1740, 7
  %v1742 = vadd.s32 %v1741, 24
  %1743 = vset.pattern.permute.xlu0 %v1742
  %1744 = vperm.xlu0 %1743, %v393
  %v1745 = vpop.permute.xlu0 %1744
  %v1746 = vlaneseq
  %v1747 = vshrl.u32 %v1746, 7
  %v1748 = vadd.s32 %v1747, 24
  %1749 = vset.pattern.permute.xlu0 %v1748
  %1750 = vperm.xlu0 %1749, %v400
  %v1751 = vpop.permute.xlu0 %1750
  %v1752 = vlaneseq
  %v1753 = vshrl.u32 %v1752, 7
  %v1754 = vadd.s32 %v1753, 24
  %1755 = vset.pattern.permute.xlu0 %v1754
  %1756 = vperm.xlu0 %1755, %v407
  %v1757 = vpop.permute.xlu0 %1756
  %v1758 = vmul.f32 %v1571, %v189
  %v1759 = vmul.f32 %v1577, %v189
  %v1760 = vmul.f32 %v1583, %v189
  %v1761 = vmul.f32 %v1589, %v189
  %v1762 = vmul.f32 %v1595, %v189
  %v1763 = vmul.f32 %v1601, %v189
  %v1764 = vmul.f32 %v1607, %v189
  %v1765 = vmul.f32 %v1613, %v189
  %v1766 = vmul.f32 %v1619, %v189
  %v1767 = vmul.f32 %v1625, %v189
  %v1768 = vmul.f32 %v1631, %v189
  %v1769 = vmul.f32 %v1637, %v189
  %v1770 = vmul.f32 %v1643, %v189
  %v1771 = vmul.f32 %v1649, %v189
  %v1772 = vmul.f32 %v1655, %v189
  %v1773 = vmul.f32 %v1661, %v189
  %v1774 = vmul.f32 %v1667, %v189
  %v1775 = vmul.f32 %v1673, %v189
  %v1776 = vmul.f32 %v1679, %v189
  %v1777 = vmul.f32 %v1685, %v189
  %v1778 = vmul.f32 %v1691, %v189
  %v1779 = vmul.f32 %v1697, %v189
  %v1780 = vmul.f32 %v1703, %v189
  %v1781 = vmul.f32 %v1709, %v189
  %v1782 = vmul.f32 %v1715, %v189
  %v1783 = vmul.f32 %v1721, %v189
  %v1784 = vmul.f32 %v1727, %v189
  %v1785 = vmul.f32 %v1733, %v189
  %v1786 = vmul.f32 %v1739, %v189
  %v1787 = vmul.f32 %v1745, %v189
  %v1788 = vmul.f32 %v1751, %v189
  %v1789 = vmul.f32 %v1757, %v189
  %v1790 = vrot.slane %v1758, 4
  %v1791 = vmax.f32 %v1758, %v1790
  %v1792 = vrot.slane %v1791, 2
  %v1793 = vmax.f32 %v1791, %v1792
  %v1794 = vrot.slane %v1793, 1
  %v1795 = vmax.f32 %v1793, %v1794
  %v1796 = vrot.slane %v1759, 4
  %v1797 = vmax.f32 %v1759, %v1796
  %v1798 = vrot.slane %v1797, 2
  %v1799 = vmax.f32 %v1797, %v1798
  %v1800 = vrot.slane %v1799, 1
  %v1801 = vmax.f32 %v1799, %v1800
  %v1802 = vrot.slane %v1760, 4
  %v1803 = vmax.f32 %v1760, %v1802
  %v1804 = vrot.slane %v1803, 2
  %v1805 = vmax.f32 %v1803, %v1804
  %v1806 = vrot.slane %v1805, 1
  %v1807 = vmax.f32 %v1805, %v1806
  %v1808 = vrot.slane %v1761, 4
  %v1809 = vmax.f32 %v1761, %v1808
  %v1810 = vrot.slane %v1809, 2
  %v1811 = vmax.f32 %v1809, %v1810
  %v1812 = vrot.slane %v1811, 1
  %v1813 = vmax.f32 %v1811, %v1812
  %v1814 = vrot.slane %v1762, 4
  %v1815 = vmax.f32 %v1762, %v1814
  %v1816 = vrot.slane %v1815, 2
  %v1817 = vmax.f32 %v1815, %v1816
  %v1818 = vrot.slane %v1817, 1
  %v1819 = vmax.f32 %v1817, %v1818
  %v1820 = vrot.slane %v1763, 4
  %v1821 = vmax.f32 %v1763, %v1820
  %v1822 = vrot.slane %v1821, 2
  %v1823 = vmax.f32 %v1821, %v1822
  %v1824 = vrot.slane %v1823, 1
  %v1825 = vmax.f32 %v1823, %v1824
  %v1826 = vrot.slane %v1764, 4
  %v1827 = vmax.f32 %v1764, %v1826
  %v1828 = vrot.slane %v1827, 2
  %v1829 = vmax.f32 %v1827, %v1828
  %v1830 = vrot.slane %v1829, 1
  %v1831 = vmax.f32 %v1829, %v1830
  %v1832 = vrot.slane %v1765, 4
  %v1833 = vmax.f32 %v1765, %v1832
  %v1834 = vrot.slane %v1833, 2
  %v1835 = vmax.f32 %v1833, %v1834
  %v1836 = vrot.slane %v1835, 1
  %v1837 = vmax.f32 %v1835, %v1836
  %v1838 = vrot.slane %v1766, 4
  %v1839 = vmax.f32 %v1766, %v1838
  %v1840 = vrot.slane %v1839, 2
  %v1841 = vmax.f32 %v1839, %v1840
  %v1842 = vrot.slane %v1841, 1
  %v1843 = vmax.f32 %v1841, %v1842
  %v1844 = vrot.slane %v1767, 4
  %v1845 = vmax.f32 %v1767, %v1844
  %v1846 = vrot.slane %v1845, 2
  %v1847 = vmax.f32 %v1845, %v1846
  %v1848 = vrot.slane %v1847, 1
  %v1849 = vmax.f32 %v1847, %v1848
  %v1850 = vrot.slane %v1768, 4
  %v1851 = vmax.f32 %v1768, %v1850
  %v1852 = vrot.slane %v1851, 2
  %v1853 = vmax.f32 %v1851, %v1852
  %v1854 = vrot.slane %v1853, 1
  %v1855 = vmax.f32 %v1853, %v1854
  %v1856 = vrot.slane %v1769, 4
  %v1857 = vmax.f32 %v1769, %v1856
  %v1858 = vrot.slane %v1857, 2
  %v1859 = vmax.f32 %v1857, %v1858
  %v1860 = vrot.slane %v1859, 1
  %v1861 = vmax.f32 %v1859, %v1860
  %v1862 = vrot.slane %v1770, 4
  %v1863 = vmax.f32 %v1770, %v1862
  %v1864 = vrot.slane %v1863, 2
  %v1865 = vmax.f32 %v1863, %v1864
  %v1866 = vrot.slane %v1865, 1
  %v1867 = vmax.f32 %v1865, %v1866
  %v1868 = vrot.slane %v1771, 4
  %v1869 = vmax.f32 %v1771, %v1868
  %v1870 = vrot.slane %v1869, 2
  %v1871 = vmax.f32 %v1869, %v1870
  %v1872 = vrot.slane %v1871, 1
  %v1873 = vmax.f32 %v1871, %v1872
  %v1874 = vrot.slane %v1772, 4
  %v1875 = vmax.f32 %v1772, %v1874
  %v1876 = vrot.slane %v1875, 2
  %v1877 = vmax.f32 %v1875, %v1876
  %v1878 = vrot.slane %v1877, 1
  %v1879 = vmax.f32 %v1877, %v1878
  %v1880 = vrot.slane %v1773, 4
  %v1881 = vmax.f32 %v1773, %v1880
  %v1882 = vrot.slane %v1881, 2
  %v1883 = vmax.f32 %v1881, %v1882
  %v1884 = vrot.slane %v1883, 1
  %v1885 = vmax.f32 %v1883, %v1884
  %v1886 = vrot.slane %v1774, 4
  %v1887 = vmax.f32 %v1774, %v1886
  %v1888 = vrot.slane %v1887, 2
  %v1889 = vmax.f32 %v1887, %v1888
  %v1890 = vrot.slane %v1889, 1
  %v1891 = vmax.f32 %v1889, %v1890
  %v1892 = vrot.slane %v1775, 4
  %v1893 = vmax.f32 %v1775, %v1892
  %v1894 = vrot.slane %v1893, 2
  %v1895 = vmax.f32 %v1893, %v1894
  %v1896 = vrot.slane %v1895, 1
  %v1897 = vmax.f32 %v1895, %v1896
  %v1898 = vrot.slane %v1776, 4
  %v1899 = vmax.f32 %v1776, %v1898
  %v1900 = vrot.slane %v1899, 2
  %v1901 = vmax.f32 %v1899, %v1900
  %v1902 = vrot.slane %v1901, 1
  %v1903 = vmax.f32 %v1901, %v1902
  %v1904 = vrot.slane %v1777, 4
  %v1905 = vmax.f32 %v1777, %v1904
  %v1906 = vrot.slane %v1905, 2
  %v1907 = vmax.f32 %v1905, %v1906
  %v1908 = vrot.slane %v1907, 1
  %v1909 = vmax.f32 %v1907, %v1908
  %v1910 = vrot.slane %v1778, 4
  %v1911 = vmax.f32 %v1778, %v1910
  %v1912 = vrot.slane %v1911, 2
  %v1913 = vmax.f32 %v1911, %v1912
  %v1914 = vrot.slane %v1913, 1
  %v1915 = vmax.f32 %v1913, %v1914
  %v1916 = vrot.slane %v1779, 4
  %v1917 = vmax.f32 %v1779, %v1916
  %v1918 = vrot.slane %v1917, 2
  %v1919 = vmax.f32 %v1917, %v1918
  %v1920 = vrot.slane %v1919, 1
  %v1921 = vmax.f32 %v1919, %v1920
  %v1922 = vrot.slane %v1780, 4
  %v1923 = vmax.f32 %v1780, %v1922
  %v1924 = vrot.slane %v1923, 2
  %v1925 = vmax.f32 %v1923, %v1924
  %v1926 = vrot.slane %v1925, 1
  %v1927 = vmax.f32 %v1925, %v1926
  %v1928 = vrot.slane %v1781, 4
  %v1929 = vmax.f32 %v1781, %v1928
  %v1930 = vrot.slane %v1929, 2
  %v1931 = vmax.f32 %v1929, %v1930
  %v1932 = vrot.slane %v1931, 1
  %v1933 = vmax.f32 %v1931, %v1932
  %v1934 = vrot.slane %v1782, 4
  %v1935 = vmax.f32 %v1782, %v1934
  %v1936 = vrot.slane %v1935, 2
  %v1937 = vmax.f32 %v1935, %v1936
  %v1938 = vrot.slane %v1937, 1
  %v1939 = vmax.f32 %v1937, %v1938
  %v1940 = vrot.slane %v1783, 4
  %v1941 = vmax.f32 %v1783, %v1940
  %v1942 = vrot.slane %v1941, 2
  %v1943 = vmax.f32 %v1941, %v1942
  %v1944 = vrot.slane %v1943, 1
  %v1945 = vmax.f32 %v1943, %v1944
  %v1946 = vrot.slane %v1784, 4
  %v1947 = vmax.f32 %v1784, %v1946
  %v1948 = vrot.slane %v1947, 2
  %v1949 = vmax.f32 %v1947, %v1948
  %v1950 = vrot.slane %v1949, 1
  %v1951 = vmax.f32 %v1949, %v1950
  %v1952 = vrot.slane %v1785, 4
  %v1953 = vmax.f32 %v1785, %v1952
  %v1954 = vrot.slane %v1953, 2
  %v1955 = vmax.f32 %v1953, %v1954
  %v1956 = vrot.slane %v1955, 1
  %v1957 = vmax.f32 %v1955, %v1956
  %v1958 = vrot.slane %v1786, 4
  %v1959 = vmax.f32 %v1786, %v1958
  %v1960 = vrot.slane %v1959, 2
  %v1961 = vmax.f32 %v1959, %v1960
  %v1962 = vrot.slane %v1961, 1
  %v1963 = vmax.f32 %v1961, %v1962
  %v1964 = vrot.slane %v1787, 4
  %v1965 = vmax.f32 %v1787, %v1964
  %v1966 = vrot.slane %v1965, 2
  %v1967 = vmax.f32 %v1965, %v1966
  %v1968 = vrot.slane %v1967, 1
  %v1969 = vmax.f32 %v1967, %v1968
  %v1970 = vrot.slane %v1788, 4
  %v1971 = vmax.f32 %v1788, %v1970
  %v1972 = vrot.slane %v1971, 2
  %v1973 = vmax.f32 %v1971, %v1972
  %v1974 = vrot.slane %v1973, 1
  %v1975 = vmax.f32 %v1973, %v1974
  %v1976 = vrot.slane %v1789, 4
  %v1977 = vmax.f32 %v1789, %v1976
  %v1978 = vrot.slane %v1977, 2
  %v1979 = vmax.f32 %v1977, %v1978
  %v1980 = vrot.slane %v1979, 1
  %v1981 = vmax.f32 %v1979, %v1980
  %v1982 = vmax.f32 %v1534, %v1795
  %v1983 = vmax.f32 %v1535, %v1801
  %v1984 = vmax.f32 %v1536, %v1807
  %v1985 = vmax.f32 %v1537, %v1813
  %v1986 = vmax.f32 %v1538, %v1819
  %v1987 = vmax.f32 %v1539, %v1825
  %v1988 = vmax.f32 %v1540, %v1831
  %v1989 = vmax.f32 %v1541, %v1837
  %v1990 = vmax.f32 %v1542, %v1843
  %v1991 = vmax.f32 %v1543, %v1849
  %v1992 = vmax.f32 %v1544, %v1855
  %v1993 = vmax.f32 %v1545, %v1861
  %v1994 = vmax.f32 %v1546, %v1867
  %v1995 = vmax.f32 %v1547, %v1873
  %v1996 = vmax.f32 %v1548, %v1879
  %v1997 = vmax.f32 %v1549, %v1885
  %v1998 = vmax.f32 %v1550, %v1891
  %v1999 = vmax.f32 %v1551, %v1897
  %v2000 = vmax.f32 %v1552, %v1903
  %v2001 = vmax.f32 %v1553, %v1909
  %v2002 = vmax.f32 %v1554, %v1915
  %v2003 = vmax.f32 %v1555, %v1921
  %v2004 = vmax.f32 %v1556, %v1927
  %v2005 = vmax.f32 %v1557, %v1933
  %v2006 = vmax.f32 %v1558, %v1939
  %v2007 = vmax.f32 %v1559, %v1945
  %v2008 = vmax.f32 %v1560, %v1951
  %v2009 = vmax.f32 %v1561, %v1957
  %v2010 = vmax.f32 %v1562, %v1963
  %v2011 = vmax.f32 %v1563, %v1969
  %v2012 = vmax.f32 %v1564, %v1975
  %v2013 = vmax.f32 %v1565, %v1981
  %v2014 = vpack.c.bf16 %v1982, %v1982
  %v2015 = vpack.c.bf16 %v1983, %v1983
  %v2016 = vpack.c.bf16 %v1984, %v1984
  %v2017 = vpack.c.bf16 %v1985, %v1985
  %v2018 = vpack.c.bf16 %v1986, %v1986
  %v2019 = vpack.c.bf16 %v1987, %v1987
  %v2020 = vpack.c.bf16 %v1988, %v1988
  %v2021 = vpack.c.bf16 %v1989, %v1989
  %v2022 = vpack.c.bf16 %v1990, %v1990
  %v2023 = vpack.c.bf16 %v1991, %v1991
  %v2024 = vpack.c.bf16 %v1992, %v1992
  %v2025 = vpack.c.bf16 %v1993, %v1993
  %v2026 = vpack.c.bf16 %v1994, %v1994
  %v2027 = vpack.c.bf16 %v1995, %v1995
  %v2028 = vpack.c.bf16 %v1996, %v1996
  %v2029 = vpack.c.bf16 %v1997, %v1997
  %v2030 = vpack.c.bf16 %v1998, %v1998
  %v2031 = vpack.c.bf16 %v1999, %v1999
  %v2032 = vpack.c.bf16 %v2000, %v2000
  %v2033 = vpack.c.bf16 %v2001, %v2001
  %v2034 = vpack.c.bf16 %v2002, %v2002
  %v2035 = vpack.c.bf16 %v2003, %v2003
  %v2036 = vpack.c.bf16 %v2004, %v2004
  %v2037 = vpack.c.bf16 %v2005, %v2005
  %v2038 = vpack.c.bf16 %v2006, %v2006
  %v2039 = vpack.c.bf16 %v2007, %v2007
  %v2040 = vpack.c.bf16 %v2008, %v2008
  %v2041 = vpack.c.bf16 %v2009, %v2009
  %v2042 = vpack.c.bf16 %v2010, %v2010
  %v2043 = vpack.c.bf16 %v2011, %v2011
  %v2044 = vpack.c.bf16 %v2012, %v2012
  %v2045 = vpack.c.bf16 %v2013, %v2013
  %v2078 = vunpack.c.l.b16 %v2014
  %v2079 = vunpack.c.l.b16 %v2015
  %v2080 = vunpack.c.l.b16 %v2016
  %v2081 = vunpack.c.l.b16 %v2017
  %v2082 = vunpack.c.l.b16 %v2018
  %v2083 = vunpack.c.l.b16 %v2019
  %v2084 = vunpack.c.l.b16 %v2020
  %v2085 = vunpack.c.l.b16 %v2021
  %v2086 = vunpack.c.l.b16 %v2022
  %v2087 = vunpack.c.l.b16 %v2023
  %v2088 = vunpack.c.l.b16 %v2024
  %v2089 = vunpack.c.l.b16 %v2025
  %v2090 = vunpack.c.l.b16 %v2026
  %v2091 = vunpack.c.l.b16 %v2027
  %v2092 = vunpack.c.l.b16 %v2028
  %v2093 = vunpack.c.l.b16 %v2029
  %v2094 = vunpack.c.l.b16 %v2030
  %v2095 = vunpack.c.l.b16 %v2031
  %v2096 = vunpack.c.l.b16 %v2032
  %v2097 = vunpack.c.l.b16 %v2033
  %v2098 = vunpack.c.l.b16 %v2034
  %v2099 = vunpack.c.l.b16 %v2035
  %v2100 = vunpack.c.l.b16 %v2036
  %v2101 = vunpack.c.l.b16 %v2037
  %v2102 = vunpack.c.l.b16 %v2038
  %v2103 = vunpack.c.l.b16 %v2039
  %v2104 = vunpack.c.l.b16 %v2040
  %v2105 = vunpack.c.l.b16 %v2041
  %v2106 = vunpack.c.l.b16 %v2042
  %v2107 = vunpack.c.l.b16 %v2043
  %v2108 = vunpack.c.l.b16 %v2044
  %v2109 = vunpack.c.l.b16 %v2045
  %vm2110 = vcmask 1041409
  %v2111 = vsel %vm2110, %v2079, %v2078
  %vm2112 = vcmask 1042434
  %v2113 = vsel %vm2112, %v2080, %v2111
  %vm2114 = vcmask 1043459
  %v2115 = vsel %vm2114, %v2081, %v2113
  %vm2116 = vcmask 1044484
  %v2117 = vsel %vm2116, %v2082, %v2115
  %vm2118 = vcmask 1045509
  %v2119 = vsel %vm2118, %v2083, %v2117
  %vm2120 = vcmask 1046534
  %v2121 = vsel %vm2120, %v2084, %v2119
  %vm2122 = vcmask 1047559
  %v2123 = vsel %vm2122, %v2085, %v2121
  %v2124 = vsel %vm2110, %v2087, %v2086
  %v2125 = vsel %vm2112, %v2088, %v2124
  %v2126 = vsel %vm2114, %v2089, %v2125
  %v2127 = vsel %vm2116, %v2090, %v2126
  %v2128 = vsel %vm2118, %v2091, %v2127
  %v2129 = vsel %vm2120, %v2092, %v2128
  %v2130 = vsel %vm2122, %v2093, %v2129
  %v2131 = vsel %vm2110, %v2095, %v2094
  %v2132 = vsel %vm2112, %v2096, %v2131
  %v2133 = vsel %vm2114, %v2097, %v2132
  %v2134 = vsel %vm2116, %v2098, %v2133
  %v2135 = vsel %vm2118, %v2099, %v2134
  %v2136 = vsel %vm2120, %v2100, %v2135
  %v2137 = vsel %vm2122, %v2101, %v2136
  %v2138 = vsel %vm2110, %v2103, %v2102
  %v2139 = vsel %vm2112, %v2104, %v2138
  %v2140 = vsel %vm2114, %v2105, %v2139
  %v2141 = vsel %vm2116, %v2106, %v2140
  %v2142 = vsel %vm2118, %v2107, %v2141
  %v2143 = vsel %vm2120, %v2108, %v2142
  %v2144 = vsel %vm2122, %v2109, %v2143
  %v2145 = vpack.c.b16 %v2130, %v2123
  %v2146 = vpack.c.b16 %v2144, %v2137
  %v2165 = vunpack.c.l.b16 %v97
  %v2166 = vunpack.c.l.b16 %v98
  %v2167 = vunpack.c.l.b16 %v99
  %v2168 = vunpack.c.l.b16 %v100
  %v2169 = vunpack.c.l.b16 %v101
  %v2170 = vunpack.c.l.b16 %v102
  %v2171 = vunpack.c.l.b16 %v103
  %v2172 = vunpack.c.l.b16 %v104
  %v2173 = vunpack.c.l.b16 %v105
  %v2174 = vunpack.c.l.b16 %v106
  %v2175 = vunpack.c.l.b16 %v107
  %v2176 = vunpack.c.l.b16 %v108
  %v2177 = vunpack.c.l.b16 %v109
  %v2178 = vunpack.c.l.b16 %v110
  %v2179 = vunpack.c.l.b16 %v111
  %v2180 = vunpack.c.l.b16 %v112
  %v2181 = vpack.c.b16 %v2166, %v2165
  %v2182 = vpack.c.b16 %v2168, %v2167
  %v2183 = vpack.c.b16 %v2170, %v2169
  %v2184 = vpack.c.b16 %v2172, %v2171
  %v2185 = vpack.c.b16 %v2174, %v2173
  %v2186 = vpack.c.b16 %v2176, %v2175
  %v2187 = vpack.c.b16 %v2178, %v2177
  %v2188 = vpack.c.b16 %v2180, %v2179
  %2197 = vmatpush.bf16.msra.mxu0 %v2188
  %2198 = vmatpush.bf16.msra.mxu0 %v2187
  %2199 = vmatpush.bf16.msra.mxu0 %v2186
  %2200 = vmatpush.bf16.msra.mxu0 %v2185
  %2201 = vmatpush.bf16.msra.mxu0 %v2184
  %2202 = vmatpush.bf16.msra.mxu0 %v2183
  %2203 = vmatpush.bf16.msra.mxu0 %v2182
  %2204 = vmatpush.bf16.msra.mxu0 %v2181
  %2205 = vmatmul.bf16.gmra.mxu0 %v2145
  %v2206 = vpop.f32.mrf.mxu0
  %v2207 = vadd.f32 0.0, %v2206
  %v2208 = vpop.f32.mrf.mxu0
  %v2209 = vadd.f32 0.0, %v2208
  %2210 = vmatmul.bf16.gmra.mxu0 %v2146
  %v2211 = vpop.f32.mrf.mxu0
  %v2212 = vadd.f32 0.0, %v2211
  %v2213 = vpop.f32.mrf.mxu0
  %v2214 = vadd.f32 0.0, %v2213
  %2215 = vdwg.mxu0
  %v2232 = vunpack.c.l.b16 %v81
  %v2233 = vunpack.c.l.b16 %v82
  %v2234 = vunpack.c.l.b16 %v83
  %v2235 = vunpack.c.l.b16 %v84
  %v2236 = vunpack.c.l.b16 %v85
  %v2237 = vunpack.c.l.b16 %v86
  %v2238 = vunpack.c.l.b16 %v87
  %v2239 = vunpack.c.l.b16 %v88
  %v2240 = vunpack.c.l.b16 %v89
  %v2241 = vunpack.c.l.b16 %v90
  %v2242 = vunpack.c.l.b16 %v91
  %v2243 = vunpack.c.l.b16 %v92
  %v2244 = vunpack.c.l.b16 %v93
  %v2245 = vunpack.c.l.b16 %v94
  %v2246 = vunpack.c.l.b16 %v95
  %v2247 = vunpack.c.l.b16 %v96
  %v2248 = vpack.c.b16 %v2233, %v2232
  %v2249 = vpack.c.b16 %v2235, %v2234
  %v2250 = vpack.c.b16 %v2237, %v2236
  %v2251 = vpack.c.b16 %v2239, %v2238
  %v2252 = vpack.c.b16 %v2241, %v2240
  %v2253 = vpack.c.b16 %v2243, %v2242
  %v2254 = vpack.c.b16 %v2245, %v2244
  %v2255 = vpack.c.b16 %v2247, %v2246
  %2264 = vmatpush.bf16.msra.mxu0 %v2255
  %2265 = vmatpush.bf16.msra.mxu0 %v2254
  %2266 = vmatpush.bf16.msra.mxu0 %v2253
  %2267 = vmatpush.bf16.msra.mxu0 %v2252
  %2268 = vmatpush.bf16.msra.mxu0 %v2251
  %2269 = vmatpush.bf16.msra.mxu0 %v2250
  %2270 = vmatpush.bf16.msra.mxu0 %v2249
  %2271 = vmatpush.bf16.msra.mxu0 %v2248
  %2272 = vmatmul.bf16.gmra.mxu0 %v114
  %v2273 = vpop.f32.mrf.mxu0
  %v2274 = vadd.f32 %v2207, %v2273
  %v2275 = vpop.f32.mrf.mxu0
  %v2276 = vadd.f32 %v2209, %v2275
  %2277 = vmatmul.bf16.gmra.mxu0 %v115
  %v2278 = vpop.f32.mrf.mxu0
  %v2279 = vadd.f32 %v2212, %v2278
  %v2280 = vpop.f32.mrf.mxu0
  %v2281 = vadd.f32 %v2214, %v2280
  %2282 = vdwg.mxu0
  %v2284 = vperm.slane %v113, 0
  %v2286 = vadd.f32 %v2274, %v2284
  %v2287 = vadd.f32 %v2276, %v2284
  %v2288 = vadd.f32 %v2279, %v2284
  %v2289 = vadd.f32 %v2281, %v2284
  %v2290 = vmax.f32 %v2286, 0.0
  %v2291 = vmax.f32 %v2287, 0.0
  %v2292 = vmax.f32 %v2288, 0.0
  %v2293 = vmax.f32 %v2289, 0.0
  %v2294 = vld [vmem:[%s7] sm:$0xf]
  %v2295 = vld [vmem:[%s7 + $0x4] sm:$0xf]
  %v2296 = vld [vmem:[%s7 + $0x8] sm:$0xf]
  %v2297 = vld [vmem:[%s7 + $0xc] sm:$0xf]
  %v2298 = vld [vmem:[%s7 + $0x10] sm:$0xf]
  %v2299 = vld [vmem:[%s7 + $0x14] sm:$0xf]
  %v2300 = vld [vmem:[%s7 + $0x18] sm:$0xf]
  %v2301 = vld [vmem:[%s7 + $0x1c] sm:$0xf]
  %v2302 = vld [vmem:[%s7 + $0x20] sm:$0xf]
  %v2303 = vld [vmem:[%s7 + $0x24] sm:$0xf]
  %v2304 = vld [vmem:[%s7 + $0x28] sm:$0xf]
  %v2305 = vld [vmem:[%s7 + $0x2c] sm:$0xf]
  %v2306 = vld [vmem:[%s7 + $0x30] sm:$0xf]
  %v2307 = vld [vmem:[%s7 + $0x34] sm:$0xf]
  %v2308 = vld [vmem:[%s7 + $0x38] sm:$0xf]
  %v2309 = vld [vmem:[%s7 + $0x3c] sm:$0xf]
  %v2310 = vld [vmem:[%s8] sm:$0x1]
  %v2311 = vld [vmem:[%s9] sm:$0xf]
  %v2312 = vld [vmem:[%s9 + $0x4] sm:$0xf]
  %v2313 = vld [vmem:[%s9 + $0x8] sm:$0xf]
  %v2314 = vld [vmem:[%s9 + $0xc] sm:$0xf]
  %v2315 = vld [vmem:[%s9 + $0x10] sm:$0xf]
  %v2316 = vld [vmem:[%s9 + $0x14] sm:$0xf]
  %v2317 = vld [vmem:[%s9 + $0x18] sm:$0xf]
  %v2318 = vld [vmem:[%s9 + $0x1c] sm:$0xf]
  %v2319 = vld [vmem:[%s9 + $0x20] sm:$0xf]
  %v2320 = vld [vmem:[%s9 + $0x24] sm:$0xf]
  %v2321 = vld [vmem:[%s9 + $0x28] sm:$0xf]
  %v2322 = vld [vmem:[%s9 + $0x2c] sm:$0xf]
  %v2323 = vld [vmem:[%s9 + $0x30] sm:$0xf]
  %v2324 = vld [vmem:[%s9 + $0x34] sm:$0xf]
  %v2325 = vld [vmem:[%s9 + $0x38] sm:$0xf]
  %v2326 = vld [vmem:[%s9 + $0x3c] sm:$0xf]
  %v2327 = vld [vmem:[%s10] sm:$0xf]
  %v2328 = vld [vmem:[%s10 + $0x4] sm:$0xf]
  %v2329 = vld [vmem:[%s10 + $0x8] sm:$0xf]
  %v2330 = vld [vmem:[%s10 + $0xc] sm:$0xf]
  %v2331 = vld [vmem:[%s10 + $0x10] sm:$0xf]
  %v2332 = vld [vmem:[%s10 + $0x14] sm:$0xf]
  %v2333 = vld [vmem:[%s10 + $0x18] sm:$0xf]
  %v2334 = vld [vmem:[%s10 + $0x1c] sm:$0xf]
  %v2335 = vld [vmem:[%s10 + $0x20] sm:$0xf]
  %v2336 = vld [vmem:[%s10 + $0x24] sm:$0xf]
  %v2337 = vld [vmem:[%s10 + $0x28] sm:$0xf]
  %v2338 = vld [vmem:[%s10 + $0x2c] sm:$0xf]
  %v2339 = vld [vmem:[%s10 + $0x30] sm:$0xf]
  %v2340 = vld [vmem:[%s10 + $0x34] sm:$0xf]
  %v2341 = vld [vmem:[%s10 + $0x38] sm:$0xf]
  %v2342 = vld [vmem:[%s10 + $0x3c] sm:$0xf]
  %v2343 = vld [vmem:[%s11] sm:$0x1]
  %v2344 = vpack.c.bf16 %v2291, %v2290
  %v2345 = vpack.c.bf16 %v2293, %v2292
  %v2347 = vperm.slane %v2310, 0
  %v2365 = vunpack.c.l.b16 %v2294
  %v2366 = vunpack.c.l.b16 %v2295
  %v2367 = vunpack.c.l.b16 %v2296
  %v2368 = vunpack.c.l.b16 %v2297
  %v2369 = vunpack.c.l.b16 %v2298
  %v2370 = vunpack.c.l.b16 %v2299
  %v2371 = vunpack.c.l.b16 %v2300
  %v2372 = vunpack.c.l.b16 %v2301
  %v2373 = vunpack.c.l.b16 %v2302
  %v2374 = vunpack.c.l.b16 %v2303
  %v2375 = vunpack.c.l.b16 %v2304
  %v2376 = vunpack.c.l.b16 %v2305
  %v2377 = vunpack.c.l.b16 %v2306
  %v2378 = vunpack.c.l.b16 %v2307
  %v2379 = vunpack.c.l.b16 %v2308
  %v2380 = vunpack.c.l.b16 %v2309
  %v2381 = vpack.c.b16 %v2366, %v2365
  %v2382 = vpack.c.b16 %v2368, %v2367
  %v2383 = vpack.c.b16 %v2370, %v2369
  %v2384 = vpack.c.b16 %v2372, %v2371
  %v2385 = vpack.c.b16 %v2374, %v2373
  %v2386 = vpack.c.b16 %v2376, %v2375
  %v2387 = vpack.c.b16 %v2378, %v2377
  %v2388 = vpack.c.b16 %v2380, %v2379
  %2397 = vmatpush.bf16.msra.mxu0 %v2388
  %2398 = vmatpush.bf16.msra.mxu0 %v2387
  %2399 = vmatpush.bf16.msra.mxu0 %v2386
  %2400 = vmatpush.bf16.msra.mxu0 %v2385
  %2401 = vmatpush.bf16.msra.mxu0 %v2384
  %2402 = vmatpush.bf16.msra.mxu0 %v2383
  %2403 = vmatpush.bf16.msra.mxu0 %v2382
  %2404 = vmatpush.bf16.msra.mxu0 %v2381
  %2405 = vmatmul.bf16.gmra.mxu0 %v2344
  %v2406 = vpop.f32.mrf.mxu0
  %v2407 = vadd.f32 %v2347, %v2406
  %v2408 = vpop.f32.mrf.mxu0
  %v2409 = vadd.f32 %v2347, %v2408
  %2410 = vmatmul.bf16.gmra.mxu0 %v2345
  %v2411 = vpop.f32.mrf.mxu0
  %v2412 = vadd.f32 %v2347, %v2411
  %v2413 = vpop.f32.mrf.mxu0
  %v2414 = vadd.f32 %v2347, %v2413
  %2415 = vdwg.mxu0
  %v2416 = vmax.f32 %v2407, 0.0
  %v2417 = vmax.f32 %v2409, 0.0
  %v2418 = vmax.f32 %v2412, 0.0
  %v2419 = vmax.f32 %v2414, 0.0
  %v2420 = vmul.f32 %v196, %v2416
  %v2421 = vmul.f32 %v203, %v2416
  %v2422 = vmul.f32 %v210, %v2416
  %v2423 = vmul.f32 %v217, %v2416
  %v2424 = vmul.f32 %v224, %v2416
  %v2425 = vmul.f32 %v231, %v2416
  %v2426 = vmul.f32 %v238, %v2416
  %v2427 = vmul.f32 %v245, %v2416
  %v2428 = vmul.f32 %v252, %v2416
  %v2429 = vmul.f32 %v259, %v2416
  %v2430 = vmul.f32 %v266, %v2416
  %v2431 = vmul.f32 %v273, %v2416
  %v2432 = vmul.f32 %v280, %v2416
  %v2433 = vmul.f32 %v287, %v2416
  %v2434 = vmul.f32 %v294, %v2416
  %v2435 = vmul.f32 %v301, %v2416
  %v2436 = vmul.f32 %v308, %v2416
  %v2437 = vmul.f32 %v315, %v2416
  %v2438 = vmul.f32 %v322, %v2416
  %v2439 = vmul.f32 %v329, %v2416
  %v2440 = vmul.f32 %v336, %v2416
  %v2441 = vmul.f32 %v343, %v2416
  %v2442 = vmul.f32 %v350, %v2416
  %v2443 = vmul.f32 %v357, %v2416
  %v2444 = vmul.f32 %v364, %v2416
  %v2445 = vmul.f32 %v371, %v2416
  %v2446 = vmul.f32 %v378, %v2416
  %v2447 = vmul.f32 %v385, %v2416
  %v2448 = vmul.f32 %v392, %v2416
  %v2449 = vmul.f32 %v399, %v2416
  %v2450 = vmul.f32 %v406, %v2416
  %v2451 = vmul.f32 %v413, %v2416
  %v2452 = vrot.slane %v2420, 4
  %v2453 = vmax.f32 %v2420, %v2452
  %v2454 = vrot.slane %v2453, 2
  %v2455 = vmax.f32 %v2453, %v2454
  %v2456 = vrot.slane %v2455, 1
  %v2457 = vmax.f32 %v2455, %v2456
  %v2458 = vrot.slane %v2421, 4
  %v2459 = vmax.f32 %v2421, %v2458
  %v2460 = vrot.slane %v2459, 2
  %v2461 = vmax.f32 %v2459, %v2460
  %v2462 = vrot.slane %v2461, 1
  %v2463 = vmax.f32 %v2461, %v2462
  %v2464 = vrot.slane %v2422, 4
  %v2465 = vmax.f32 %v2422, %v2464
  %v2466 = vrot.slane %v2465, 2
  %v2467 = vmax.f32 %v2465, %v2466
  %v2468 = vrot.slane %v2467, 1
  %v2469 = vmax.f32 %v2467, %v2468
  %v2470 = vrot.slane %v2423, 4
  %v2471 = vmax.f32 %v2423, %v2470
  %v2472 = vrot.slane %v2471, 2
  %v2473 = vmax.f32 %v2471, %v2472
  %v2474 = vrot.slane %v2473, 1
  %v2475 = vmax.f32 %v2473, %v2474
  %v2476 = vrot.slane %v2424, 4
  %v2477 = vmax.f32 %v2424, %v2476
  %v2478 = vrot.slane %v2477, 2
  %v2479 = vmax.f32 %v2477, %v2478
  %v2480 = vrot.slane %v2479, 1
  %v2481 = vmax.f32 %v2479, %v2480
  %v2482 = vrot.slane %v2425, 4
  %v2483 = vmax.f32 %v2425, %v2482
  %v2484 = vrot.slane %v2483, 2
  %v2485 = vmax.f32 %v2483, %v2484
  %v2486 = vrot.slane %v2485, 1
  %v2487 = vmax.f32 %v2485, %v2486
  %v2488 = vrot.slane %v2426, 4
  %v2489 = vmax.f32 %v2426, %v2488
  %v2490 = vrot.slane %v2489, 2
  %v2491 = vmax.f32 %v2489, %v2490
  %v2492 = vrot.slane %v2491, 1
  %v2493 = vmax.f32 %v2491, %v2492
  %v2494 = vrot.slane %v2427, 4
  %v2495 = vmax.f32 %v2427, %v2494
  %v2496 = vrot.slane %v2495, 2
  %v2497 = vmax.f32 %v2495, %v2496
  %v2498 = vrot.slane %v2497, 1
  %v2499 = vmax.f32 %v2497, %v2498
  %v2500 = vrot.slane %v2428, 4
  %v2501 = vmax.f32 %v2428, %v2500
  %v2502 = vrot.slane %v2501, 2
  %v2503 = vmax.f32 %v2501, %v2502
  %v2504 = vrot.slane %v2503, 1
  %v2505 = vmax.f32 %v2503, %v2504
  %v2506 = vrot.slane %v2429, 4
  %v2507 = vmax.f32 %v2429, %v2506
  %v2508 = vrot.slane %v2507, 2
  %v2509 = vmax.f32 %v2507, %v2508
  %v2510 = vrot.slane %v2509, 1
  %v2511 = vmax.f32 %v2509, %v2510
  %v2512 = vrot.slane %v2430, 4
  %v2513 = vmax.f32 %v2430, %v2512
  %v2514 = vrot.slane %v2513, 2
  %v2515 = vmax.f32 %v2513, %v2514
  %v2516 = vrot.slane %v2515, 1
  %v2517 = vmax.f32 %v2515, %v2516
  %v2518 = vrot.slane %v2431, 4
  %v2519 = vmax.f32 %v2431, %v2518
  %v2520 = vrot.slane %v2519, 2
  %v2521 = vmax.f32 %v2519, %v2520
  %v2522 = vrot.slane %v2521, 1
  %v2523 = vmax.f32 %v2521, %v2522
  %v2524 = vrot.slane %v2432, 4
  %v2525 = vmax.f32 %v2432, %v2524
  %v2526 = vrot.slane %v2525, 2
  %v2527 = vmax.f32 %v2525, %v2526
  %v2528 = vrot.slane %v2527, 1
  %v2529 = vmax.f32 %v2527, %v2528
  %v2530 = vrot.slane %v2433, 4
  %v2531 = vmax.f32 %v2433, %v2530
  %v2532 = vrot.slane %v2531, 2
  %v2533 = vmax.f32 %v2531, %v2532
  %v2534 = vrot.slane %v2533, 1
  %v2535 = vmax.f32 %v2533, %v2534
  %v2536 = vrot.slane %v2434, 4
  %v2537 = vmax.f32 %v2434, %v2536
  %v2538 = vrot.slane %v2537, 2
  %v2539 = vmax.f32 %v2537, %v2538
  %v2540 = vrot.slane %v2539, 1
  %v2541 = vmax.f32 %v2539, %v2540
  %v2542 = vrot.slane %v2435, 4
  %v2543 = vmax.f32 %v2435, %v2542
  %v2544 = vrot.slane %v2543, 2
  %v2545 = vmax.f32 %v2543, %v2544
  %v2546 = vrot.slane %v2545, 1
  %v2547 = vmax.f32 %v2545, %v2546
  %v2548 = vrot.slane %v2436, 4
  %v2549 = vmax.f32 %v2436, %v2548
  %v2550 = vrot.slane %v2549, 2
  %v2551 = vmax.f32 %v2549, %v2550
  %v2552 = vrot.slane %v2551, 1
  %v2553 = vmax.f32 %v2551, %v2552
  %v2554 = vrot.slane %v2437, 4
  %v2555 = vmax.f32 %v2437, %v2554
  %v2556 = vrot.slane %v2555, 2
  %v2557 = vmax.f32 %v2555, %v2556
  %v2558 = vrot.slane %v2557, 1
  %v2559 = vmax.f32 %v2557, %v2558
  %v2560 = vrot.slane %v2438, 4
  %v2561 = vmax.f32 %v2438, %v2560
  %v2562 = vrot.slane %v2561, 2
  %v2563 = vmax.f32 %v2561, %v2562
  %v2564 = vrot.slane %v2563, 1
  %v2565 = vmax.f32 %v2563, %v2564
  %v2566 = vrot.slane %v2439, 4
  %v2567 = vmax.f32 %v2439, %v2566
  %v2568 = vrot.slane %v2567, 2
  %v2569 = vmax.f32 %v2567, %v2568
  %v2570 = vrot.slane %v2569, 1
  %v2571 = vmax.f32 %v2569, %v2570
  %v2572 = vrot.slane %v2440, 4
  %v2573 = vmax.f32 %v2440, %v2572
  %v2574 = vrot.slane %v2573, 2
  %v2575 = vmax.f32 %v2573, %v2574
  %v2576 = vrot.slane %v2575, 1
  %v2577 = vmax.f32 %v2575, %v2576
  %v2578 = vrot.slane %v2441, 4
  %v2579 = vmax.f32 %v2441, %v2578
  %v2580 = vrot.slane %v2579, 2
  %v2581 = vmax.f32 %v2579, %v2580
  %v2582 = vrot.slane %v2581, 1
  %v2583 = vmax.f32 %v2581, %v2582
  %v2584 = vrot.slane %v2442, 4
  %v2585 = vmax.f32 %v2442, %v2584
  %v2586 = vrot.slane %v2585, 2
  %v2587 = vmax.f32 %v2585, %v2586
  %v2588 = vrot.slane %v2587, 1
  %v2589 = vmax.f32 %v2587, %v2588
  %v2590 = vrot.slane %v2443, 4
  %v2591 = vmax.f32 %v2443, %v2590
  %v2592 = vrot.slane %v2591, 2
  %v2593 = vmax.f32 %v2591, %v2592
  %v2594 = vrot.slane %v2593, 1
  %v2595 = vmax.f32 %v2593, %v2594
  %v2596 = vrot.slane %v2444, 4
  %v2597 = vmax.f32 %v2444, %v2596
  %v2598 = vrot.slane %v2597, 2
  %v2599 = vmax.f32 %v2597, %v2598
  %v2600 = vrot.slane %v2599, 1
  %v2601 = vmax.f32 %v2599, %v2600
  %v2602 = vrot.slane %v2445, 4
  %v2603 = vmax.f32 %v2445, %v2602
  %v2604 = vrot.slane %v2603, 2
  %v2605 = vmax.f32 %v2603, %v2604
  %v2606 = vrot.slane %v2605, 1
  %v2607 = vmax.f32 %v2605, %v2606
  %v2608 = vrot.slane %v2446, 4
  %v2609 = vmax.f32 %v2446, %v2608
  %v2610 = vrot.slane %v2609, 2
  %v2611 = vmax.f32 %v2609, %v2610
  %v2612 = vrot.slane %v2611, 1
  %v2613 = vmax.f32 %v2611, %v2612
  %v2614 = vrot.slane %v2447, 4
  %v2615 = vmax.f32 %v2447, %v2614
  %v2616 = vrot.slane %v2615, 2
  %v2617 = vmax.f32 %v2615, %v2616
  %v2618 = vrot.slane %v2617, 1
  %v2619 = vmax.f32 %v2617, %v2618
  %v2620 = vrot.slane %v2448, 4
  %v2621 = vmax.f32 %v2448, %v2620
  %v2622 = vrot.slane %v2621, 2
  %v2623 = vmax.f32 %v2621, %v2622
  %v2624 = vrot.slane %v2623, 1
  %v2625 = vmax.f32 %v2623, %v2624
  %v2626 = vrot.slane %v2449, 4
  %v2627 = vmax.f32 %v2449, %v2626
  %v2628 = vrot.slane %v2627, 2
  %v2629 = vmax.f32 %v2627, %v2628
  %v2630 = vrot.slane %v2629, 1
  %v2631 = vmax.f32 %v2629, %v2630
  %v2632 = vrot.slane %v2450, 4
  %v2633 = vmax.f32 %v2450, %v2632
  %v2634 = vrot.slane %v2633, 2
  %v2635 = vmax.f32 %v2633, %v2634
  %v2636 = vrot.slane %v2635, 1
  %v2637 = vmax.f32 %v2635, %v2636
  %v2638 = vrot.slane %v2451, 4
  %v2639 = vmax.f32 %v2451, %v2638
  %v2640 = vrot.slane %v2639, 2
  %v2641 = vmax.f32 %v2639, %v2640
  %v2642 = vrot.slane %v2641, 1
  %v2643 = vmax.f32 %v2641, %v2642
  %v2644 = vmax.f32 %v2457, 0.0
  %v2645 = vmax.f32 %v2463, 0.0
  %v2646 = vmax.f32 %v2469, 0.0
  %v2647 = vmax.f32 %v2475, 0.0
  %v2648 = vmax.f32 %v2481, 0.0
  %v2649 = vmax.f32 %v2487, 0.0
  %v2650 = vmax.f32 %v2493, 0.0
  %v2651 = vmax.f32 %v2499, 0.0
  %v2652 = vmax.f32 %v2505, 0.0
  %v2653 = vmax.f32 %v2511, 0.0
  %v2654 = vmax.f32 %v2517, 0.0
  %v2655 = vmax.f32 %v2523, 0.0
  %v2656 = vmax.f32 %v2529, 0.0
  %v2657 = vmax.f32 %v2535, 0.0
  %v2658 = vmax.f32 %v2541, 0.0
  %v2659 = vmax.f32 %v2547, 0.0
  %v2660 = vmax.f32 %v2553, 0.0
  %v2661 = vmax.f32 %v2559, 0.0
  %v2662 = vmax.f32 %v2565, 0.0
  %v2663 = vmax.f32 %v2571, 0.0
  %v2664 = vmax.f32 %v2577, 0.0
  %v2665 = vmax.f32 %v2583, 0.0
  %v2666 = vmax.f32 %v2589, 0.0
  %v2667 = vmax.f32 %v2595, 0.0
  %v2668 = vmax.f32 %v2601, 0.0
  %v2669 = vmax.f32 %v2607, 0.0
  %v2670 = vmax.f32 %v2613, 0.0
  %v2671 = vmax.f32 %v2619, 0.0
  %v2672 = vmax.f32 %v2625, 0.0
  %v2673 = vmax.f32 %v2631, 0.0
  %v2674 = vmax.f32 %v2637, 0.0
  %v2675 = vmax.f32 %v2643, 0.0
  %v2676 = vmul.f32 %v675, %v2417
  %v2677 = vmul.f32 %v681, %v2417
  %v2678 = vmul.f32 %v687, %v2417
  %v2679 = vmul.f32 %v693, %v2417
  %v2680 = vmul.f32 %v699, %v2417
  %v2681 = vmul.f32 %v705, %v2417
  %v2682 = vmul.f32 %v711, %v2417
  %v2683 = vmul.f32 %v717, %v2417
  %v2684 = vmul.f32 %v723, %v2417
  %v2685 = vmul.f32 %v729, %v2417
  %v2686 = vmul.f32 %v735, %v2417
  %v2687 = vmul.f32 %v741, %v2417
  %v2688 = vmul.f32 %v747, %v2417
  %v2689 = vmul.f32 %v753, %v2417
  %v2690 = vmul.f32 %v759, %v2417
  %v2691 = vmul.f32 %v765, %v2417
  %v2692 = vmul.f32 %v771, %v2417
  %v2693 = vmul.f32 %v777, %v2417
  %v2694 = vmul.f32 %v783, %v2417
  %v2695 = vmul.f32 %v789, %v2417
  %v2696 = vmul.f32 %v795, %v2417
  %v2697 = vmul.f32 %v801, %v2417
  %v2698 = vmul.f32 %v807, %v2417
  %v2699 = vmul.f32 %v813, %v2417
  %v2700 = vmul.f32 %v819, %v2417
  %v2701 = vmul.f32 %v825, %v2417
  %v2702 = vmul.f32 %v831, %v2417
  %v2703 = vmul.f32 %v837, %v2417
  %v2704 = vmul.f32 %v843, %v2417
  %v2705 = vmul.f32 %v849, %v2417
  %v2706 = vmul.f32 %v855, %v2417
  %v2707 = vmul.f32 %v861, %v2417
  %v2708 = vrot.slane %v2676, 4
  %v2709 = vmax.f32 %v2676, %v2708
  %v2710 = vrot.slane %v2709, 2
  %v2711 = vmax.f32 %v2709, %v2710
  %v2712 = vrot.slane %v2711, 1
  %v2713 = vmax.f32 %v2711, %v2712
  %v2714 = vrot.slane %v2677, 4
  %v2715 = vmax.f32 %v2677, %v2714
  %v2716 = vrot.slane %v2715, 2
  %v2717 = vmax.f32 %v2715, %v2716
  %v2718 = vrot.slane %v2717, 1
  %v2719 = vmax.f32 %v2717, %v2718
  %v2720 = vrot.slane %v2678, 4
  %v2721 = vmax.f32 %v2678, %v2720
  %v2722 = vrot.slane %v2721, 2
  %v2723 = vmax.f32 %v2721, %v2722
  %v2724 = vrot.slane %v2723, 1
  %v2725 = vmax.f32 %v2723, %v2724
  %v2726 = vrot.slane %v2679, 4
  %v2727 = vmax.f32 %v2679, %v2726
  %v2728 = vrot.slane %v2727, 2
  %v2729 = vmax.f32 %v2727, %v2728
  %v2730 = vrot.slane %v2729, 1
  %v2731 = vmax.f32 %v2729, %v2730
  %v2732 = vrot.slane %v2680, 4
  %v2733 = vmax.f32 %v2680, %v2732
  %v2734 = vrot.slane %v2733, 2
  %v2735 = vmax.f32 %v2733, %v2734
  %v2736 = vrot.slane %v2735, 1
  %v2737 = vmax.f32 %v2735, %v2736
  %v2738 = vrot.slane %v2681, 4
  %v2739 = vmax.f32 %v2681, %v2738
  %v2740 = vrot.slane %v2739, 2
  %v2741 = vmax.f32 %v2739, %v2740
  %v2742 = vrot.slane %v2741, 1
  %v2743 = vmax.f32 %v2741, %v2742
  %v2744 = vrot.slane %v2682, 4
  %v2745 = vmax.f32 %v2682, %v2744
  %v2746 = vrot.slane %v2745, 2
  %v2747 = vmax.f32 %v2745, %v2746
  %v2748 = vrot.slane %v2747, 1
  %v2749 = vmax.f32 %v2747, %v2748
  %v2750 = vrot.slane %v2683, 4
  %v2751 = vmax.f32 %v2683, %v2750
  %v2752 = vrot.slane %v2751, 2
  %v2753 = vmax.f32 %v2751, %v2752
  %v2754 = vrot.slane %v2753, 1
  %v2755 = vmax.f32 %v2753, %v2754
  %v2756 = vrot.slane %v2684, 4
  %v2757 = vmax.f32 %v2684, %v2756
  %v2758 = vrot.slane %v2757, 2
  %v2759 = vmax.f32 %v2757, %v2758
  %v2760 = vrot.slane %v2759, 1
  %v2761 = vmax.f32 %v2759, %v2760
  %v2762 = vrot.slane %v2685, 4
  %v2763 = vmax.f32 %v2685, %v2762
  %v2764 = vrot.slane %v2763, 2
  %v2765 = vmax.f32 %v2763, %v2764
  %v2766 = vrot.slane %v2765, 1
  %v2767 = vmax.f32 %v2765, %v2766
  %v2768 = vrot.slane %v2686, 4
  %v2769 = vmax.f32 %v2686, %v2768
  %v2770 = vrot.slane %v2769, 2
  %v2771 = vmax.f32 %v2769, %v2770
  %v2772 = vrot.slane %v2771, 1
  %v2773 = vmax.f32 %v2771, %v2772
  %v2774 = vrot.slane %v2687, 4
  %v2775 = vmax.f32 %v2687, %v2774
  %v2776 = vrot.slane %v2775, 2
  %v2777 = vmax.f32 %v2775, %v2776
  %v2778 = vrot.slane %v2777, 1
  %v2779 = vmax.f32 %v2777, %v2778
  %v2780 = vrot.slane %v2688, 4
  %v2781 = vmax.f32 %v2688, %v2780
  %v2782 = vrot.slane %v2781, 2
  %v2783 = vmax.f32 %v2781, %v2782
  %v2784 = vrot.slane %v2783, 1
  %v2785 = vmax.f32 %v2783, %v2784
  %v2786 = vrot.slane %v2689, 4
  %v2787 = vmax.f32 %v2689, %v2786
  %v2788 = vrot.slane %v2787, 2
  %v2789 = vmax.f32 %v2787, %v2788
  %v2790 = vrot.slane %v2789, 1
  %v2791 = vmax.f32 %v2789, %v2790
  %v2792 = vrot.slane %v2690, 4
  %v2793 = vmax.f32 %v2690, %v2792
  %v2794 = vrot.slane %v2793, 2
  %v2795 = vmax.f32 %v2793, %v2794
  %v2796 = vrot.slane %v2795, 1
  %v2797 = vmax.f32 %v2795, %v2796
  %v2798 = vrot.slane %v2691, 4
  %v2799 = vmax.f32 %v2691, %v2798
  %v2800 = vrot.slane %v2799, 2
  %v2801 = vmax.f32 %v2799, %v2800
  %v2802 = vrot.slane %v2801, 1
  %v2803 = vmax.f32 %v2801, %v2802
  %v2804 = vrot.slane %v2692, 4
  %v2805 = vmax.f32 %v2692, %v2804
  %v2806 = vrot.slane %v2805, 2
  %v2807 = vmax.f32 %v2805, %v2806
  %v2808 = vrot.slane %v2807, 1
  %v2809 = vmax.f32 %v2807, %v2808
  %v2810 = vrot.slane %v2693, 4
  %v2811 = vmax.f32 %v2693, %v2810
  %v2812 = vrot.slane %v2811, 2
  %v2813 = vmax.f32 %v2811, %v2812
  %v2814 = vrot.slane %v2813, 1
  %v2815 = vmax.f32 %v2813, %v2814
  %v2816 = vrot.slane %v2694, 4
  %v2817 = vmax.f32 %v2694, %v2816
  %v2818 = vrot.slane %v2817, 2
  %v2819 = vmax.f32 %v2817, %v2818
  %v2820 = vrot.slane %v2819, 1
  %v2821 = vmax.f32 %v2819, %v2820
  %v2822 = vrot.slane %v2695, 4
  %v2823 = vmax.f32 %v2695, %v2822
  %v2824 = vrot.slane %v2823, 2
  %v2825 = vmax.f32 %v2823, %v2824
  %v2826 = vrot.slane %v2825, 1
  %v2827 = vmax.f32 %v2825, %v2826
  %v2828 = vrot.slane %v2696, 4
  %v2829 = vmax.f32 %v2696, %v2828
  %v2830 = vrot.slane %v2829, 2
  %v2831 = vmax.f32 %v2829, %v2830
  %v2832 = vrot.slane %v2831, 1
  %v2833 = vmax.f32 %v2831, %v2832
  %v2834 = vrot.slane %v2697, 4
  %v2835 = vmax.f32 %v2697, %v2834
  %v2836 = vrot.slane %v2835, 2
  %v2837 = vmax.f32 %v2835, %v2836
  %v2838 = vrot.slane %v2837, 1
  %v2839 = vmax.f32 %v2837, %v2838
  %v2840 = vrot.slane %v2698, 4
  %v2841 = vmax.f32 %v2698, %v2840
  %v2842 = vrot.slane %v2841, 2
  %v2843 = vmax.f32 %v2841, %v2842
  %v2844 = vrot.slane %v2843, 1
  %v2845 = vmax.f32 %v2843, %v2844
  %v2846 = vrot.slane %v2699, 4
  %v2847 = vmax.f32 %v2699, %v2846
  %v2848 = vrot.slane %v2847, 2
  %v2849 = vmax.f32 %v2847, %v2848
  %v2850 = vrot.slane %v2849, 1
  %v2851 = vmax.f32 %v2849, %v2850
  %v2852 = vrot.slane %v2700, 4
  %v2853 = vmax.f32 %v2700, %v2852
  %v2854 = vrot.slane %v2853, 2
  %v2855 = vmax.f32 %v2853, %v2854
  %v2856 = vrot.slane %v2855, 1
  %v2857 = vmax.f32 %v2855, %v2856
  %v2858 = vrot.slane %v2701, 4
  %v2859 = vmax.f32 %v2701, %v2858
  %v2860 = vrot.slane %v2859, 2
  %v2861 = vmax.f32 %v2859, %v2860
  %v2862 = vrot.slane %v2861, 1
  %v2863 = vmax.f32 %v2861, %v2862
  %v2864 = vrot.slane %v2702, 4
  %v2865 = vmax.f32 %v2702, %v2864
  %v2866 = vrot.slane %v2865, 2
  %v2867 = vmax.f32 %v2865, %v2866
  %v2868 = vrot.slane %v2867, 1
  %v2869 = vmax.f32 %v2867, %v2868
  %v2870 = vrot.slane %v2703, 4
  %v2871 = vmax.f32 %v2703, %v2870
  %v2872 = vrot.slane %v2871, 2
  %v2873 = vmax.f32 %v2871, %v2872
  %v2874 = vrot.slane %v2873, 1
  %v2875 = vmax.f32 %v2873, %v2874
  %v2876 = vrot.slane %v2704, 4
  %v2877 = vmax.f32 %v2704, %v2876
  %v2878 = vrot.slane %v2877, 2
  %v2879 = vmax.f32 %v2877, %v2878
  %v2880 = vrot.slane %v2879, 1
  %v2881 = vmax.f32 %v2879, %v2880
  %v2882 = vrot.slane %v2705, 4
  %v2883 = vmax.f32 %v2705, %v2882
  %v2884 = vrot.slane %v2883, 2
  %v2885 = vmax.f32 %v2883, %v2884
  %v2886 = vrot.slane %v2885, 1
  %v2887 = vmax.f32 %v2885, %v2886
  %v2888 = vrot.slane %v2706, 4
  %v2889 = vmax.f32 %v2706, %v2888
  %v2890 = vrot.slane %v2889, 2
  %v2891 = vmax.f32 %v2889, %v2890
  %v2892 = vrot.slane %v2891, 1
  %v2893 = vmax.f32 %v2891, %v2892
  %v2894 = vrot.slane %v2707, 4
  %v2895 = vmax.f32 %v2707, %v2894
  %v2896 = vrot.slane %v2895, 2
  %v2897 = vmax.f32 %v2895, %v2896
  %v2898 = vrot.slane %v2897, 1
  %v2899 = vmax.f32 %v2897, %v2898
  %v2900 = vmax.f32 %v2644, %v2713
  %v2901 = vmax.f32 %v2645, %v2719
  %v2902 = vmax.f32 %v2646, %v2725
  %v2903 = vmax.f32 %v2647, %v2731
  %v2904 = vmax.f32 %v2648, %v2737
  %v2905 = vmax.f32 %v2649, %v2743
  %v2906 = vmax.f32 %v2650, %v2749
  %v2907 = vmax.f32 %v2651, %v2755
  %v2908 = vmax.f32 %v2652, %v2761
  %v2909 = vmax.f32 %v2653, %v2767
  %v2910 = vmax.f32 %v2654, %v2773
  %v2911 = vmax.f32 %v2655, %v2779
  %v2912 = vmax.f32 %v2656, %v2785
  %v2913 = vmax.f32 %v2657, %v2791
  %v2914 = vmax.f32 %v2658, %v2797
  %v2915 = vmax.f32 %v2659, %v2803
  %v2916 = vmax.f32 %v2660, %v2809
  %v2917 = vmax.f32 %v2661, %v2815
  %v2918 = vmax.f32 %v2662, %v2821
  %v2919 = vmax.f32 %v2663, %v2827
  %v2920 = vmax.f32 %v2664, %v2833
  %v2921 = vmax.f32 %v2665, %v2839
  %v2922 = vmax.f32 %v2666, %v2845
  %v2923 = vmax.f32 %v2667, %v2851
  %v2924 = vmax.f32 %v2668, %v2857
  %v2925 = vmax.f32 %v2669, %v2863
  %v2926 = vmax.f32 %v2670, %v2869
  %v2927 = vmax.f32 %v2671, %v2875
  %v2928 = vmax.f32 %v2672, %v2881
  %v2929 = vmax.f32 %v2673, %v2887
  %v2930 = vmax.f32 %v2674, %v2893
  %v2931 = vmax.f32 %v2675, %v2899
  %v2932 = vmul.f32 %v1123, %v2418
  %v2933 = vmul.f32 %v1129, %v2418
  %v2934 = vmul.f32 %v1135, %v2418
  %v2935 = vmul.f32 %v1141, %v2418
  %v2936 = vmul.f32 %v1147, %v2418
  %v2937 = vmul.f32 %v1153, %v2418
  %v2938 = vmul.f32 %v1159, %v2418
  %v2939 = vmul.f32 %v1165, %v2418
  %v2940 = vmul.f32 %v1171, %v2418
  %v2941 = vmul.f32 %v1177, %v2418
  %v2942 = vmul.f32 %v1183, %v2418
  %v2943 = vmul.f32 %v1189, %v2418
  %v2944 = vmul.f32 %v1195, %v2418
  %v2945 = vmul.f32 %v1201, %v2418
  %v2946 = vmul.f32 %v1207, %v2418
  %v2947 = vmul.f32 %v1213, %v2418
  %v2948 = vmul.f32 %v1219, %v2418
  %v2949 = vmul.f32 %v1225, %v2418
  %v2950 = vmul.f32 %v1231, %v2418
  %v2951 = vmul.f32 %v1237, %v2418
  %v2952 = vmul.f32 %v1243, %v2418
  %v2953 = vmul.f32 %v1249, %v2418
  %v2954 = vmul.f32 %v1255, %v2418
  %v2955 = vmul.f32 %v1261, %v2418
  %v2956 = vmul.f32 %v1267, %v2418
  %v2957 = vmul.f32 %v1273, %v2418
  %v2958 = vmul.f32 %v1279, %v2418
  %v2959 = vmul.f32 %v1285, %v2418
  %v2960 = vmul.f32 %v1291, %v2418
  %v2961 = vmul.f32 %v1297, %v2418
  %v2962 = vmul.f32 %v1303, %v2418
  %v2963 = vmul.f32 %v1309, %v2418
  %v2964 = vrot.slane %v2932, 4
  %v2965 = vmax.f32 %v2932, %v2964
  %v2966 = vrot.slane %v2965, 2
  %v2967 = vmax.f32 %v2965, %v2966
  %v2968 = vrot.slane %v2967, 1
  %v2969 = vmax.f32 %v2967, %v2968
  %v2970 = vrot.slane %v2933, 4
  %v2971 = vmax.f32 %v2933, %v2970
  %v2972 = vrot.slane %v2971, 2
  %v2973 = vmax.f32 %v2971, %v2972
  %v2974 = vrot.slane %v2973, 1
  %v2975 = vmax.f32 %v2973, %v2974
  %v2976 = vrot.slane %v2934, 4
  %v2977 = vmax.f32 %v2934, %v2976
  %v2978 = vrot.slane %v2977, 2
  %v2979 = vmax.f32 %v2977, %v2978
  %v2980 = vrot.slane %v2979, 1
  %v2981 = vmax.f32 %v2979, %v2980
  %v2982 = vrot.slane %v2935, 4
  %v2983 = vmax.f32 %v2935, %v2982
  %v2984 = vrot.slane %v2983, 2
  %v2985 = vmax.f32 %v2983, %v2984
  %v2986 = vrot.slane %v2985, 1
  %v2987 = vmax.f32 %v2985, %v2986
  %v2988 = vrot.slane %v2936, 4
  %v2989 = vmax.f32 %v2936, %v2988
  %v2990 = vrot.slane %v2989, 2
  %v2991 = vmax.f32 %v2989, %v2990
  %v2992 = vrot.slane %v2991, 1
  %v2993 = vmax.f32 %v2991, %v2992
  %v2994 = vrot.slane %v2937, 4
  %v2995 = vmax.f32 %v2937, %v2994
  %v2996 = vrot.slane %v2995, 2
  %v2997 = vmax.f32 %v2995, %v2996
  %v2998 = vrot.slane %v2997, 1
  %v2999 = vmax.f32 %v2997, %v2998
  %v3000 = vrot.slane %v2938, 4
  %v3001 = vmax.f32 %v2938, %v3000
  %v3002 = vrot.slane %v3001, 2
  %v3003 = vmax.f32 %v3001, %v3002
  %v3004 = vrot.slane %v3003, 1
  %v3005 = vmax.f32 %v3003, %v3004
  %v3006 = vrot.slane %v2939, 4
  %v3007 = vmax.f32 %v2939, %v3006
  %v3008 = vrot.slane %v3007, 2
  %v3009 = vmax.f32 %v3007, %v3008
  %v3010 = vrot.slane %v3009, 1
  %v3011 = vmax.f32 %v3009, %v3010
  %v3012 = vrot.slane %v2940, 4
  %v3013 = vmax.f32 %v2940, %v3012
  %v3014 = vrot.slane %v3013, 2
  %v3015 = vmax.f32 %v3013, %v3014
  %v3016 = vrot.slane %v3015, 1
  %v3017 = vmax.f32 %v3015, %v3016
  %v3018 = vrot.slane %v2941, 4
  %v3019 = vmax.f32 %v2941, %v3018
  %v3020 = vrot.slane %v3019, 2
  %v3021 = vmax.f32 %v3019, %v3020
  %v3022 = vrot.slane %v3021, 1
  %v3023 = vmax.f32 %v3021, %v3022
  %v3024 = vrot.slane %v2942, 4
  %v3025 = vmax.f32 %v2942, %v3024
  %v3026 = vrot.slane %v3025, 2
  %v3027 = vmax.f32 %v3025, %v3026
  %v3028 = vrot.slane %v3027, 1
  %v3029 = vmax.f32 %v3027, %v3028
  %v3030 = vrot.slane %v2943, 4
  %v3031 = vmax.f32 %v2943, %v3030
  %v3032 = vrot.slane %v3031, 2
  %v3033 = vmax.f32 %v3031, %v3032
  %v3034 = vrot.slane %v3033, 1
  %v3035 = vmax.f32 %v3033, %v3034
  %v3036 = vrot.slane %v2944, 4
  %v3037 = vmax.f32 %v2944, %v3036
  %v3038 = vrot.slane %v3037, 2
  %v3039 = vmax.f32 %v3037, %v3038
  %v3040 = vrot.slane %v3039, 1
  %v3041 = vmax.f32 %v3039, %v3040
  %v3042 = vrot.slane %v2945, 4
  %v3043 = vmax.f32 %v2945, %v3042
  %v3044 = vrot.slane %v3043, 2
  %v3045 = vmax.f32 %v3043, %v3044
  %v3046 = vrot.slane %v3045, 1
  %v3047 = vmax.f32 %v3045, %v3046
  %v3048 = vrot.slane %v2946, 4
  %v3049 = vmax.f32 %v2946, %v3048
  %v3050 = vrot.slane %v3049, 2
  %v3051 = vmax.f32 %v3049, %v3050
  %v3052 = vrot.slane %v3051, 1
  %v3053 = vmax.f32 %v3051, %v3052
  %v3054 = vrot.slane %v2947, 4
  %v3055 = vmax.f32 %v2947, %v3054
  %v3056 = vrot.slane %v3055, 2
  %v3057 = vmax.f32 %v3055, %v3056
  %v3058 = vrot.slane %v3057, 1
  %v3059 = vmax.f32 %v3057, %v3058
  %v3060 = vrot.slane %v2948, 4
  %v3061 = vmax.f32 %v2948, %v3060
  %v3062 = vrot.slane %v3061, 2
  %v3063 = vmax.f32 %v3061, %v3062
  %v3064 = vrot.slane %v3063, 1
  %v3065 = vmax.f32 %v3063, %v3064
  %v3066 = vrot.slane %v2949, 4
  %v3067 = vmax.f32 %v2949, %v3066
  %v3068 = vrot.slane %v3067, 2
  %v3069 = vmax.f32 %v3067, %v3068
  %v3070 = vrot.slane %v3069, 1
  %v3071 = vmax.f32 %v3069, %v3070
  %v3072 = vrot.slane %v2950, 4
  %v3073 = vmax.f32 %v2950, %v3072
  %v3074 = vrot.slane %v3073, 2
  %v3075 = vmax.f32 %v3073, %v3074
  %v3076 = vrot.slane %v3075, 1
  %v3077 = vmax.f32 %v3075, %v3076
  %v3078 = vrot.slane %v2951, 4
  %v3079 = vmax.f32 %v2951, %v3078
  %v3080 = vrot.slane %v3079, 2
  %v3081 = vmax.f32 %v3079, %v3080
  %v3082 = vrot.slane %v3081, 1
  %v3083 = vmax.f32 %v3081, %v3082
  %v3084 = vrot.slane %v2952, 4
  %v3085 = vmax.f32 %v2952, %v3084
  %v3086 = vrot.slane %v3085, 2
  %v3087 = vmax.f32 %v3085, %v3086
  %v3088 = vrot.slane %v3087, 1
  %v3089 = vmax.f32 %v3087, %v3088
  %v3090 = vrot.slane %v2953, 4
  %v3091 = vmax.f32 %v2953, %v3090
  %v3092 = vrot.slane %v3091, 2
  %v3093 = vmax.f32 %v3091, %v3092
  %v3094 = vrot.slane %v3093, 1
  %v3095 = vmax.f32 %v3093, %v3094
  %v3096 = vrot.slane %v2954, 4
  %v3097 = vmax.f32 %v2954, %v3096
  %v3098 = vrot.slane %v3097, 2
  %v3099 = vmax.f32 %v3097, %v3098
  %v3100 = vrot.slane %v3099, 1
  %v3101 = vmax.f32 %v3099, %v3100
  %v3102 = vrot.slane %v2955, 4
  %v3103 = vmax.f32 %v2955, %v3102
  %v3104 = vrot.slane %v3103, 2
  %v3105 = vmax.f32 %v3103, %v3104
  %v3106 = vrot.slane %v3105, 1
  %v3107 = vmax.f32 %v3105, %v3106
  %v3108 = vrot.slane %v2956, 4
  %v3109 = vmax.f32 %v2956, %v3108
  %v3110 = vrot.slane %v3109, 2
  %v3111 = vmax.f32 %v3109, %v3110
  %v3112 = vrot.slane %v3111, 1
  %v3113 = vmax.f32 %v3111, %v3112
  %v3114 = vrot.slane %v2957, 4
  %v3115 = vmax.f32 %v2957, %v3114
  %v3116 = vrot.slane %v3115, 2
  %v3117 = vmax.f32 %v3115, %v3116
  %v3118 = vrot.slane %v3117, 1
  %v3119 = vmax.f32 %v3117, %v3118
  %v3120 = vrot.slane %v2958, 4
  %v3121 = vmax.f32 %v2958, %v3120
  %v3122 = vrot.slane %v3121, 2
  %v3123 = vmax.f32 %v3121, %v3122
  %v3124 = vrot.slane %v3123, 1
  %v3125 = vmax.f32 %v3123, %v3124
  %v3126 = vrot.slane %v2959, 4
  %v3127 = vmax.f32 %v2959, %v3126
  %v3128 = vrot.slane %v3127, 2
  %v3129 = vmax.f32 %v3127, %v3128
  %v3130 = vrot.slane %v3129, 1
  %v3131 = vmax.f32 %v3129, %v3130
  %v3132 = vrot.slane %v2960, 4
  %v3133 = vmax.f32 %v2960, %v3132
  %v3134 = vrot.slane %v3133, 2
  %v3135 = vmax.f32 %v3133, %v3134
  %v3136 = vrot.slane %v3135, 1
  %v3137 = vmax.f32 %v3135, %v3136
  %v3138 = vrot.slane %v2961, 4
  %v3139 = vmax.f32 %v2961, %v3138
  %v3140 = vrot.slane %v3139, 2
  %v3141 = vmax.f32 %v3139, %v3140
  %v3142 = vrot.slane %v3141, 1
  %v3143 = vmax.f32 %v3141, %v3142
  %v3144 = vrot.slane %v2962, 4
  %v3145 = vmax.f32 %v2962, %v3144
  %v3146 = vrot.slane %v3145, 2
  %v3147 = vmax.f32 %v3145, %v3146
  %v3148 = vrot.slane %v3147, 1
  %v3149 = vmax.f32 %v3147, %v3148
  %v3150 = vrot.slane %v2963, 4
  %v3151 = vmax.f32 %v2963, %v3150
  %v3152 = vrot.slane %v3151, 2
  %v3153 = vmax.f32 %v3151, %v3152
  %v3154 = vrot.slane %v3153, 1
  %v3155 = vmax.f32 %v3153, %v3154
  %v3156 = vmax.f32 %v2900, %v2969
  %v3157 = vmax.f32 %v2901, %v2975
  %v3158 = vmax.f32 %v2902, %v2981
  %v3159 = vmax.f32 %v2903, %v2987
  %v3160 = vmax.f32 %v2904, %v2993
  %v3161 = vmax.f32 %v2905, %v2999
  %v3162 = vmax.f32 %v2906, %v3005
  %v3163 = vmax.f32 %v2907, %v3011
  %v3164 = vmax.f32 %v2908, %v3017
  %v3165 = vmax.f32 %v2909, %v3023
  %v3166 = vmax.f32 %v2910, %v3029
  %v3167 = vmax.f32 %v2911, %v3035
  %v3168 = vmax.f32 %v2912, %v3041
  %v3169 = vmax.f32 %v2913, %v3047
  %v3170 = vmax.f32 %v2914, %v3053
  %v3171 = vmax.f32 %v2915, %v3059
  %v3172 = vmax.f32 %v2916, %v3065
  %v3173 = vmax.f32 %v2917, %v3071
  %v3174 = vmax.f32 %v2918, %v3077
  %v3175 = vmax.f32 %v2919, %v3083
  %v3176 = vmax.f32 %v2920, %v3089
  %v3177 = vmax.f32 %v2921, %v3095
  %v3178 = vmax.f32 %v2922, %v3101
  %v3179 = vmax.f32 %v2923, %v3107
  %v3180 = vmax.f32 %v2924, %v3113
  %v3181 = vmax.f32 %v2925, %v3119
  %v3182 = vmax.f32 %v2926, %v3125
  %v3183 = vmax.f32 %v2927, %v3131
  %v3184 = vmax.f32 %v2928, %v3137
  %v3185 = vmax.f32 %v2929, %v3143
  %v3186 = vmax.f32 %v2930, %v3149
  %v3187 = vmax.f32 %v2931, %v3155
  %v3188 = vmul.f32 %v1571, %v2419
  %v3189 = vmul.f32 %v1577, %v2419
  %v3190 = vmul.f32 %v1583, %v2419
  %v3191 = vmul.f32 %v1589, %v2419
  %v3192 = vmul.f32 %v1595, %v2419
  %v3193 = vmul.f32 %v1601, %v2419
  %v3194 = vmul.f32 %v1607, %v2419
  %v3195 = vmul.f32 %v1613, %v2419
  %v3196 = vmul.f32 %v1619, %v2419
  %v3197 = vmul.f32 %v1625, %v2419
  %v3198 = vmul.f32 %v1631, %v2419
  %v3199 = vmul.f32 %v1637, %v2419
  %v3200 = vmul.f32 %v1643, %v2419
  %v3201 = vmul.f32 %v1649, %v2419
  %v3202 = vmul.f32 %v1655, %v2419
  %v3203 = vmul.f32 %v1661, %v2419
  %v3204 = vmul.f32 %v1667, %v2419
  %v3205 = vmul.f32 %v1673, %v2419
  %v3206 = vmul.f32 %v1679, %v2419
  %v3207 = vmul.f32 %v1685, %v2419
  %v3208 = vmul.f32 %v1691, %v2419
  %v3209 = vmul.f32 %v1697, %v2419
  %v3210 = vmul.f32 %v1703, %v2419
  %v3211 = vmul.f32 %v1709, %v2419
  %v3212 = vmul.f32 %v1715, %v2419
  %v3213 = vmul.f32 %v1721, %v2419
  %v3214 = vmul.f32 %v1727, %v2419
  %v3215 = vmul.f32 %v1733, %v2419
  %v3216 = vmul.f32 %v1739, %v2419
  %v3217 = vmul.f32 %v1745, %v2419
  %v3218 = vmul.f32 %v1751, %v2419
  %v3219 = vmul.f32 %v1757, %v2419
  %v3220 = vrot.slane %v3188, 4
  %v3221 = vmax.f32 %v3188, %v3220
  %v3222 = vrot.slane %v3221, 2
  %v3223 = vmax.f32 %v3221, %v3222
  %v3224 = vrot.slane %v3223, 1
  %v3225 = vmax.f32 %v3223, %v3224
  %v3226 = vrot.slane %v3189, 4
  %v3227 = vmax.f32 %v3189, %v3226
  %v3228 = vrot.slane %v3227, 2
  %v3229 = vmax.f32 %v3227, %v3228
  %v3230 = vrot.slane %v3229, 1
  %v3231 = vmax.f32 %v3229, %v3230
  %v3232 = vrot.slane %v3190, 4
  %v3233 = vmax.f32 %v3190, %v3232
  %v3234 = vrot.slane %v3233, 2
  %v3235 = vmax.f32 %v3233, %v3234
  %v3236 = vrot.slane %v3235, 1
  %v3237 = vmax.f32 %v3235, %v3236
  %v3238 = vrot.slane %v3191, 4
  %v3239 = vmax.f32 %v3191, %v3238
  %v3240 = vrot.slane %v3239, 2
  %v3241 = vmax.f32 %v3239, %v3240
  %v3242 = vrot.slane %v3241, 1
  %v3243 = vmax.f32 %v3241, %v3242
  %v3244 = vrot.slane %v3192, 4
  %v3245 = vmax.f32 %v3192, %v3244
  %v3246 = vrot.slane %v3245, 2
  %v3247 = vmax.f32 %v3245, %v3246
  %v3248 = vrot.slane %v3247, 1
  %v3249 = vmax.f32 %v3247, %v3248
  %v3250 = vrot.slane %v3193, 4
  %v3251 = vmax.f32 %v3193, %v3250
  %v3252 = vrot.slane %v3251, 2
  %v3253 = vmax.f32 %v3251, %v3252
  %v3254 = vrot.slane %v3253, 1
  %v3255 = vmax.f32 %v3253, %v3254
  %v3256 = vrot.slane %v3194, 4
  %v3257 = vmax.f32 %v3194, %v3256
  %v3258 = vrot.slane %v3257, 2
  %v3259 = vmax.f32 %v3257, %v3258
  %v3260 = vrot.slane %v3259, 1
  %v3261 = vmax.f32 %v3259, %v3260
  %v3262 = vrot.slane %v3195, 4
  %v3263 = vmax.f32 %v3195, %v3262
  %v3264 = vrot.slane %v3263, 2
  %v3265 = vmax.f32 %v3263, %v3264
  %v3266 = vrot.slane %v3265, 1
  %v3267 = vmax.f32 %v3265, %v3266
  %v3268 = vrot.slane %v3196, 4
  %v3269 = vmax.f32 %v3196, %v3268
  %v3270 = vrot.slane %v3269, 2
  %v3271 = vmax.f32 %v3269, %v3270
  %v3272 = vrot.slane %v3271, 1
  %v3273 = vmax.f32 %v3271, %v3272
  %v3274 = vrot.slane %v3197, 4
  %v3275 = vmax.f32 %v3197, %v3274
  %v3276 = vrot.slane %v3275, 2
  %v3277 = vmax.f32 %v3275, %v3276
  %v3278 = vrot.slane %v3277, 1
  %v3279 = vmax.f32 %v3277, %v3278
  %v3280 = vrot.slane %v3198, 4
  %v3281 = vmax.f32 %v3198, %v3280
  %v3282 = vrot.slane %v3281, 2
  %v3283 = vmax.f32 %v3281, %v3282
  %v3284 = vrot.slane %v3283, 1
  %v3285 = vmax.f32 %v3283, %v3284
  %v3286 = vrot.slane %v3199, 4
  %v3287 = vmax.f32 %v3199, %v3286
  %v3288 = vrot.slane %v3287, 2
  %v3289 = vmax.f32 %v3287, %v3288
  %v3290 = vrot.slane %v3289, 1
  %v3291 = vmax.f32 %v3289, %v3290
  %v3292 = vrot.slane %v3200, 4
  %v3293 = vmax.f32 %v3200, %v3292
  %v3294 = vrot.slane %v3293, 2
  %v3295 = vmax.f32 %v3293, %v3294
  %v3296 = vrot.slane %v3295, 1
  %v3297 = vmax.f32 %v3295, %v3296
  %v3298 = vrot.slane %v3201, 4
  %v3299 = vmax.f32 %v3201, %v3298
  %v3300 = vrot.slane %v3299, 2
  %v3301 = vmax.f32 %v3299, %v3300
  %v3302 = vrot.slane %v3301, 1
  %v3303 = vmax.f32 %v3301, %v3302
  %v3304 = vrot.slane %v3202, 4
  %v3305 = vmax.f32 %v3202, %v3304
  %v3306 = vrot.slane %v3305, 2
  %v3307 = vmax.f32 %v3305, %v3306
  %v3308 = vrot.slane %v3307, 1
  %v3309 = vmax.f32 %v3307, %v3308
  %v3310 = vrot.slane %v3203, 4
  %v3311 = vmax.f32 %v3203, %v3310
  %v3312 = vrot.slane %v3311, 2
  %v3313 = vmax.f32 %v3311, %v3312
  %v3314 = vrot.slane %v3313, 1
  %v3315 = vmax.f32 %v3313, %v3314
  %v3316 = vrot.slane %v3204, 4
  %v3317 = vmax.f32 %v3204, %v3316
  %v3318 = vrot.slane %v3317, 2
  %v3319 = vmax.f32 %v3317, %v3318
  %v3320 = vrot.slane %v3319, 1
  %v3321 = vmax.f32 %v3319, %v3320
  %v3322 = vrot.slane %v3205, 4
  %v3323 = vmax.f32 %v3205, %v3322
  %v3324 = vrot.slane %v3323, 2
  %v3325 = vmax.f32 %v3323, %v3324
  %v3326 = vrot.slane %v3325, 1
  %v3327 = vmax.f32 %v3325, %v3326
  %v3328 = vrot.slane %v3206, 4
  %v3329 = vmax.f32 %v3206, %v3328
  %v3330 = vrot.slane %v3329, 2
  %v3331 = vmax.f32 %v3329, %v3330
  %v3332 = vrot.slane %v3331, 1
  %v3333 = vmax.f32 %v3331, %v3332
  %v3334 = vrot.slane %v3207, 4
  %v3335 = vmax.f32 %v3207, %v3334
  %v3336 = vrot.slane %v3335, 2
  %v3337 = vmax.f32 %v3335, %v3336
  %v3338 = vrot.slane %v3337, 1
  %v3339 = vmax.f32 %v3337, %v3338
  %v3340 = vrot.slane %v3208, 4
  %v3341 = vmax.f32 %v3208, %v3340
  %v3342 = vrot.slane %v3341, 2
  %v3343 = vmax.f32 %v3341, %v3342
  %v3344 = vrot.slane %v3343, 1
  %v3345 = vmax.f32 %v3343, %v3344
  %v3346 = vrot.slane %v3209, 4
  %v3347 = vmax.f32 %v3209, %v3346
  %v3348 = vrot.slane %v3347, 2
  %v3349 = vmax.f32 %v3347, %v3348
  %v3350 = vrot.slane %v3349, 1
  %v3351 = vmax.f32 %v3349, %v3350
  %v3352 = vrot.slane %v3210, 4
  %v3353 = vmax.f32 %v3210, %v3352
  %v3354 = vrot.slane %v3353, 2
  %v3355 = vmax.f32 %v3353, %v3354
  %v3356 = vrot.slane %v3355, 1
  %v3357 = vmax.f32 %v3355, %v3356
  %v3358 = vrot.slane %v3211, 4
  %v3359 = vmax.f32 %v3211, %v3358
  %v3360 = vrot.slane %v3359, 2
  %v3361 = vmax.f32 %v3359, %v3360
  %v3362 = vrot.slane %v3361, 1
  %v3363 = vmax.f32 %v3361, %v3362
  %v3364 = vrot.slane %v3212, 4
  %v3365 = vmax.f32 %v3212, %v3364
  %v3366 = vrot.slane %v3365, 2
  %v3367 = vmax.f32 %v3365, %v3366
  %v3368 = vrot.slane %v3367, 1
  %v3369 = vmax.f32 %v3367, %v3368
  %v3370 = vrot.slane %v3213, 4
  %v3371 = vmax.f32 %v3213, %v3370
  %v3372 = vrot.slane %v3371, 2
  %v3373 = vmax.f32 %v3371, %v3372
  %v3374 = vrot.slane %v3373, 1
  %v3375 = vmax.f32 %v3373, %v3374
  %v3376 = vrot.slane %v3214, 4
  %v3377 = vmax.f32 %v3214, %v3376
  %v3378 = vrot.slane %v3377, 2
  %v3379 = vmax.f32 %v3377, %v3378
  %v3380 = vrot.slane %v3379, 1
  %v3381 = vmax.f32 %v3379, %v3380
  %v3382 = vrot.slane %v3215, 4
  %v3383 = vmax.f32 %v3215, %v3382
  %v3384 = vrot.slane %v3383, 2
  %v3385 = vmax.f32 %v3383, %v3384
  %v3386 = vrot.slane %v3385, 1
  %v3387 = vmax.f32 %v3385, %v3386
  %v3388 = vrot.slane %v3216, 4
  %v3389 = vmax.f32 %v3216, %v3388
  %v3390 = vrot.slane %v3389, 2
  %v3391 = vmax.f32 %v3389, %v3390
  %v3392 = vrot.slane %v3391, 1
  %v3393 = vmax.f32 %v3391, %v3392
  %v3394 = vrot.slane %v3217, 4
  %v3395 = vmax.f32 %v3217, %v3394
  %v3396 = vrot.slane %v3395, 2
  %v3397 = vmax.f32 %v3395, %v3396
  %v3398 = vrot.slane %v3397, 1
  %v3399 = vmax.f32 %v3397, %v3398
  %v3400 = vrot.slane %v3218, 4
  %v3401 = vmax.f32 %v3218, %v3400
  %v3402 = vrot.slane %v3401, 2
  %v3403 = vmax.f32 %v3401, %v3402
  %v3404 = vrot.slane %v3403, 1
  %v3405 = vmax.f32 %v3403, %v3404
  %v3406 = vrot.slane %v3219, 4
  %v3407 = vmax.f32 %v3219, %v3406
  %v3408 = vrot.slane %v3407, 2
  %v3409 = vmax.f32 %v3407, %v3408
  %v3410 = vrot.slane %v3409, 1
  %v3411 = vmax.f32 %v3409, %v3410
  %v3412 = vmax.f32 %v3156, %v3225
  %v3413 = vmax.f32 %v3157, %v3231
  %v3414 = vmax.f32 %v3158, %v3237
  %v3415 = vmax.f32 %v3159, %v3243
  %v3416 = vmax.f32 %v3160, %v3249
  %v3417 = vmax.f32 %v3161, %v3255
  %v3418 = vmax.f32 %v3162, %v3261
  %v3419 = vmax.f32 %v3163, %v3267
  %v3420 = vmax.f32 %v3164, %v3273
  %v3421 = vmax.f32 %v3165, %v3279
  %v3422 = vmax.f32 %v3166, %v3285
  %v3423 = vmax.f32 %v3167, %v3291
  %v3424 = vmax.f32 %v3168, %v3297
  %v3425 = vmax.f32 %v3169, %v3303
  %v3426 = vmax.f32 %v3170, %v3309
  %v3427 = vmax.f32 %v3171, %v3315
  %v3428 = vmax.f32 %v3172, %v3321
  %v3429 = vmax.f32 %v3173, %v3327
  %v3430 = vmax.f32 %v3174, %v3333
  %v3431 = vmax.f32 %v3175, %v3339
  %v3432 = vmax.f32 %v3176, %v3345
  %v3433 = vmax.f32 %v3177, %v3351
  %v3434 = vmax.f32 %v3178, %v3357
  %v3435 = vmax.f32 %v3179, %v3363
  %v3436 = vmax.f32 %v3180, %v3369
  %v3437 = vmax.f32 %v3181, %v3375
  %v3438 = vmax.f32 %v3182, %v3381
  %v3439 = vmax.f32 %v3183, %v3387
  %v3440 = vmax.f32 %v3184, %v3393
  %v3441 = vmax.f32 %v3185, %v3399
  %v3442 = vmax.f32 %v3186, %v3405
  %v3443 = vmax.f32 %v3187, %v3411
  %v3444 = vpack.c.bf16 %v3412, %v3412
  %v3445 = vpack.c.bf16 %v3413, %v3413
  %v3446 = vpack.c.bf16 %v3414, %v3414
  %v3447 = vpack.c.bf16 %v3415, %v3415
  %v3448 = vpack.c.bf16 %v3416, %v3416
  %v3449 = vpack.c.bf16 %v3417, %v3417
  %v3450 = vpack.c.bf16 %v3418, %v3418
  %v3451 = vpack.c.bf16 %v3419, %v3419
  %v3452 = vpack.c.bf16 %v3420, %v3420
  %v3453 = vpack.c.bf16 %v3421, %v3421
  %v3454 = vpack.c.bf16 %v3422, %v3422
  %v3455 = vpack.c.bf16 %v3423, %v3423
  %v3456 = vpack.c.bf16 %v3424, %v3424
  %v3457 = vpack.c.bf16 %v3425, %v3425
  %v3458 = vpack.c.bf16 %v3426, %v3426
  %v3459 = vpack.c.bf16 %v3427, %v3427
  %v3460 = vpack.c.bf16 %v3428, %v3428
  %v3461 = vpack.c.bf16 %v3429, %v3429
  %v3462 = vpack.c.bf16 %v3430, %v3430
  %v3463 = vpack.c.bf16 %v3431, %v3431
  %v3464 = vpack.c.bf16 %v3432, %v3432
  %v3465 = vpack.c.bf16 %v3433, %v3433
  %v3466 = vpack.c.bf16 %v3434, %v3434
  %v3467 = vpack.c.bf16 %v3435, %v3435
  %v3468 = vpack.c.bf16 %v3436, %v3436
  %v3469 = vpack.c.bf16 %v3437, %v3437
  %v3470 = vpack.c.bf16 %v3438, %v3438
  %v3471 = vpack.c.bf16 %v3439, %v3439
  %v3472 = vpack.c.bf16 %v3440, %v3440
  %v3473 = vpack.c.bf16 %v3441, %v3441
  %v3474 = vpack.c.bf16 %v3442, %v3442
  %v3475 = vpack.c.bf16 %v3443, %v3443
  %v3508 = vunpack.c.l.b16 %v3444
  %v3509 = vunpack.c.l.b16 %v3445
  %v3510 = vunpack.c.l.b16 %v3446
  %v3511 = vunpack.c.l.b16 %v3447
  %v3512 = vunpack.c.l.b16 %v3448
  %v3513 = vunpack.c.l.b16 %v3449
  %v3514 = vunpack.c.l.b16 %v3450
  %v3515 = vunpack.c.l.b16 %v3451
  %v3516 = vunpack.c.l.b16 %v3452
  %v3517 = vunpack.c.l.b16 %v3453
  %v3518 = vunpack.c.l.b16 %v3454
  %v3519 = vunpack.c.l.b16 %v3455
  %v3520 = vunpack.c.l.b16 %v3456
  %v3521 = vunpack.c.l.b16 %v3457
  %v3522 = vunpack.c.l.b16 %v3458
  %v3523 = vunpack.c.l.b16 %v3459
  %v3524 = vunpack.c.l.b16 %v3460
  %v3525 = vunpack.c.l.b16 %v3461
  %v3526 = vunpack.c.l.b16 %v3462
  %v3527 = vunpack.c.l.b16 %v3463
  %v3528 = vunpack.c.l.b16 %v3464
  %v3529 = vunpack.c.l.b16 %v3465
  %v3530 = vunpack.c.l.b16 %v3466
  %v3531 = vunpack.c.l.b16 %v3467
  %v3532 = vunpack.c.l.b16 %v3468
  %v3533 = vunpack.c.l.b16 %v3469
  %v3534 = vunpack.c.l.b16 %v3470
  %v3535 = vunpack.c.l.b16 %v3471
  %v3536 = vunpack.c.l.b16 %v3472
  %v3537 = vunpack.c.l.b16 %v3473
  %v3538 = vunpack.c.l.b16 %v3474
  %v3539 = vunpack.c.l.b16 %v3475
  %v3540 = vsel %vm2110, %v3509, %v3508
  %v3541 = vsel %vm2112, %v3510, %v3540
  %v3542 = vsel %vm2114, %v3511, %v3541
  %v3543 = vsel %vm2116, %v3512, %v3542
  %v3544 = vsel %vm2118, %v3513, %v3543
  %v3545 = vsel %vm2120, %v3514, %v3544
  %v3546 = vsel %vm2122, %v3515, %v3545
  %v3547 = vsel %vm2110, %v3517, %v3516
  %v3548 = vsel %vm2112, %v3518, %v3547
  %v3549 = vsel %vm2114, %v3519, %v3548
  %v3550 = vsel %vm2116, %v3520, %v3549
  %v3551 = vsel %vm2118, %v3521, %v3550
  %v3552 = vsel %vm2120, %v3522, %v3551
  %v3553 = vsel %vm2122, %v3523, %v3552
  %v3554 = vsel %vm2110, %v3525, %v3524
  %v3555 = vsel %vm2112, %v3526, %v3554
  %v3556 = vsel %vm2114, %v3527, %v3555
  %v3557 = vsel %vm2116, %v3528, %v3556
  %v3558 = vsel %vm2118, %v3529, %v3557
  %v3559 = vsel %vm2120, %v3530, %v3558
  %v3560 = vsel %vm2122, %v3531, %v3559
  %v3561 = vsel %vm2110, %v3533, %v3532
  %v3562 = vsel %vm2112, %v3534, %v3561
  %v3563 = vsel %vm2114, %v3535, %v3562
  %v3564 = vsel %vm2116, %v3536, %v3563
  %v3565 = vsel %vm2118, %v3537, %v3564
  %v3566 = vsel %vm2120, %v3538, %v3565
  %v3567 = vsel %vm2122, %v3539, %v3566
  %v3568 = vpack.c.b16 %v3553, %v3546
  %v3569 = vpack.c.b16 %v3567, %v3560
  %v3588 = vunpack.c.l.b16 %v2327
  %v3589 = vunpack.c.l.b16 %v2328
  %v3590 = vunpack.c.l.b16 %v2329
  %v3591 = vunpack.c.l.b16 %v2330
  %v3592 = vunpack.c.l.b16 %v2331
  %v3593 = vunpack.c.l.b16 %v2332
  %v3594 = vunpack.c.l.b16 %v2333
  %v3595 = vunpack.c.l.b16 %v2334
  %v3596 = vunpack.c.l.b16 %v2335
  %v3597 = vunpack.c.l.b16 %v2336
  %v3598 = vunpack.c.l.b16 %v2337
  %v3599 = vunpack.c.l.b16 %v2338
  %v3600 = vunpack.c.l.b16 %v2339
  %v3601 = vunpack.c.l.b16 %v2340
  %v3602 = vunpack.c.l.b16 %v2341
  %v3603 = vunpack.c.l.b16 %v2342
  %v3604 = vpack.c.b16 %v3589, %v3588
  %v3605 = vpack.c.b16 %v3591, %v3590
  %v3606 = vpack.c.b16 %v3593, %v3592
  %v3607 = vpack.c.b16 %v3595, %v3594
  %v3608 = vpack.c.b16 %v3597, %v3596
  %v3609 = vpack.c.b16 %v3599, %v3598
  %v3610 = vpack.c.b16 %v3601, %v3600
  %v3611 = vpack.c.b16 %v3603, %v3602
  %3620 = vmatpush.bf16.msra.mxu0 %v3611
  %3621 = vmatpush.bf16.msra.mxu0 %v3610
  %3622 = vmatpush.bf16.msra.mxu0 %v3609
  %3623 = vmatpush.bf16.msra.mxu0 %v3608
  %3624 = vmatpush.bf16.msra.mxu0 %v3607
  %3625 = vmatpush.bf16.msra.mxu0 %v3606
  %3626 = vmatpush.bf16.msra.mxu0 %v3605
  %3627 = vmatpush.bf16.msra.mxu0 %v3604
  %3628 = vmatmul.bf16.gmra.mxu0 %v3568
  %v3629 = vpop.f32.mrf.mxu0
  %v3630 = vadd.f32 0.0, %v3629
  %v3631 = vpop.f32.mrf.mxu0
  %v3632 = vadd.f32 0.0, %v3631
  %3633 = vmatmul.bf16.gmra.mxu0 %v3569
  %v3634 = vpop.f32.mrf.mxu0
  %v3635 = vadd.f32 0.0, %v3634
  %v3636 = vpop.f32.mrf.mxu0
  %v3637 = vadd.f32 0.0, %v3636
  %3638 = vdwg.mxu0
  %v3655 = vunpack.c.l.b16 %v2311
  %v3656 = vunpack.c.l.b16 %v2312
  %v3657 = vunpack.c.l.b16 %v2313
  %v3658 = vunpack.c.l.b16 %v2314
  %v3659 = vunpack.c.l.b16 %v2315
  %v3660 = vunpack.c.l.b16 %v2316
  %v3661 = vunpack.c.l.b16 %v2317
  %v3662 = vunpack.c.l.b16 %v2318
  %v3663 = vunpack.c.l.b16 %v2319
  %v3664 = vunpack.c.l.b16 %v2320
  %v3665 = vunpack.c.l.b16 %v2321
  %v3666 = vunpack.c.l.b16 %v2322
  %v3667 = vunpack.c.l.b16 %v2323
  %v3668 = vunpack.c.l.b16 %v2324
  %v3669 = vunpack.c.l.b16 %v2325
  %v3670 = vunpack.c.l.b16 %v2326
  %v3671 = vpack.c.b16 %v3656, %v3655
  %v3672 = vpack.c.b16 %v3658, %v3657
  %v3673 = vpack.c.b16 %v3660, %v3659
  %v3674 = vpack.c.b16 %v3662, %v3661
  %v3675 = vpack.c.b16 %v3664, %v3663
  %v3676 = vpack.c.b16 %v3666, %v3665
  %v3677 = vpack.c.b16 %v3668, %v3667
  %v3678 = vpack.c.b16 %v3670, %v3669
  %3687 = vmatpush.bf16.msra.mxu0 %v3678
  %3688 = vmatpush.bf16.msra.mxu0 %v3677
  %3689 = vmatpush.bf16.msra.mxu0 %v3676
  %3690 = vmatpush.bf16.msra.mxu0 %v3675
  %3691 = vmatpush.bf16.msra.mxu0 %v3674
  %3692 = vmatpush.bf16.msra.mxu0 %v3673
  %3693 = vmatpush.bf16.msra.mxu0 %v3672
  %3694 = vmatpush.bf16.msra.mxu0 %v3671
  %3695 = vmatmul.bf16.gmra.mxu0 %v2344
  %v3696 = vpop.f32.mrf.mxu0
  %v3697 = vadd.f32 %v3630, %v3696
  %v3698 = vpop.f32.mrf.mxu0
  %v3699 = vadd.f32 %v3632, %v3698
  %3700 = vmatmul.bf16.gmra.mxu0 %v2345
  %v3701 = vpop.f32.mrf.mxu0
  %v3702 = vadd.f32 %v3635, %v3701
  %v3703 = vpop.f32.mrf.mxu0
  %v3704 = vadd.f32 %v3637, %v3703
  %3705 = vdwg.mxu0
  %v3707 = vperm.slane %v2343, 0
  %v3709 = vadd.f32 %v3697, %v3707
  %v3710 = vadd.f32 %v3699, %v3707
  %v3711 = vadd.f32 %v3702, %v3707
  %v3712 = vadd.f32 %v3704, %v3707
  %v3713 = vmax.f32 %v3709, 0.0
  %v3714 = vmax.f32 %v3710, 0.0
  %v3715 = vmax.f32 %v3711, 0.0
  %v3716 = vmax.f32 %v3712, 0.0
  %v3717 = vld [vmem:[%s12] sm:$0xf]
  %v3718 = vld [vmem:[%s12 + $0x4] sm:$0xf]
  %v3719 = vld [vmem:[%s12 + $0x8] sm:$0xf]
  %v3720 = vld [vmem:[%s12 + $0xc] sm:$0xf]
  %v3721 = vld [vmem:[%s12 + $0x10] sm:$0xf]
  %v3722 = vld [vmem:[%s12 + $0x14] sm:$0xf]
  %v3723 = vld [vmem:[%s12 + $0x18] sm:$0xf]
  %v3724 = vld [vmem:[%s12 + $0x1c] sm:$0xf]
  %v3725 = vld [vmem:[%s12 + $0x20] sm:$0xf]
  %v3726 = vld [vmem:[%s12 + $0x24] sm:$0xf]
  %v3727 = vld [vmem:[%s12 + $0x28] sm:$0xf]
  %v3728 = vld [vmem:[%s12 + $0x2c] sm:$0xf]
  %v3729 = vld [vmem:[%s12 + $0x30] sm:$0xf]
  %v3730 = vld [vmem:[%s12 + $0x34] sm:$0xf]
  %v3731 = vld [vmem:[%s12 + $0x38] sm:$0xf]
  %v3732 = vld [vmem:[%s12 + $0x3c] sm:$0xf]
  %v3733 = vld [vmem:[%s13] sm:$0x1]
  %v3734 = vld [vmem:[%s14] sm:$0xf]
  %v3735 = vld [vmem:[%s14 + $0x4] sm:$0xf]
  %v3736 = vld [vmem:[%s14 + $0x8] sm:$0xf]
  %v3737 = vld [vmem:[%s14 + $0xc] sm:$0xf]
  %v3738 = vld [vmem:[%s14 + $0x10] sm:$0xf]
  %v3739 = vld [vmem:[%s14 + $0x14] sm:$0xf]
  %v3740 = vld [vmem:[%s14 + $0x18] sm:$0xf]
  %v3741 = vld [vmem:[%s14 + $0x1c] sm:$0xf]
  %v3742 = vld [vmem:[%s14 + $0x20] sm:$0xf]
  %v3743 = vld [vmem:[%s14 + $0x24] sm:$0xf]
  %v3744 = vld [vmem:[%s14 + $0x28] sm:$0xf]
  %v3745 = vld [vmem:[%s14 + $0x2c] sm:$0xf]
  %v3746 = vld [vmem:[%s14 + $0x30] sm:$0xf]
  %v3747 = vld [vmem:[%s14 + $0x34] sm:$0xf]
  %v3748 = vld [vmem:[%s14 + $0x38] sm:$0xf]
  %v3749 = vld [vmem:[%s14 + $0x3c] sm:$0xf]
  %v3750 = vld [vmem:[%s15] sm:$0xf]
  %v3751 = vld [vmem:[%s15 + $0x4] sm:$0xf]
  %v3752 = vld [vmem:[%s15 + $0x8] sm:$0xf]
  %v3753 = vld [vmem:[%s15 + $0xc] sm:$0xf]
  %v3754 = vld [vmem:[%s15 + $0x10] sm:$0xf]
  %v3755 = vld [vmem:[%s15 + $0x14] sm:$0xf]
  %v3756 = vld [vmem:[%s15 + $0x18] sm:$0xf]
  %v3757 = vld [vmem:[%s15 + $0x1c] sm:$0xf]
  %v3758 = vld [vmem:[%s15 + $0x20] sm:$0xf]
  %v3759 = vld [vmem:[%s15 + $0x24] sm:$0xf]
  %v3760 = vld [vmem:[%s15 + $0x28] sm:$0xf]
  %v3761 = vld [vmem:[%s15 + $0x2c] sm:$0xf]
  %v3762 = vld [vmem:[%s15 + $0x30] sm:$0xf]
  %v3763 = vld [vmem:[%s15 + $0x34] sm:$0xf]
  %v3764 = vld [vmem:[%s15 + $0x38] sm:$0xf]
  %v3765 = vld [vmem:[%s15 + $0x3c] sm:$0xf]
  %v3766 = vld [vmem:[%s16] sm:$0x1]
  %v3767 = vpack.c.bf16 %v3714, %v3713
  %v3768 = vpack.c.bf16 %v3716, %v3715
  %v3770 = vperm.slane %v3733, 0
  %v3788 = vunpack.c.l.b16 %v3717
  %v3789 = vunpack.c.l.b16 %v3718
  %v3790 = vunpack.c.l.b16 %v3719
  %v3791 = vunpack.c.l.b16 %v3720
  %v3792 = vunpack.c.l.b16 %v3721
  %v3793 = vunpack.c.l.b16 %v3722
  %v3794 = vunpack.c.l.b16 %v3723
  %v3795 = vunpack.c.l.b16 %v3724
  %v3796 = vunpack.c.l.b16 %v3725
  %v3797 = vunpack.c.l.b16 %v3726
  %v3798 = vunpack.c.l.b16 %v3727
  %v3799 = vunpack.c.l.b16 %v3728
  %v3800 = vunpack.c.l.b16 %v3729
  %v3801 = vunpack.c.l.b16 %v3730
  %v3802 = vunpack.c.l.b16 %v3731
  %v3803 = vunpack.c.l.b16 %v3732
  %v3804 = vpack.c.b16 %v3789, %v3788
  %v3805 = vpack.c.b16 %v3791, %v3790
  %v3806 = vpack.c.b16 %v3793, %v3792
  %v3807 = vpack.c.b16 %v3795, %v3794
  %v3808 = vpack.c.b16 %v3797, %v3796
  %v3809 = vpack.c.b16 %v3799, %v3798
  %v3810 = vpack.c.b16 %v3801, %v3800
  %v3811 = vpack.c.b16 %v3803, %v3802
  %3820 = vmatpush.bf16.msra.mxu0 %v3811
  %3821 = vmatpush.bf16.msra.mxu0 %v3810
  %3822 = vmatpush.bf16.msra.mxu0 %v3809
  %3823 = vmatpush.bf16.msra.mxu0 %v3808
  %3824 = vmatpush.bf16.msra.mxu0 %v3807
  %3825 = vmatpush.bf16.msra.mxu0 %v3806
  %3826 = vmatpush.bf16.msra.mxu0 %v3805
  %3827 = vmatpush.bf16.msra.mxu0 %v3804
  %3828 = vmatmul.bf16.gmra.mxu0 %v3767
  %v3829 = vpop.f32.mrf.mxu0
  %v3830 = vadd.f32 %v3770, %v3829
  %v3831 = vpop.f32.mrf.mxu0
  %v3832 = vadd.f32 %v3770, %v3831
  %3833 = vmatmul.bf16.gmra.mxu0 %v3768
  %v3834 = vpop.f32.mrf.mxu0
  %v3835 = vadd.f32 %v3770, %v3834
  %v3836 = vpop.f32.mrf.mxu0
  %v3837 = vadd.f32 %v3770, %v3836
  %3838 = vdwg.mxu0
  %v3839 = vmax.f32 %v3830, 0.0
  %v3840 = vmax.f32 %v3832, 0.0
  %v3841 = vmax.f32 %v3835, 0.0
  %v3842 = vmax.f32 %v3837, 0.0
  %v3843 = vmul.f32 %v196, %v3839
  %v3844 = vmul.f32 %v203, %v3839
  %v3845 = vmul.f32 %v210, %v3839
  %v3846 = vmul.f32 %v217, %v3839
  %v3847 = vmul.f32 %v224, %v3839
  %v3848 = vmul.f32 %v231, %v3839
  %v3849 = vmul.f32 %v238, %v3839
  %v3850 = vmul.f32 %v245, %v3839
  %v3851 = vmul.f32 %v252, %v3839
  %v3852 = vmul.f32 %v259, %v3839
  %v3853 = vmul.f32 %v266, %v3839
  %v3854 = vmul.f32 %v273, %v3839
  %v3855 = vmul.f32 %v280, %v3839
  %v3856 = vmul.f32 %v287, %v3839
  %v3857 = vmul.f32 %v294, %v3839
  %v3858 = vmul.f32 %v301, %v3839
  %v3859 = vmul.f32 %v308, %v3839
  %v3860 = vmul.f32 %v315, %v3839
  %v3861 = vmul.f32 %v322, %v3839
  %v3862 = vmul.f32 %v329, %v3839
  %v3863 = vmul.f32 %v336, %v3839
  %v3864 = vmul.f32 %v343, %v3839
  %v3865 = vmul.f32 %v350, %v3839
  %v3866 = vmul.f32 %v357, %v3839
  %v3867 = vmul.f32 %v364, %v3839
  %v3868 = vmul.f32 %v371, %v3839
  %v3869 = vmul.f32 %v378, %v3839
  %v3870 = vmul.f32 %v385, %v3839
  %v3871 = vmul.f32 %v392, %v3839
  %v3872 = vmul.f32 %v399, %v3839
  %v3873 = vmul.f32 %v406, %v3839
  %v3874 = vmul.f32 %v413, %v3839
  %v3875 = vrot.slane %v3843, 4
  %v3876 = vmax.f32 %v3843, %v3875
  %v3877 = vrot.slane %v3876, 2
  %v3878 = vmax.f32 %v3876, %v3877
  %v3879 = vrot.slane %v3878, 1
  %v3880 = vmax.f32 %v3878, %v3879
  %v3881 = vrot.slane %v3844, 4
  %v3882 = vmax.f32 %v3844, %v3881
  %v3883 = vrot.slane %v3882, 2
  %v3884 = vmax.f32 %v3882, %v3883
  %v3885 = vrot.slane %v3884, 1
  %v3886 = vmax.f32 %v3884, %v3885
  %v3887 = vrot.slane %v3845, 4
  %v3888 = vmax.f32 %v3845, %v3887
  %v3889 = vrot.slane %v3888, 2
  %v3890 = vmax.f32 %v3888, %v3889
  %v3891 = vrot.slane %v3890, 1
  %v3892 = vmax.f32 %v3890, %v3891
  %v3893 = vrot.slane %v3846, 4
  %v3894 = vmax.f32 %v3846, %v3893
  %v3895 = vrot.slane %v3894, 2
  %v3896 = vmax.f32 %v3894, %v3895
  %v3897 = vrot.slane %v3896, 1
  %v3898 = vmax.f32 %v3896, %v3897
  %v3899 = vrot.slane %v3847, 4
  %v3900 = vmax.f32 %v3847, %v3899
  %v3901 = vrot.slane %v3900, 2
  %v3902 = vmax.f32 %v3900, %v3901
  %v3903 = vrot.slane %v3902, 1
  %v3904 = vmax.f32 %v3902, %v3903
  %v3905 = vrot.slane %v3848, 4
  %v3906 = vmax.f32 %v3848, %v3905
  %v3907 = vrot.slane %v3906, 2
  %v3908 = vmax.f32 %v3906, %v3907
  %v3909 = vrot.slane %v3908, 1
  %v3910 = vmax.f32 %v3908, %v3909
  %v3911 = vrot.slane %v3849, 4
  %v3912 = vmax.f32 %v3849, %v3911
  %v3913 = vrot.slane %v3912, 2
  %v3914 = vmax.f32 %v3912, %v3913
  %v3915 = vrot.slane %v3914, 1
  %v3916 = vmax.f32 %v3914, %v3915
  %v3917 = vrot.slane %v3850, 4
  %v3918 = vmax.f32 %v3850, %v3917
  %v3919 = vrot.slane %v3918, 2
  %v3920 = vmax.f32 %v3918, %v3919
  %v3921 = vrot.slane %v3920, 1
  %v3922 = vmax.f32 %v3920, %v3921
  %v3923 = vrot.slane %v3851, 4
  %v3924 = vmax.f32 %v3851, %v3923
  %v3925 = vrot.slane %v3924, 2
  %v3926 = vmax.f32 %v3924, %v3925
  %v3927 = vrot.slane %v3926, 1
  %v3928 = vmax.f32 %v3926, %v3927
  %v3929 = vrot.slane %v3852, 4
  %v3930 = vmax.f32 %v3852, %v3929
  %v3931 = vrot.slane %v3930, 2
  %v3932 = vmax.f32 %v3930, %v3931
  %v3933 = vrot.slane %v3932, 1
  %v3934 = vmax.f32 %v3932, %v3933
  %v3935 = vrot.slane %v3853, 4
  %v3936 = vmax.f32 %v3853, %v3935
  %v3937 = vrot.slane %v3936, 2
  %v3938 = vmax.f32 %v3936, %v3937
  %v3939 = vrot.slane %v3938, 1
  %v3940 = vmax.f32 %v3938, %v3939
  %v3941 = vrot.slane %v3854, 4
  %v3942 = vmax.f32 %v3854, %v3941
  %v3943 = vrot.slane %v3942, 2
  %v3944 = vmax.f32 %v3942, %v3943
  %v3945 = vrot.slane %v3944, 1
  %v3946 = vmax.f32 %v3944, %v3945
  %v3947 = vrot.slane %v3855, 4
  %v3948 = vmax.f32 %v3855, %v3947
  %v3949 = vrot.slane %v3948, 2
  %v3950 = vmax.f32 %v3948, %v3949
  %v3951 = vrot.slane %v3950, 1
  %v3952 = vmax.f32 %v3950, %v3951
  %v3953 = vrot.slane %v3856, 4
  %v3954 = vmax.f32 %v3856, %v3953
  %v3955 = vrot.slane %v3954, 2
  %v3956 = vmax.f32 %v3954, %v3955
  %v3957 = vrot.slane %v3956, 1
  %v3958 = vmax.f32 %v3956, %v3957
  %v3959 = vrot.slane %v3857, 4
  %v3960 = vmax.f32 %v3857, %v3959
  %v3961 = vrot.slane %v3960, 2
  %v3962 = vmax.f32 %v3960, %v3961
  %v3963 = vrot.slane %v3962, 1
  %v3964 = vmax.f32 %v3962, %v3963
  %v3965 = vrot.slane %v3858, 4
  %v3966 = vmax.f32 %v3858, %v3965
  %v3967 = vrot.slane %v3966, 2
  %v3968 = vmax.f32 %v3966, %v3967
  %v3969 = vrot.slane %v3968, 1
  %v3970 = vmax.f32 %v3968, %v3969
  %v3971 = vrot.slane %v3859, 4
  %v3972 = vmax.f32 %v3859, %v3971
  %v3973 = vrot.slane %v3972, 2
  %v3974 = vmax.f32 %v3972, %v3973
  %v3975 = vrot.slane %v3974, 1
  %v3976 = vmax.f32 %v3974, %v3975
  %v3977 = vrot.slane %v3860, 4
  %v3978 = vmax.f32 %v3860, %v3977
  %v3979 = vrot.slane %v3978, 2
  %v3980 = vmax.f32 %v3978, %v3979
  %v3981 = vrot.slane %v3980, 1
  %v3982 = vmax.f32 %v3980, %v3981
  %v3983 = vrot.slane %v3861, 4
  %v3984 = vmax.f32 %v3861, %v3983
  %v3985 = vrot.slane %v3984, 2
  %v3986 = vmax.f32 %v3984, %v3985
  %v3987 = vrot.slane %v3986, 1
  %v3988 = vmax.f32 %v3986, %v3987
  %v3989 = vrot.slane %v3862, 4
  %v3990 = vmax.f32 %v3862, %v3989
  %v3991 = vrot.slane %v3990, 2
  %v3992 = vmax.f32 %v3990, %v3991
  %v3993 = vrot.slane %v3992, 1
  %v3994 = vmax.f32 %v3992, %v3993
  %v3995 = vrot.slane %v3863, 4
  %v3996 = vmax.f32 %v3863, %v3995
  %v3997 = vrot.slane %v3996, 2
  %v3998 = vmax.f32 %v3996, %v3997
  %v3999 = vrot.slane %v3998, 1
  %v4000 = vmax.f32 %v3998, %v3999
  %v4001 = vrot.slane %v3864, 4
  %v4002 = vmax.f32 %v3864, %v4001
  %v4003 = vrot.slane %v4002, 2
  %v4004 = vmax.f32 %v4002, %v4003
  %v4005 = vrot.slane %v4004, 1
  %v4006 = vmax.f32 %v4004, %v4005
  %v4007 = vrot.slane %v3865, 4
  %v4008 = vmax.f32 %v3865, %v4007
  %v4009 = vrot.slane %v4008, 2
  %v4010 = vmax.f32 %v4008, %v4009
  %v4011 = vrot.slane %v4010, 1
  %v4012 = vmax.f32 %v4010, %v4011
  %v4013 = vrot.slane %v3866, 4
  %v4014 = vmax.f32 %v3866, %v4013
  %v4015 = vrot.slane %v4014, 2
  %v4016 = vmax.f32 %v4014, %v4015
  %v4017 = vrot.slane %v4016, 1
  %v4018 = vmax.f32 %v4016, %v4017
  %v4019 = vrot.slane %v3867, 4
  %v4020 = vmax.f32 %v3867, %v4019
  %v4021 = vrot.slane %v4020, 2
  %v4022 = vmax.f32 %v4020, %v4021
  %v4023 = vrot.slane %v4022, 1
  %v4024 = vmax.f32 %v4022, %v4023
  %v4025 = vrot.slane %v3868, 4
  %v4026 = vmax.f32 %v3868, %v4025
  %v4027 = vrot.slane %v4026, 2
  %v4028 = vmax.f32 %v4026, %v4027
  %v4029 = vrot.slane %v4028, 1
  %v4030 = vmax.f32 %v4028, %v4029
  %v4031 = vrot.slane %v3869, 4
  %v4032 = vmax.f32 %v3869, %v4031
  %v4033 = vrot.slane %v4032, 2
  %v4034 = vmax.f32 %v4032, %v4033
  %v4035 = vrot.slane %v4034, 1
  %v4036 = vmax.f32 %v4034, %v4035
  %v4037 = vrot.slane %v3870, 4
  %v4038 = vmax.f32 %v3870, %v4037
  %v4039 = vrot.slane %v4038, 2
  %v4040 = vmax.f32 %v4038, %v4039
  %v4041 = vrot.slane %v4040, 1
  %v4042 = vmax.f32 %v4040, %v4041
  %v4043 = vrot.slane %v3871, 4
  %v4044 = vmax.f32 %v3871, %v4043
  %v4045 = vrot.slane %v4044, 2
  %v4046 = vmax.f32 %v4044, %v4045
  %v4047 = vrot.slane %v4046, 1
  %v4048 = vmax.f32 %v4046, %v4047
  %v4049 = vrot.slane %v3872, 4
  %v4050 = vmax.f32 %v3872, %v4049
  %v4051 = vrot.slane %v4050, 2
  %v4052 = vmax.f32 %v4050, %v4051
  %v4053 = vrot.slane %v4052, 1
  %v4054 = vmax.f32 %v4052, %v4053
  %v4055 = vrot.slane %v3873, 4
  %v4056 = vmax.f32 %v3873, %v4055
  %v4057 = vrot.slane %v4056, 2
  %v4058 = vmax.f32 %v4056, %v4057
  %v4059 = vrot.slane %v4058, 1
  %v4060 = vmax.f32 %v4058, %v4059
  %v4061 = vrot.slane %v3874, 4
  %v4062 = vmax.f32 %v3874, %v4061
  %v4063 = vrot.slane %v4062, 2
  %v4064 = vmax.f32 %v4062, %v4063
  %v4065 = vrot.slane %v4064, 1
  %v4066 = vmax.f32 %v4064, %v4065
  %v4067 = vmax.f32 %v3880, 0.0
  %v4068 = vmax.f32 %v3886, 0.0
  %v4069 = vmax.f32 %v3892, 0.0
  %v4070 = vmax.f32 %v3898, 0.0
  %v4071 = vmax.f32 %v3904, 0.0
  %v4072 = vmax.f32 %v3910, 0.0
  %v4073 = vmax.f32 %v3916, 0.0
  %v4074 = vmax.f32 %v3922, 0.0
  %v4075 = vmax.f32 %v3928, 0.0
  %v4076 = vmax.f32 %v3934, 0.0
  %v4077 = vmax.f32 %v3940, 0.0
  %v4078 = vmax.f32 %v3946, 0.0
  %v4079 = vmax.f32 %v3952, 0.0
  %v4080 = vmax.f32 %v3958, 0.0
  %v4081 = vmax.f32 %v3964, 0.0
  %v4082 = vmax.f32 %v3970, 0.0
  %v4083 = vmax.f32 %v3976, 0.0
  %v4084 = vmax.f32 %v3982, 0.0
  %v4085 = vmax.f32 %v3988, 0.0
  %v4086 = vmax.f32 %v3994, 0.0
  %v4087 = vmax.f32 %v4000, 0.0
  %v4088 = vmax.f32 %v4006, 0.0
  %v4089 = vmax.f32 %v4012, 0.0
  %v4090 = vmax.f32 %v4018, 0.0
  %v4091 = vmax.f32 %v4024, 0.0
  %v4092 = vmax.f32 %v4030, 0.0
  %v4093 = vmax.f32 %v4036, 0.0
  %v4094 = vmax.f32 %v4042, 0.0
  %v4095 = vmax.f32 %v4048, 0.0
  %v4096 = vmax.f32 %v4054, 0.0
  %v4097 = vmax.f32 %v4060, 0.0
  %v4098 = vmax.f32 %v4066, 0.0
  %v4099 = vmul.f32 %v675, %v3840
  %v4100 = vmul.f32 %v681, %v3840
  %v4101 = vmul.f32 %v687, %v3840
  %v4102 = vmul.f32 %v693, %v3840
  %v4103 = vmul.f32 %v699, %v3840
  %v4104 = vmul.f32 %v705, %v3840
  %v4105 = vmul.f32 %v711, %v3840
  %v4106 = vmul.f32 %v717, %v3840
  %v4107 = vmul.f32 %v723, %v3840
  %v4108 = vmul.f32 %v729, %v3840
  %v4109 = vmul.f32 %v735, %v3840
  %v4110 = vmul.f32 %v741, %v3840
  %v4111 = vmul.f32 %v747, %v3840
  %v4112 = vmul.f32 %v753, %v3840
  %v4113 = vmul.f32 %v759, %v3840
  %v4114 = vmul.f32 %v765, %v3840
  %v4115 = vmul.f32 %v771, %v3840
  %v4116 = vmul.f32 %v777, %v3840
  %v4117 = vmul.f32 %v783, %v3840
  %v4118 = vmul.f32 %v789, %v3840
  %v4119 = vmul.f32 %v795, %v3840
  %v4120 = vmul.f32 %v801, %v3840
  %v4121 = vmul.f32 %v807, %v3840
  %v4122 = vmul.f32 %v813, %v3840
  %v4123 = vmul.f32 %v819, %v3840
  %v4124 = vmul.f32 %v825, %v3840
  %v4125 = vmul.f32 %v831, %v3840
  %v4126 = vmul.f32 %v837, %v3840
  %v4127 = vmul.f32 %v843, %v3840
  %v4128 = vmul.f32 %v849, %v3840
  %v4129 = vmul.f32 %v855, %v3840
  %v4130 = vmul.f32 %v861, %v3840
  %v4131 = vrot.slane %v4099, 4
  %v4132 = vmax.f32 %v4099, %v4131
  %v4133 = vrot.slane %v4132, 2
  %v4134 = vmax.f32 %v4132, %v4133
  %v4135 = vrot.slane %v4134, 1
  %v4136 = vmax.f32 %v4134, %v4135
  %v4137 = vrot.slane %v4100, 4
  %v4138 = vmax.f32 %v4100, %v4137
  %v4139 = vrot.slane %v4138, 2
  %v4140 = vmax.f32 %v4138, %v4139
  %v4141 = vrot.slane %v4140, 1
  %v4142 = vmax.f32 %v4140, %v4141
  %v4143 = vrot.slane %v4101, 4
  %v4144 = vmax.f32 %v4101, %v4143
  %v4145 = vrot.slane %v4144, 2
  %v4146 = vmax.f32 %v4144, %v4145
  %v4147 = vrot.slane %v4146, 1
  %v4148 = vmax.f32 %v4146, %v4147
  %v4149 = vrot.slane %v4102, 4
  %v4150 = vmax.f32 %v4102, %v4149
  %v4151 = vrot.slane %v4150, 2
  %v4152 = vmax.f32 %v4150, %v4151
  %v4153 = vrot.slane %v4152, 1
  %v4154 = vmax.f32 %v4152, %v4153
  %v4155 = vrot.slane %v4103, 4
  %v4156 = vmax.f32 %v4103, %v4155
  %v4157 = vrot.slane %v4156, 2
  %v4158 = vmax.f32 %v4156, %v4157
  %v4159 = vrot.slane %v4158, 1
  %v4160 = vmax.f32 %v4158, %v4159
  %v4161 = vrot.slane %v4104, 4
  %v4162 = vmax.f32 %v4104, %v4161
  %v4163 = vrot.slane %v4162, 2
  %v4164 = vmax.f32 %v4162, %v4163
  %v4165 = vrot.slane %v4164, 1
  %v4166 = vmax.f32 %v4164, %v4165
  %v4167 = vrot.slane %v4105, 4
  %v4168 = vmax.f32 %v4105, %v4167
  %v4169 = vrot.slane %v4168, 2
  %v4170 = vmax.f32 %v4168, %v4169
  %v4171 = vrot.slane %v4170, 1
  %v4172 = vmax.f32 %v4170, %v4171
  %v4173 = vrot.slane %v4106, 4
  %v4174 = vmax.f32 %v4106, %v4173
  %v4175 = vrot.slane %v4174, 2
  %v4176 = vmax.f32 %v4174, %v4175
  %v4177 = vrot.slane %v4176, 1
  %v4178 = vmax.f32 %v4176, %v4177
  %v4179 = vrot.slane %v4107, 4
  %v4180 = vmax.f32 %v4107, %v4179
  %v4181 = vrot.slane %v4180, 2
  %v4182 = vmax.f32 %v4180, %v4181
  %v4183 = vrot.slane %v4182, 1
  %v4184 = vmax.f32 %v4182, %v4183
  %v4185 = vrot.slane %v4108, 4
  %v4186 = vmax.f32 %v4108, %v4185
  %v4187 = vrot.slane %v4186, 2
  %v4188 = vmax.f32 %v4186, %v4187
  %v4189 = vrot.slane %v4188, 1
  %v4190 = vmax.f32 %v4188, %v4189
  %v4191 = vrot.slane %v4109, 4
  %v4192 = vmax.f32 %v4109, %v4191
  %v4193 = vrot.slane %v4192, 2
  %v4194 = vmax.f32 %v4192, %v4193
  %v4195 = vrot.slane %v4194, 1
  %v4196 = vmax.f32 %v4194, %v4195
  %v4197 = vrot.slane %v4110, 4
  %v4198 = vmax.f32 %v4110, %v4197
  %v4199 = vrot.slane %v4198, 2
  %v4200 = vmax.f32 %v4198, %v4199
  %v4201 = vrot.slane %v4200, 1
  %v4202 = vmax.f32 %v4200, %v4201
  %v4203 = vrot.slane %v4111, 4
  %v4204 = vmax.f32 %v4111, %v4203
  %v4205 = vrot.slane %v4204, 2
  %v4206 = vmax.f32 %v4204, %v4205
  %v4207 = vrot.slane %v4206, 1
  %v4208 = vmax.f32 %v4206, %v4207
  %v4209 = vrot.slane %v4112, 4
  %v4210 = vmax.f32 %v4112, %v4209
  %v4211 = vrot.slane %v4210, 2
  %v4212 = vmax.f32 %v4210, %v4211
  %v4213 = vrot.slane %v4212, 1
  %v4214 = vmax.f32 %v4212, %v4213
  %v4215 = vrot.slane %v4113, 4
  %v4216 = vmax.f32 %v4113, %v4215
  %v4217 = vrot.slane %v4216, 2
  %v4218 = vmax.f32 %v4216, %v4217
  %v4219 = vrot.slane %v4218, 1
  %v4220 = vmax.f32 %v4218, %v4219
  %v4221 = vrot.slane %v4114, 4
  %v4222 = vmax.f32 %v4114, %v4221
  %v4223 = vrot.slane %v4222, 2
  %v4224 = vmax.f32 %v4222, %v4223
  %v4225 = vrot.slane %v4224, 1
  %v4226 = vmax.f32 %v4224, %v4225
  %v4227 = vrot.slane %v4115, 4
  %v4228 = vmax.f32 %v4115, %v4227
  %v4229 = vrot.slane %v4228, 2
  %v4230 = vmax.f32 %v4228, %v4229
  %v4231 = vrot.slane %v4230, 1
  %v4232 = vmax.f32 %v4230, %v4231
  %v4233 = vrot.slane %v4116, 4
  %v4234 = vmax.f32 %v4116, %v4233
  %v4235 = vrot.slane %v4234, 2
  %v4236 = vmax.f32 %v4234, %v4235
  %v4237 = vrot.slane %v4236, 1
  %v4238 = vmax.f32 %v4236, %v4237
  %v4239 = vrot.slane %v4117, 4
  %v4240 = vmax.f32 %v4117, %v4239
  %v4241 = vrot.slane %v4240, 2
  %v4242 = vmax.f32 %v4240, %v4241
  %v4243 = vrot.slane %v4242, 1
  %v4244 = vmax.f32 %v4242, %v4243
  %v4245 = vrot.slane %v4118, 4
  %v4246 = vmax.f32 %v4118, %v4245
  %v4247 = vrot.slane %v4246, 2
  %v4248 = vmax.f32 %v4246, %v4247
  %v4249 = vrot.slane %v4248, 1
  %v4250 = vmax.f32 %v4248, %v4249
  %v4251 = vrot.slane %v4119, 4
  %v4252 = vmax.f32 %v4119, %v4251
  %v4253 = vrot.slane %v4252, 2
  %v4254 = vmax.f32 %v4252, %v4253
  %v4255 = vrot.slane %v4254, 1
  %v4256 = vmax.f32 %v4254, %v4255
  %v4257 = vrot.slane %v4120, 4
  %v4258 = vmax.f32 %v4120, %v4257
  %v4259 = vrot.slane %v4258, 2
  %v4260 = vmax.f32 %v4258, %v4259
  %v4261 = vrot.slane %v4260, 1
  %v4262 = vmax.f32 %v4260, %v4261
  %v4263 = vrot.slane %v4121, 4
  %v4264 = vmax.f32 %v4121, %v4263
  %v4265 = vrot.slane %v4264, 2
  %v4266 = vmax.f32 %v4264, %v4265
  %v4267 = vrot.slane %v4266, 1
  %v4268 = vmax.f32 %v4266, %v4267
  %v4269 = vrot.slane %v4122, 4
  %v4270 = vmax.f32 %v4122, %v4269
  %v4271 = vrot.slane %v4270, 2
  %v4272 = vmax.f32 %v4270, %v4271
  %v4273 = vrot.slane %v4272, 1
  %v4274 = vmax.f32 %v4272, %v4273
  %v4275 = vrot.slane %v4123, 4
  %v4276 = vmax.f32 %v4123, %v4275
  %v4277 = vrot.slane %v4276, 2
  %v4278 = vmax.f32 %v4276, %v4277
  %v4279 = vrot.slane %v4278, 1
  %v4280 = vmax.f32 %v4278, %v4279
  %v4281 = vrot.slane %v4124, 4
  %v4282 = vmax.f32 %v4124, %v4281
  %v4283 = vrot.slane %v4282, 2
  %v4284 = vmax.f32 %v4282, %v4283
  %v4285 = vrot.slane %v4284, 1
  %v4286 = vmax.f32 %v4284, %v4285
  %v4287 = vrot.slane %v4125, 4
  %v4288 = vmax.f32 %v4125, %v4287
  %v4289 = vrot.slane %v4288, 2
  %v4290 = vmax.f32 %v4288, %v4289
  %v4291 = vrot.slane %v4290, 1
  %v4292 = vmax.f32 %v4290, %v4291
  %v4293 = vrot.slane %v4126, 4
  %v4294 = vmax.f32 %v4126, %v4293
  %v4295 = vrot.slane %v4294, 2
  %v4296 = vmax.f32 %v4294, %v4295
  %v4297 = vrot.slane %v4296, 1
  %v4298 = vmax.f32 %v4296, %v4297
  %v4299 = vrot.slane %v4127, 4
  %v4300 = vmax.f32 %v4127, %v4299
  %v4301 = vrot.slane %v4300, 2
  %v4302 = vmax.f32 %v4300, %v4301
  %v4303 = vrot.slane %v4302, 1
  %v4304 = vmax.f32 %v4302, %v4303
  %v4305 = vrot.slane %v4128, 4
  %v4306 = vmax.f32 %v4128, %v4305
  %v4307 = vrot.slane %v4306, 2
  %v4308 = vmax.f32 %v4306, %v4307
  %v4309 = vrot.slane %v4308, 1
  %v4310 = vmax.f32 %v4308, %v4309
  %v4311 = vrot.slane %v4129, 4
  %v4312 = vmax.f32 %v4129, %v4311
  %v4313 = vrot.slane %v4312, 2
  %v4314 = vmax.f32 %v4312, %v4313
  %v4315 = vrot.slane %v4314, 1
  %v4316 = vmax.f32 %v4314, %v4315
  %v4317 = vrot.slane %v4130, 4
  %v4318 = vmax.f32 %v4130, %v4317
  %v4319 = vrot.slane %v4318, 2
  %v4320 = vmax.f32 %v4318, %v4319
  %v4321 = vrot.slane %v4320, 1
  %v4322 = vmax.f32 %v4320, %v4321
  %v4323 = vmax.f32 %v4067, %v4136
  %v4324 = vmax.f32 %v4068, %v4142
  %v4325 = vmax.f32 %v4069, %v4148
  %v4326 = vmax.f32 %v4070, %v4154
  %v4327 = vmax.f32 %v4071, %v4160
  %v4328 = vmax.f32 %v4072, %v4166
  %v4329 = vmax.f32 %v4073, %v4172
  %v4330 = vmax.f32 %v4074, %v4178
  %v4331 = vmax.f32 %v4075, %v4184
  %v4332 = vmax.f32 %v4076, %v4190
  %v4333 = vmax.f32 %v4077, %v4196
  %v4334 = vmax.f32 %v4078, %v4202
  %v4335 = vmax.f32 %v4079, %v4208
  %v4336 = vmax.f32 %v4080, %v4214
  %v4337 = vmax.f32 %v4081, %v4220
  %v4338 = vmax.f32 %v4082, %v4226
  %v4339 = vmax.f32 %v4083, %v4232
  %v4340 = vmax.f32 %v4084, %v4238
  %v4341 = vmax.f32 %v4085, %v4244
  %v4342 = vmax.f32 %v4086, %v4250
  %v4343 = vmax.f32 %v4087, %v4256
  %v4344 = vmax.f32 %v4088, %v4262
  %v4345 = vmax.f32 %v4089, %v4268
  %v4346 = vmax.f32 %v4090, %v4274
  %v4347 = vmax.f32 %v4091, %v4280
  %v4348 = vmax.f32 %v4092, %v4286
  %v4349 = vmax.f32 %v4093, %v4292
  %v4350 = vmax.f32 %v4094, %v4298
  %v4351 = vmax.f32 %v4095, %v4304
  %v4352 = vmax.f32 %v4096, %v4310
  %v4353 = vmax.f32 %v4097, %v4316
  %v4354 = vmax.f32 %v4098, %v4322
  %v4355 = vmul.f32 %v1123, %v3841
  %v4356 = vmul.f32 %v1129, %v3841
  %v4357 = vmul.f32 %v1135, %v3841
  %v4358 = vmul.f32 %v1141, %v3841
  %v4359 = vmul.f32 %v1147, %v3841
  %v4360 = vmul.f32 %v1153, %v3841
  %v4361 = vmul.f32 %v1159, %v3841
  %v4362 = vmul.f32 %v1165, %v3841
  %v4363 = vmul.f32 %v1171, %v3841
  %v4364 = vmul.f32 %v1177, %v3841
  %v4365 = vmul.f32 %v1183, %v3841
  %v4366 = vmul.f32 %v1189, %v3841
  %v4367 = vmul.f32 %v1195, %v3841
  %v4368 = vmul.f32 %v1201, %v3841
  %v4369 = vmul.f32 %v1207, %v3841
  %v4370 = vmul.f32 %v1213, %v3841
  %v4371 = vmul.f32 %v1219, %v3841
  %v4372 = vmul.f32 %v1225, %v3841
  %v4373 = vmul.f32 %v1231, %v3841
  %v4374 = vmul.f32 %v1237, %v3841
  %v4375 = vmul.f32 %v1243, %v3841
  %v4376 = vmul.f32 %v1249, %v3841
  %v4377 = vmul.f32 %v1255, %v3841
  %v4378 = vmul.f32 %v1261, %v3841
  %v4379 = vmul.f32 %v1267, %v3841
  %v4380 = vmul.f32 %v1273, %v3841
  %v4381 = vmul.f32 %v1279, %v3841
  %v4382 = vmul.f32 %v1285, %v3841
  %v4383 = vmul.f32 %v1291, %v3841
  %v4384 = vmul.f32 %v1297, %v3841
  %v4385 = vmul.f32 %v1303, %v3841
  %v4386 = vmul.f32 %v1309, %v3841
  %v4387 = vrot.slane %v4355, 4
  %v4388 = vmax.f32 %v4355, %v4387
  %v4389 = vrot.slane %v4388, 2
  %v4390 = vmax.f32 %v4388, %v4389
  %v4391 = vrot.slane %v4390, 1
  %v4392 = vmax.f32 %v4390, %v4391
  %v4393 = vrot.slane %v4356, 4
  %v4394 = vmax.f32 %v4356, %v4393
  %v4395 = vrot.slane %v4394, 2
  %v4396 = vmax.f32 %v4394, %v4395
  %v4397 = vrot.slane %v4396, 1
  %v4398 = vmax.f32 %v4396, %v4397
  %v4399 = vrot.slane %v4357, 4
  %v4400 = vmax.f32 %v4357, %v4399
  %v4401 = vrot.slane %v4400, 2
  %v4402 = vmax.f32 %v4400, %v4401
  %v4403 = vrot.slane %v4402, 1
  %v4404 = vmax.f32 %v4402, %v4403
  %v4405 = vrot.slane %v4358, 4
  %v4406 = vmax.f32 %v4358, %v4405
  %v4407 = vrot.slane %v4406, 2
  %v4408 = vmax.f32 %v4406, %v4407
  %v4409 = vrot.slane %v4408, 1
  %v4410 = vmax.f32 %v4408, %v4409
  %v4411 = vrot.slane %v4359, 4
  %v4412 = vmax.f32 %v4359, %v4411
  %v4413 = vrot.slane %v4412, 2
  %v4414 = vmax.f32 %v4412, %v4413
  %v4415 = vrot.slane %v4414, 1
  %v4416 = vmax.f32 %v4414, %v4415
  %v4417 = vrot.slane %v4360, 4
  %v4418 = vmax.f32 %v4360, %v4417
  %v4419 = vrot.slane %v4418, 2
  %v4420 = vmax.f32 %v4418, %v4419
  %v4421 = vrot.slane %v4420, 1
  %v4422 = vmax.f32 %v4420, %v4421
  %v4423 = vrot.slane %v4361, 4
  %v4424 = vmax.f32 %v4361, %v4423
  %v4425 = vrot.slane %v4424, 2
  %v4426 = vmax.f32 %v4424, %v4425
  %v4427 = vrot.slane %v4426, 1
  %v4428 = vmax.f32 %v4426, %v4427
  %v4429 = vrot.slane %v4362, 4
  %v4430 = vmax.f32 %v4362, %v4429
  %v4431 = vrot.slane %v4430, 2
  %v4432 = vmax.f32 %v4430, %v4431
  %v4433 = vrot.slane %v4432, 1
  %v4434 = vmax.f32 %v4432, %v4433
  %v4435 = vrot.slane %v4363, 4
  %v4436 = vmax.f32 %v4363, %v4435
  %v4437 = vrot.slane %v4436, 2
  %v4438 = vmax.f32 %v4436, %v4437
  %v4439 = vrot.slane %v4438, 1
  %v4440 = vmax.f32 %v4438, %v4439
  %v4441 = vrot.slane %v4364, 4
  %v4442 = vmax.f32 %v4364, %v4441
  %v4443 = vrot.slane %v4442, 2
  %v4444 = vmax.f32 %v4442, %v4443
  %v4445 = vrot.slane %v4444, 1
  %v4446 = vmax.f32 %v4444, %v4445
  %v4447 = vrot.slane %v4365, 4
  %v4448 = vmax.f32 %v4365, %v4447
  %v4449 = vrot.slane %v4448, 2
  %v4450 = vmax.f32 %v4448, %v4449
  %v4451 = vrot.slane %v4450, 1
  %v4452 = vmax.f32 %v4450, %v4451
  %v4453 = vrot.slane %v4366, 4
  %v4454 = vmax.f32 %v4366, %v4453
  %v4455 = vrot.slane %v4454, 2
  %v4456 = vmax.f32 %v4454, %v4455
  %v4457 = vrot.slane %v4456, 1
  %v4458 = vmax.f32 %v4456, %v4457
  %v4459 = vrot.slane %v4367, 4
  %v4460 = vmax.f32 %v4367, %v4459
  %v4461 = vrot.slane %v4460, 2
  %v4462 = vmax.f32 %v4460, %v4461
  %v4463 = vrot.slane %v4462, 1
  %v4464 = vmax.f32 %v4462, %v4463
  %v4465 = vrot.slane %v4368, 4
  %v4466 = vmax.f32 %v4368, %v4465
  %v4467 = vrot.slane %v4466, 2
  %v4468 = vmax.f32 %v4466, %v4467
  %v4469 = vrot.slane %v4468, 1
  %v4470 = vmax.f32 %v4468, %v4469
  %v4471 = vrot.slane %v4369, 4
  %v4472 = vmax.f32 %v4369, %v4471
  %v4473 = vrot.slane %v4472, 2
  %v4474 = vmax.f32 %v4472, %v4473
  %v4475 = vrot.slane %v4474, 1
  %v4476 = vmax.f32 %v4474, %v4475
  %v4477 = vrot.slane %v4370, 4
  %v4478 = vmax.f32 %v4370, %v4477
  %v4479 = vrot.slane %v4478, 2
  %v4480 = vmax.f32 %v4478, %v4479
  %v4481 = vrot.slane %v4480, 1
  %v4482 = vmax.f32 %v4480, %v4481
  %v4483 = vrot.slane %v4371, 4
  %v4484 = vmax.f32 %v4371, %v4483
  %v4485 = vrot.slane %v4484, 2
  %v4486 = vmax.f32 %v4484, %v4485
  %v4487 = vrot.slane %v4486, 1
  %v4488 = vmax.f32 %v4486, %v4487
  %v4489 = vrot.slane %v4372, 4
  %v4490 = vmax.f32 %v4372, %v4489
  %v4491 = vrot.slane %v4490, 2
  %v4492 = vmax.f32 %v4490, %v4491
  %v4493 = vrot.slane %v4492, 1
  %v4494 = vmax.f32 %v4492, %v4493
  %v4495 = vrot.slane %v4373, 4
  %v4496 = vmax.f32 %v4373, %v4495
  %v4497 = vrot.slane %v4496, 2
  %v4498 = vmax.f32 %v4496, %v4497
  %v4499 = vrot.slane %v4498, 1
  %v4500 = vmax.f32 %v4498, %v4499
  %v4501 = vrot.slane %v4374, 4
  %v4502 = vmax.f32 %v4374, %v4501
  %v4503 = vrot.slane %v4502, 2
  %v4504 = vmax.f32 %v4502, %v4503
  %v4505 = vrot.slane %v4504, 1
  %v4506 = vmax.f32 %v4504, %v4505
  %v4507 = vrot.slane %v4375, 4
  %v4508 = vmax.f32 %v4375, %v4507
  %v4509 = vrot.slane %v4508, 2
  %v4510 = vmax.f32 %v4508, %v4509
  %v4511 = vrot.slane %v4510, 1
  %v4512 = vmax.f32 %v4510, %v4511
  %v4513 = vrot.slane %v4376, 4
  %v4514 = vmax.f32 %v4376, %v4513
  %v4515 = vrot.slane %v4514, 2
  %v4516 = vmax.f32 %v4514, %v4515
  %v4517 = vrot.slane %v4516, 1
  %v4518 = vmax.f32 %v4516, %v4517
  %v4519 = vrot.slane %v4377, 4
  %v4520 = vmax.f32 %v4377, %v4519
  %v4521 = vrot.slane %v4520, 2
  %v4522 = vmax.f32 %v4520, %v4521
  %v4523 = vrot.slane %v4522, 1
  %v4524 = vmax.f32 %v4522, %v4523
  %v4525 = vrot.slane %v4378, 4
  %v4526 = vmax.f32 %v4378, %v4525
  %v4527 = vrot.slane %v4526, 2
  %v4528 = vmax.f32 %v4526, %v4527
  %v4529 = vrot.slane %v4528, 1
  %v4530 = vmax.f32 %v4528, %v4529
  %v4531 = vrot.slane %v4379, 4
  %v4532 = vmax.f32 %v4379, %v4531
  %v4533 = vrot.slane %v4532, 2
  %v4534 = vmax.f32 %v4532, %v4533
  %v4535 = vrot.slane %v4534, 1
  %v4536 = vmax.f32 %v4534, %v4535
  %v4537 = vrot.slane %v4380, 4
  %v4538 = vmax.f32 %v4380, %v4537
  %v4539 = vrot.slane %v4538, 2
  %v4540 = vmax.f32 %v4538, %v4539
  %v4541 = vrot.slane %v4540, 1
  %v4542 = vmax.f32 %v4540, %v4541
  %v4543 = vrot.slane %v4381, 4
  %v4544 = vmax.f32 %v4381, %v4543
  %v4545 = vrot.slane %v4544, 2
  %v4546 = vmax.f32 %v4544, %v4545
  %v4547 = vrot.slane %v4546, 1
  %v4548 = vmax.f32 %v4546, %v4547
  %v4549 = vrot.slane %v4382, 4
  %v4550 = vmax.f32 %v4382, %v4549
  %v4551 = vrot.slane %v4550, 2
  %v4552 = vmax.f32 %v4550, %v4551
  %v4553 = vrot.slane %v4552, 1
  %v4554 = vmax.f32 %v4552, %v4553
  %v4555 = vrot.slane %v4383, 4
  %v4556 = vmax.f32 %v4383, %v4555
  %v4557 = vrot.slane %v4556, 2
  %v4558 = vmax.f32 %v4556, %v4557
  %v4559 = vrot.slane %v4558, 1
  %v4560 = vmax.f32 %v4558, %v4559
  %v4561 = vrot.slane %v4384, 4
  %v4562 = vmax.f32 %v4384, %v4561
  %v4563 = vrot.slane %v4562, 2
  %v4564 = vmax.f32 %v4562, %v4563
  %v4565 = vrot.slane %v4564, 1
  %v4566 = vmax.f32 %v4564, %v4565
  %v4567 = vrot.slane %v4385, 4
  %v4568 = vmax.f32 %v4385, %v4567
  %v4569 = vrot.slane %v4568, 2
  %v4570 = vmax.f32 %v4568, %v4569
  %v4571 = vrot.slane %v4570, 1
  %v4572 = vmax.f32 %v4570, %v4571
  %v4573 = vrot.slane %v4386, 4
  %v4574 = vmax.f32 %v4386, %v4573
  %v4575 = vrot.slane %v4574, 2
  %v4576 = vmax.f32 %v4574, %v4575
  %v4577 = vrot.slane %v4576, 1
  %v4578 = vmax.f32 %v4576, %v4577
  %v4579 = vmax.f32 %v4323, %v4392
  %v4580 = vmax.f32 %v4324, %v4398
  %v4581 = vmax.f32 %v4325, %v4404
  %v4582 = vmax.f32 %v4326, %v4410
  %v4583 = vmax.f32 %v4327, %v4416
  %v4584 = vmax.f32 %v4328, %v4422
  %v4585 = vmax.f32 %v4329, %v4428
  %v4586 = vmax.f32 %v4330, %v4434
  %v4587 = vmax.f32 %v4331, %v4440
  %v4588 = vmax.f32 %v4332, %v4446
  %v4589 = vmax.f32 %v4333, %v4452
  %v4590 = vmax.f32 %v4334, %v4458
  %v4591 = vmax.f32 %v4335, %v4464
  %v4592 = vmax.f32 %v4336, %v4470
  %v4593 = vmax.f32 %v4337, %v4476
  %v4594 = vmax.f32 %v4338, %v4482
  %v4595 = vmax.f32 %v4339, %v4488
  %v4596 = vmax.f32 %v4340, %v4494
  %v4597 = vmax.f32 %v4341, %v4500
  %v4598 = vmax.f32 %v4342, %v4506
  %v4599 = vmax.f32 %v4343, %v4512
  %v4600 = vmax.f32 %v4344, %v4518
  %v4601 = vmax.f32 %v4345, %v4524
  %v4602 = vmax.f32 %v4346, %v4530
  %v4603 = vmax.f32 %v4347, %v4536
  %v4604 = vmax.f32 %v4348, %v4542
  %v4605 = vmax.f32 %v4349, %v4548
  %v4606 = vmax.f32 %v4350, %v4554
  %v4607 = vmax.f32 %v4351, %v4560
  %v4608 = vmax.f32 %v4352, %v4566
  %v4609 = vmax.f32 %v4353, %v4572
  %v4610 = vmax.f32 %v4354, %v4578
  %v4611 = vmul.f32 %v1571, %v3842
  %v4612 = vmul.f32 %v1577, %v3842
  %v4613 = vmul.f32 %v1583, %v3842
  %v4614 = vmul.f32 %v1589, %v3842
  %v4615 = vmul.f32 %v1595, %v3842
  %v4616 = vmul.f32 %v1601, %v3842
  %v4617 = vmul.f32 %v1607, %v3842
  %v4618 = vmul.f32 %v1613, %v3842
  %v4619 = vmul.f32 %v1619, %v3842
  %v4620 = vmul.f32 %v1625, %v3842
  %v4621 = vmul.f32 %v1631, %v3842
  %v4622 = vmul.f32 %v1637, %v3842
  %v4623 = vmul.f32 %v1643, %v3842
  %v4624 = vmul.f32 %v1649, %v3842
  %v4625 = vmul.f32 %v1655, %v3842
  %v4626 = vmul.f32 %v1661, %v3842
  %v4627 = vmul.f32 %v1667, %v3842
  %v4628 = vmul.f32 %v1673, %v3842
  %v4629 = vmul.f32 %v1679, %v3842
  %v4630 = vmul.f32 %v1685, %v3842
  %v4631 = vmul.f32 %v1691, %v3842
  %v4632 = vmul.f32 %v1697, %v3842
  %v4633 = vmul.f32 %v1703, %v3842
  %v4634 = vmul.f32 %v1709, %v3842
  %v4635 = vmul.f32 %v1715, %v3842
  %v4636 = vmul.f32 %v1721, %v3842
  %v4637 = vmul.f32 %v1727, %v3842
  %v4638 = vmul.f32 %v1733, %v3842
  %v4639 = vmul.f32 %v1739, %v3842
  %v4640 = vmul.f32 %v1745, %v3842
  %v4641 = vmul.f32 %v1751, %v3842
  %v4642 = vmul.f32 %v1757, %v3842
  %v4643 = vrot.slane %v4611, 4
  %v4644 = vmax.f32 %v4611, %v4643
  %v4645 = vrot.slane %v4644, 2
  %v4646 = vmax.f32 %v4644, %v4645
  %v4647 = vrot.slane %v4646, 1
  %v4648 = vmax.f32 %v4646, %v4647
  %v4649 = vrot.slane %v4612, 4
  %v4650 = vmax.f32 %v4612, %v4649
  %v4651 = vrot.slane %v4650, 2
  %v4652 = vmax.f32 %v4650, %v4651
  %v4653 = vrot.slane %v4652, 1
  %v4654 = vmax.f32 %v4652, %v4653
  %v4655 = vrot.slane %v4613, 4
  %v4656 = vmax.f32 %v4613, %v4655
  %v4657 = vrot.slane %v4656, 2
  %v4658 = vmax.f32 %v4656, %v4657
  %v4659 = vrot.slane %v4658, 1
  %v4660 = vmax.f32 %v4658, %v4659
  %v4661 = vrot.slane %v4614, 4
  %v4662 = vmax.f32 %v4614, %v4661
  %v4663 = vrot.slane %v4662, 2
  %v4664 = vmax.f32 %v4662, %v4663
  %v4665 = vrot.slane %v4664, 1
  %v4666 = vmax.f32 %v4664, %v4665
  %v4667 = vrot.slane %v4615, 4
  %v4668 = vmax.f32 %v4615, %v4667
  %v4669 = vrot.slane %v4668, 2
  %v4670 = vmax.f32 %v4668, %v4669
  %v4671 = vrot.slane %v4670, 1
  %v4672 = vmax.f32 %v4670, %v4671
  %v4673 = vrot.slane %v4616, 4
  %v4674 = vmax.f32 %v4616, %v4673
  %v4675 = vrot.slane %v4674, 2
  %v4676 = vmax.f32 %v4674, %v4675
  %v4677 = vrot.slane %v4676, 1
  %v4678 = vmax.f32 %v4676, %v4677
  %v4679 = vrot.slane %v4617, 4
  %v4680 = vmax.f32 %v4617, %v4679
  %v4681 = vrot.slane %v4680, 2
  %v4682 = vmax.f32 %v4680, %v4681
  %v4683 = vrot.slane %v4682, 1
  %v4684 = vmax.f32 %v4682, %v4683
  %v4685 = vrot.slane %v4618, 4
  %v4686 = vmax.f32 %v4618, %v4685
  %v4687 = vrot.slane %v4686, 2
  %v4688 = vmax.f32 %v4686, %v4687
  %v4689 = vrot.slane %v4688, 1
  %v4690 = vmax.f32 %v4688, %v4689
  %v4691 = vrot.slane %v4619, 4
  %v4692 = vmax.f32 %v4619, %v4691
  %v4693 = vrot.slane %v4692, 2
  %v4694 = vmax.f32 %v4692, %v4693
  %v4695 = vrot.slane %v4694, 1
  %v4696 = vmax.f32 %v4694, %v4695
  %v4697 = vrot.slane %v4620, 4
  %v4698 = vmax.f32 %v4620, %v4697
  %v4699 = vrot.slane %v4698, 2
  %v4700 = vmax.f32 %v4698, %v4699
  %v4701 = vrot.slane %v4700, 1
  %v4702 = vmax.f32 %v4700, %v4701
  %v4703 = vrot.slane %v4621, 4
  %v4704 = vmax.f32 %v4621, %v4703
  %v4705 = vrot.slane %v4704, 2
  %v4706 = vmax.f32 %v4704, %v4705
  %v4707 = vrot.slane %v4706, 1
  %v4708 = vmax.f32 %v4706, %v4707
  %v4709 = vrot.slane %v4622, 4
  %v4710 = vmax.f32 %v4622, %v4709
  %v4711 = vrot.slane %v4710, 2
  %v4712 = vmax.f32 %v4710, %v4711
  %v4713 = vrot.slane %v4712, 1
  %v4714 = vmax.f32 %v4712, %v4713
  %v4715 = vrot.slane %v4623, 4
  %v4716 = vmax.f32 %v4623, %v4715
  %v4717 = vrot.slane %v4716, 2
  %v4718 = vmax.f32 %v4716, %v4717
  %v4719 = vrot.slane %v4718, 1
  %v4720 = vmax.f32 %v4718, %v4719
  %v4721 = vrot.slane %v4624, 4
  %v4722 = vmax.f32 %v4624, %v4721
  %v4723 = vrot.slane %v4722, 2
  %v4724 = vmax.f32 %v4722, %v4723
  %v4725 = vrot.slane %v4724, 1
  %v4726 = vmax.f32 %v4724, %v4725
  %v4727 = vrot.slane %v4625, 4
  %v4728 = vmax.f32 %v4625, %v4727
  %v4729 = vrot.slane %v4728, 2
  %v4730 = vmax.f32 %v4728, %v4729
  %v4731 = vrot.slane %v4730, 1
  %v4732 = vmax.f32 %v4730, %v4731
  %v4733 = vrot.slane %v4626, 4
  %v4734 = vmax.f32 %v4626, %v4733
  %v4735 = vrot.slane %v4734, 2
  %v4736 = vmax.f32 %v4734, %v4735
  %v4737 = vrot.slane %v4736, 1
  %v4738 = vmax.f32 %v4736, %v4737
  %v4739 = vrot.slane %v4627, 4
  %v4740 = vmax.f32 %v4627, %v4739
  %v4741 = vrot.slane %v4740, 2
  %v4742 = vmax.f32 %v4740, %v4741
  %v4743 = vrot.slane %v4742, 1
  %v4744 = vmax.f32 %v4742, %v4743
  %v4745 = vrot.slane %v4628, 4
  %v4746 = vmax.f32 %v4628, %v4745
  %v4747 = vrot.slane %v4746, 2
  %v4748 = vmax.f32 %v4746, %v4747
  %v4749 = vrot.slane %v4748, 1
  %v4750 = vmax.f32 %v4748, %v4749
  %v4751 = vrot.slane %v4629, 4
  %v4752 = vmax.f32 %v4629, %v4751
  %v4753 = vrot.slane %v4752, 2
  %v4754 = vmax.f32 %v4752, %v4753
  %v4755 = vrot.slane %v4754, 1
  %v4756 = vmax.f32 %v4754, %v4755
  %v4757 = vrot.slane %v4630, 4
  %v4758 = vmax.f32 %v4630, %v4757
  %v4759 = vrot.slane %v4758, 2
  %v4760 = vmax.f32 %v4758, %v4759
  %v4761 = vrot.slane %v4760, 1
  %v4762 = vmax.f32 %v4760, %v4761
  %v4763 = vrot.slane %v4631, 4
  %v4764 = vmax.f32 %v4631, %v4763
  %v4765 = vrot.slane %v4764, 2
  %v4766 = vmax.f32 %v4764, %v4765
  %v4767 = vrot.slane %v4766, 1
  %v4768 = vmax.f32 %v4766, %v4767
  %v4769 = vrot.slane %v4632, 4
  %v4770 = vmax.f32 %v4632, %v4769
  %v4771 = vrot.slane %v4770, 2
  %v4772 = vmax.f32 %v4770, %v4771
  %v4773 = vrot.slane %v4772, 1
  %v4774 = vmax.f32 %v4772, %v4773
  %v4775 = vrot.slane %v4633, 4
  %v4776 = vmax.f32 %v4633, %v4775
  %v4777 = vrot.slane %v4776, 2
  %v4778 = vmax.f32 %v4776, %v4777
  %v4779 = vrot.slane %v4778, 1
  %v4780 = vmax.f32 %v4778, %v4779
  %v4781 = vrot.slane %v4634, 4
  %v4782 = vmax.f32 %v4634, %v4781
  %v4783 = vrot.slane %v4782, 2
  %v4784 = vmax.f32 %v4782, %v4783
  %v4785 = vrot.slane %v4784, 1
  %v4786 = vmax.f32 %v4784, %v4785
  %v4787 = vrot.slane %v4635, 4
  %v4788 = vmax.f32 %v4635, %v4787
  %v4789 = vrot.slane %v4788, 2
  %v4790 = vmax.f32 %v4788, %v4789
  %v4791 = vrot.slane %v4790, 1
  %v4792 = vmax.f32 %v4790, %v4791
  %v4793 = vrot.slane %v4636, 4
  %v4794 = vmax.f32 %v4636, %v4793
  %v4795 = vrot.slane %v4794, 2
  %v4796 = vmax.f32 %v4794, %v4795
  %v4797 = vrot.slane %v4796, 1
  %v4798 = vmax.f32 %v4796, %v4797
  %v4799 = vrot.slane %v4637, 4
  %v4800 = vmax.f32 %v4637, %v4799
  %v4801 = vrot.slane %v4800, 2
  %v4802 = vmax.f32 %v4800, %v4801
  %v4803 = vrot.slane %v4802, 1
  %v4804 = vmax.f32 %v4802, %v4803
  %v4805 = vrot.slane %v4638, 4
  %v4806 = vmax.f32 %v4638, %v4805
  %v4807 = vrot.slane %v4806, 2
  %v4808 = vmax.f32 %v4806, %v4807
  %v4809 = vrot.slane %v4808, 1
  %v4810 = vmax.f32 %v4808, %v4809
  %v4811 = vrot.slane %v4639, 4
  %v4812 = vmax.f32 %v4639, %v4811
  %v4813 = vrot.slane %v4812, 2
  %v4814 = vmax.f32 %v4812, %v4813
  %v4815 = vrot.slane %v4814, 1
  %v4816 = vmax.f32 %v4814, %v4815
  %v4817 = vrot.slane %v4640, 4
  %v4818 = vmax.f32 %v4640, %v4817
  %v4819 = vrot.slane %v4818, 2
  %v4820 = vmax.f32 %v4818, %v4819
  %v4821 = vrot.slane %v4820, 1
  %v4822 = vmax.f32 %v4820, %v4821
  %v4823 = vrot.slane %v4641, 4
  %v4824 = vmax.f32 %v4641, %v4823
  %v4825 = vrot.slane %v4824, 2
  %v4826 = vmax.f32 %v4824, %v4825
  %v4827 = vrot.slane %v4826, 1
  %v4828 = vmax.f32 %v4826, %v4827
  %v4829 = vrot.slane %v4642, 4
  %v4830 = vmax.f32 %v4642, %v4829
  %v4831 = vrot.slane %v4830, 2
  %v4832 = vmax.f32 %v4830, %v4831
  %v4833 = vrot.slane %v4832, 1
  %v4834 = vmax.f32 %v4832, %v4833
  %v4835 = vmax.f32 %v4579, %v4648
  %v4836 = vmax.f32 %v4580, %v4654
  %v4837 = vmax.f32 %v4581, %v4660
  %v4838 = vmax.f32 %v4582, %v4666
  %v4839 = vmax.f32 %v4583, %v4672
  %v4840 = vmax.f32 %v4584, %v4678
  %v4841 = vmax.f32 %v4585, %v4684
  %v4842 = vmax.f32 %v4586, %v4690
  %v4843 = vmax.f32 %v4587, %v4696
  %v4844 = vmax.f32 %v4588, %v4702
  %v4845 = vmax.f32 %v4589, %v4708
  %v4846 = vmax.f32 %v4590, %v4714
  %v4847 = vmax.f32 %v4591, %v4720
  %v4848 = vmax.f32 %v4592, %v4726
  %v4849 = vmax.f32 %v4593, %v4732
  %v4850 = vmax.f32 %v4594, %v4738
  %v4851 = vmax.f32 %v4595, %v4744
  %v4852 = vmax.f32 %v4596, %v4750
  %v4853 = vmax.f32 %v4597, %v4756
  %v4854 = vmax.f32 %v4598, %v4762
  %v4855 = vmax.f32 %v4599, %v4768
  %v4856 = vmax.f32 %v4600, %v4774
  %v4857 = vmax.f32 %v4601, %v4780
  %v4858 = vmax.f32 %v4602, %v4786
  %v4859 = vmax.f32 %v4603, %v4792
  %v4860 = vmax.f32 %v4604, %v4798
  %v4861 = vmax.f32 %v4605, %v4804
  %v4862 = vmax.f32 %v4606, %v4810
  %v4863 = vmax.f32 %v4607, %v4816
  %v4864 = vmax.f32 %v4608, %v4822
  %v4865 = vmax.f32 %v4609, %v4828
  %v4866 = vmax.f32 %v4610, %v4834
  %v4867 = vpack.c.bf16 %v4835, %v4835
  %v4868 = vpack.c.bf16 %v4836, %v4836
  %v4869 = vpack.c.bf16 %v4837, %v4837
  %v4870 = vpack.c.bf16 %v4838, %v4838
  %v4871 = vpack.c.bf16 %v4839, %v4839
  %v4872 = vpack.c.bf16 %v4840, %v4840
  %v4873 = vpack.c.bf16 %v4841, %v4841
  %v4874 = vpack.c.bf16 %v4842, %v4842
  %v4875 = vpack.c.bf16 %v4843, %v4843
  %v4876 = vpack.c.bf16 %v4844, %v4844
  %v4877 = vpack.c.bf16 %v4845, %v4845
  %v4878 = vpack.c.bf16 %v4846, %v4846
  %v4879 = vpack.c.bf16 %v4847, %v4847
  %v4880 = vpack.c.bf16 %v4848, %v4848
  %v4881 = vpack.c.bf16 %v4849, %v4849
  %v4882 = vpack.c.bf16 %v4850, %v4850
  %v4883 = vpack.c.bf16 %v4851, %v4851
  %v4884 = vpack.c.bf16 %v4852, %v4852
  %v4885 = vpack.c.bf16 %v4853, %v4853
  %v4886 = vpack.c.bf16 %v4854, %v4854
  %v4887 = vpack.c.bf16 %v4855, %v4855
  %v4888 = vpack.c.bf16 %v4856, %v4856
  %v4889 = vpack.c.bf16 %v4857, %v4857
  %v4890 = vpack.c.bf16 %v4858, %v4858
  %v4891 = vpack.c.bf16 %v4859, %v4859
  %v4892 = vpack.c.bf16 %v4860, %v4860
  %v4893 = vpack.c.bf16 %v4861, %v4861
  %v4894 = vpack.c.bf16 %v4862, %v4862
  %v4895 = vpack.c.bf16 %v4863, %v4863
  %v4896 = vpack.c.bf16 %v4864, %v4864
  %v4897 = vpack.c.bf16 %v4865, %v4865
  %v4898 = vpack.c.bf16 %v4866, %v4866
  %v4931 = vunpack.c.l.b16 %v4867
  %v4932 = vunpack.c.l.b16 %v4868
  %v4933 = vunpack.c.l.b16 %v4869
  %v4934 = vunpack.c.l.b16 %v4870
  %v4935 = vunpack.c.l.b16 %v4871
  %v4936 = vunpack.c.l.b16 %v4872
  %v4937 = vunpack.c.l.b16 %v4873
  %v4938 = vunpack.c.l.b16 %v4874
  %v4939 = vunpack.c.l.b16 %v4875
  %v4940 = vunpack.c.l.b16 %v4876
  %v4941 = vunpack.c.l.b16 %v4877
  %v4942 = vunpack.c.l.b16 %v4878
  %v4943 = vunpack.c.l.b16 %v4879
  %v4944 = vunpack.c.l.b16 %v4880
  %v4945 = vunpack.c.l.b16 %v4881
  %v4946 = vunpack.c.l.b16 %v4882
  %v4947 = vunpack.c.l.b16 %v4883
  %v4948 = vunpack.c.l.b16 %v4884
  %v4949 = vunpack.c.l.b16 %v4885
  %v4950 = vunpack.c.l.b16 %v4886
  %v4951 = vunpack.c.l.b16 %v4887
  %v4952 = vunpack.c.l.b16 %v4888
  %v4953 = vunpack.c.l.b16 %v4889
  %v4954 = vunpack.c.l.b16 %v4890
  %v4955 = vunpack.c.l.b16 %v4891
  %v4956 = vunpack.c.l.b16 %v4892
  %v4957 = vunpack.c.l.b16 %v4893
  %v4958 = vunpack.c.l.b16 %v4894
  %v4959 = vunpack.c.l.b16 %v4895
  %v4960 = vunpack.c.l.b16 %v4896
  %v4961 = vunpack.c.l.b16 %v4897
  %v4962 = vunpack.c.l.b16 %v4898
  %v4963 = vsel %vm2110, %v4932, %v4931
  %v4964 = vsel %vm2112, %v4933, %v4963
  %v4965 = vsel %vm2114, %v4934, %v4964
  %v4966 = vsel %vm2116, %v4935, %v4965
  %v4967 = vsel %vm2118, %v4936, %v4966
  %v4968 = vsel %vm2120, %v4937, %v4967
  %v4969 = vsel %vm2122, %v4938, %v4968
  %v4970 = vsel %vm2110, %v4940, %v4939
  %v4971 = vsel %vm2112, %v4941, %v4970
  %v4972 = vsel %vm2114, %v4942, %v4971
  %v4973 = vsel %vm2116, %v4943, %v4972
  %v4974 = vsel %vm2118, %v4944, %v4973
  %v4975 = vsel %vm2120, %v4945, %v4974
  %v4976 = vsel %vm2122, %v4946, %v4975
  %v4977 = vsel %vm2110, %v4948, %v4947
  %v4978 = vsel %vm2112, %v4949, %v4977
  %v4979 = vsel %vm2114, %v4950, %v4978
  %v4980 = vsel %vm2116, %v4951, %v4979
  %v4981 = vsel %vm2118, %v4952, %v4980
  %v4982 = vsel %vm2120, %v4953, %v4981
  %v4983 = vsel %vm2122, %v4954, %v4982
  %v4984 = vsel %vm2110, %v4956, %v4955
  %v4985 = vsel %vm2112, %v4957, %v4984
  %v4986 = vsel %vm2114, %v4958, %v4985
  %v4987 = vsel %vm2116, %v4959, %v4986
  %v4988 = vsel %vm2118, %v4960, %v4987
  %v4989 = vsel %vm2120, %v4961, %v4988
  %v4990 = vsel %vm2122, %v4962, %v4989
  %v4991 = vpack.c.b16 %v4976, %v4969
  %v4992 = vpack.c.b16 %v4990, %v4983
  %v5011 = vunpack.c.l.b16 %v3750
  %v5012 = vunpack.c.l.b16 %v3751
  %v5013 = vunpack.c.l.b16 %v3752
  %v5014 = vunpack.c.l.b16 %v3753
  %v5015 = vunpack.c.l.b16 %v3754
  %v5016 = vunpack.c.l.b16 %v3755
  %v5017 = vunpack.c.l.b16 %v3756
  %v5018 = vunpack.c.l.b16 %v3757
  %v5019 = vunpack.c.l.b16 %v3758
  %v5020 = vunpack.c.l.b16 %v3759
  %v5021 = vunpack.c.l.b16 %v3760
  %v5022 = vunpack.c.l.b16 %v3761
  %v5023 = vunpack.c.l.b16 %v3762
  %v5024 = vunpack.c.l.b16 %v3763
  %v5025 = vunpack.c.l.b16 %v3764
  %v5026 = vunpack.c.l.b16 %v3765
  %v5027 = vpack.c.b16 %v5012, %v5011
  %v5028 = vpack.c.b16 %v5014, %v5013
  %v5029 = vpack.c.b16 %v5016, %v5015
  %v5030 = vpack.c.b16 %v5018, %v5017
  %v5031 = vpack.c.b16 %v5020, %v5019
  %v5032 = vpack.c.b16 %v5022, %v5021
  %v5033 = vpack.c.b16 %v5024, %v5023
  %v5034 = vpack.c.b16 %v5026, %v5025
  %5043 = vmatpush.bf16.msra.mxu0 %v5034
  %5044 = vmatpush.bf16.msra.mxu0 %v5033
  %5045 = vmatpush.bf16.msra.mxu0 %v5032
  %5046 = vmatpush.bf16.msra.mxu0 %v5031
  %5047 = vmatpush.bf16.msra.mxu0 %v5030
  %5048 = vmatpush.bf16.msra.mxu0 %v5029
  %5049 = vmatpush.bf16.msra.mxu0 %v5028
  %5050 = vmatpush.bf16.msra.mxu0 %v5027
  %5051 = vmatmul.bf16.gmra.mxu0 %v4991
  %v5052 = vpop.f32.mrf.mxu0
  %v5053 = vadd.f32 0.0, %v5052
  %v5054 = vpop.f32.mrf.mxu0
  %v5055 = vadd.f32 0.0, %v5054
  %5056 = vmatmul.bf16.gmra.mxu0 %v4992
  %v5057 = vpop.f32.mrf.mxu0
  %v5058 = vadd.f32 0.0, %v5057
  %v5059 = vpop.f32.mrf.mxu0
  %v5060 = vadd.f32 0.0, %v5059
  %5061 = vdwg.mxu0
  %v5078 = vunpack.c.l.b16 %v3734
  %v5079 = vunpack.c.l.b16 %v3735
  %v5080 = vunpack.c.l.b16 %v3736
  %v5081 = vunpack.c.l.b16 %v3737
  %v5082 = vunpack.c.l.b16 %v3738
  %v5083 = vunpack.c.l.b16 %v3739
  %v5084 = vunpack.c.l.b16 %v3740
  %v5085 = vunpack.c.l.b16 %v3741
  %v5086 = vunpack.c.l.b16 %v3742
  %v5087 = vunpack.c.l.b16 %v3743
  %v5088 = vunpack.c.l.b16 %v3744
  %v5089 = vunpack.c.l.b16 %v3745
  %v5090 = vunpack.c.l.b16 %v3746
  %v5091 = vunpack.c.l.b16 %v3747
  %v5092 = vunpack.c.l.b16 %v3748
  %v5093 = vunpack.c.l.b16 %v3749
  %v5094 = vpack.c.b16 %v5079, %v5078
  %v5095 = vpack.c.b16 %v5081, %v5080
  %v5096 = vpack.c.b16 %v5083, %v5082
  %v5097 = vpack.c.b16 %v5085, %v5084
  %v5098 = vpack.c.b16 %v5087, %v5086
  %v5099 = vpack.c.b16 %v5089, %v5088
  %v5100 = vpack.c.b16 %v5091, %v5090
  %v5101 = vpack.c.b16 %v5093, %v5092
  %5110 = vmatpush.bf16.msra.mxu0 %v5101
  %5111 = vmatpush.bf16.msra.mxu0 %v5100
  %5112 = vmatpush.bf16.msra.mxu0 %v5099
  %5113 = vmatpush.bf16.msra.mxu0 %v5098
  %5114 = vmatpush.bf16.msra.mxu0 %v5097
  %5115 = vmatpush.bf16.msra.mxu0 %v5096
  %5116 = vmatpush.bf16.msra.mxu0 %v5095
  %5117 = vmatpush.bf16.msra.mxu0 %v5094
  %5118 = vmatmul.bf16.gmra.mxu0 %v3767
  %v5119 = vpop.f32.mrf.mxu0
  %v5120 = vadd.f32 %v5053, %v5119
  %v5121 = vpop.f32.mrf.mxu0
  %v5122 = vadd.f32 %v5055, %v5121
  %5123 = vmatmul.bf16.gmra.mxu0 %v3768
  %v5124 = vpop.f32.mrf.mxu0
  %v5125 = vadd.f32 %v5058, %v5124
  %v5126 = vpop.f32.mrf.mxu0
  %v5127 = vadd.f32 %v5060, %v5126
  %5128 = vdwg.mxu0
  %v5130 = vperm.slane %v3766, 0
  %v5132 = vadd.f32 %v5120, %v5130
  %v5133 = vadd.f32 %v5122, %v5130
  %v5134 = vadd.f32 %v5125, %v5130
  %v5135 = vadd.f32 %v5127, %v5130
  %vm5136 = vcmask 31744
  %v5137 = vsel %vm5136, %v5132, -inf
  %5138 = vmax.xlane.f32.xlu0 %v5137
  %v5139 = vpop.xlane.xlu0 %5138
  %v5140 = vsel %vm5136, %v5133, -inf
  %5141 = vmax.xlane.f32.xlu0 %v5140
  %v5142 = vpop.xlane.xlu0 %5141
  %v5143 = vsel %vm5136, %v5134, -inf
  %5144 = vmax.xlane.f32.xlu0 %v5143
  %v5145 = vpop.xlane.xlu0 %5144
  %v5146 = vsel %vm5136, %v5135, -inf
  %5147 = vmax.xlane.f32.xlu0 %v5146
  %v5148 = vpop.xlane.xlu0 %5147
  %v5149 = vsub.f32 %v5132, %v5139
  %v5150 = vsub.f32 %v5133, %v5142
  %v5151 = vsub.f32 %v5134, %v5145
  %v5152 = vsub.f32 %v5135, %v5148
  %v5153 = vmul.f32 %v5149, 1.442695
  %v5154 = vpow.pop %v5153
  %v5155 = vmul.f32 %v5150, 1.442695
  %v5156 = vpow.pop %v5155
  %v5157 = vmul.f32 %v5151, 1.442695
  %v5158 = vpow.pop %v5157
  %v5159 = vmul.f32 %v5152, 1.442695
  %v5160 = vpow.pop %v5159
  %v5161 = vsel %vm5136, %v5154, 0.0
  %5162 = vadd.xlane.f32.xlu0 %v5161
  %v5163 = vpop.xlane.xlu0 %5162
  %v5164 = vsel %vm5136, %v5156, 0.0
  %5165 = vadd.xlane.f32.xlu0 %v5164
  %v5166 = vpop.xlane.xlu0 %5165
  %v5167 = vsel %vm5136, %v5158, 0.0
  %5168 = vadd.xlane.f32.xlu0 %v5167
  %v5169 = vpop.xlane.xlu0 %5168
  %v5170 = vsel %vm5136, %v5160, 0.0
  %5171 = vadd.xlane.f32.xlu0 %v5170
  %v5172 = vpop.xlane.xlu0 %5171
  %v5173 = vlog2.pop %v5163
  %v5174 = vmul.f32 %v5173, 0.6931472
  %v5175 = vlog2.pop %v5166
  %v5176 = vmul.f32 %v5175, 0.6931472
  %v5177 = vlog2.pop %v5169
  %v5178 = vmul.f32 %v5177, 0.6931472
  %v5179 = vlog2.pop %v5172
  %v5180 = vmul.f32 %v5179, 0.6931472
  %v5181 = vsub.f32 %v5149, %v5174
  %v5182 = vsub.f32 %v5150, %v5176
  %v5183 = vsub.f32 %v5151, %v5178
  %v5184 = vsub.f32 %v5152, %v5180
  %5185 = vst.msk [vmem:[%s17] sm:$0xff] %vm5136, %v5181
  %5186 = vst.msk [vmem:[%s17 + $0x8] sm:$0xff] %vm5136, %v5182
  %5187 = vst.msk [vmem:[%s17 + $0x10] sm:$0xff] %vm5136, %v5183
  %5188 = vst.msk [vmem:[%s17 + $0x18] sm:$0xff] %vm5136, %v5184
  // Predicated region
  $region70: #{sage_forward.1} parent=0 // pred_check
    _
  $region71: #{sage_forward.1} parent=0 // pred_check_branch
    %5190 = sbr.rel (0) target = $region73
  $region72: #{sage_forward.1} parent=0 // pred_region
    _
  $region73: #{sage_forward.1} parent=0 // pred_fallthru
    _
  // Predicated region
  $region74: #{sage_forward.1} parent=0 // pred_check
    _
  $region75: #{sage_forward.1} parent=0 // pred_check_branch
    %5192 = sbr.rel (0) target = $region77
  $region76: #{sage_forward.1} parent=0 // pred_region
    _
  $region77: #{sage_forward.1} parent=0 // pred_fallthru
    _

</llo_original>
